<compile_context>
chip_gen: v6e
topology: v6e:2x2x1
jax: 0.10.0
libtpu: 0.0.40
codegen_flags: <defaults>
</compile_context>

<pallas_src>
import functools

import jax
import jax.numpy as jnp
from jax import lax
from jax.experimental import pallas as pl
from jax.experimental.pallas import tpu as pltpu


# ----------------------------------------------------------------------------
# Tile-size helpers
# ----------------------------------------------------------------------------
def _pick_row_tile(m, bytes_per_row, budget_bytes=8 << 20, cap=1024):
    """Largest divisor of m (multiple of 8, or m itself) whose double-buffered
    row-dependent VMEM footprint stays within `budget_bytes`."""
    target = max(8, min(cap, budget_bytes // max(1, 2 * bytes_per_row)))
    if m <= target:
        return m
    t8 = (min(target, m) // 8) * 8
    for t in range(t8, 0, -8):
        if m % t == 0:
            return t
    return m  # full extent is always a legal block


def _largest_divisor_leq(n, target):
    target = max(1, min(n, target))
    for t in range(target, 0, -1):
        if n % t == 0:
            return t
    return 1


# ----------------------------------------------------------------------------
# In-kernel math helpers
# ----------------------------------------------------------------------------
_SQRT_HALF = 0.7071067811865476


def _erf_poly(x):
    # Abramowitz & Stegun 7.1.26, |abs error| <= 1.5e-7.  Uses only
    # abs/where/div/exp so it is guaranteed to lower in Mosaic.
    # TODO(synk): switch to lax.erf if/when its Pallas TPU lowering is
    #             confirmed on the target jaxlib (saves a few VPU ops).
    a1, a2, a3, a4, a5 = (0.254829592, -0.284496736, 1.421413741,
                          -1.453152027, 1.061405429)
    p = 0.3275911
    sgn = jnp.where(x >= 0.0, 1.0, -1.0)
    ax = jnp.abs(x)
    t = 1.0 / (1.0 + p * ax)
    poly = ((((a5 * t + a4) * t + a3) * t + a2) * t + a1) * t
    return sgn * (1.0 - poly * jnp.exp(-ax * ax))


def _gelu_exact(x):
    # torch.nn.GELU() default (erf-based).
    return 0.5 * x * (1.0 + _erf_poly(x * _SQRT_HALF))


# ----------------------------------------------------------------------------
# Kernels
# ----------------------------------------------------------------------------
def _deconv2x2_kernel(x_ref, w_ref, shift_ref, o_ref):
    # ConvTranspose2d(k=2, s=2) as one wide MXU matmul per row tile.
    # x: (tm, Cin), w: (Cin, 4*Cout) cols ordered (dh, dw, cout),
    # shift: (1, 4*Cout) bias tiled per tap, o: (tm, 4*Cout).
    acc = jnp.dot(x_ref[...], w_ref[...], preferred_element_type=jnp.float32)
    o_ref[...] = (acc + shift_ref[...]).astype(o_ref.dtype)


def _deconv4x_fused_kernel(x_ref, w1_ref, s1_ref, t1_ref, w2_ref, t2_ref,
                           o_ref, *, c):
    # Fused: deconv1 -> BatchNorm(inference, folded affine) -> GELU -> deconv2.
    # x:  (tm, Cin)
    # w1: (Cin, 4*C) cols (dh1, dw1, c);  s1/t1: (1, 4*C) affine (bias folded)
    # w2: (C, 4*C)   cols (dh2, dw2, c);  t2:    (1, 4*C) bias
    # o:  (tm, 16*C) cols (dh1, dw1, dh2, dw2, c)
    y1 = jnp.dot(x_ref[...], w1_ref[...], preferred_element_type=jnp.float32)
    y1 = _gelu_exact(y1 * s1_ref[...] + t1_ref[...])
    w2 = w2_ref[...]
    t2 = t2_ref[...]
    c4 = 4 * c
    for j in range(4):  # static unroll over the 4 deconv-1 taps
        z = jnp.dot(y1[:, j * c:(j + 1) * c], w2,
                    preferred_element_type=jnp.float32)
        o_ref[:, j * c4:(j + 1) * c4] = (z + t2).astype(o_ref.dtype)


def _maxpool2x2_kernel(x_ref, o_ref, *, c):
    # x: (tb, 2, Wo, 2*C)  dims (rows=N*Ho, h-parity, Wo, w-parity*C)
    # o: (tb, Wo, C)
    x = x_ref[...]
    h = jnp.maximum(x[:, 0], x[:, 1])                  # pool over h-parity
    o_ref[...] = jnp.maximum(h[:, :, :c], h[:, :, c:])  # pool over w-parity


# ----------------------------------------------------------------------------
# Wrappers
# ----------------------------------------------------------------------------
def _fold_deconv_weight(w):
    """(Cin, Cout, 2, 2) torch ConvTranspose2d weight -> (Cin, 4*Cout),
    columns ordered (dh, dw, cout)."""
    cin, cout = w.shape[0], w.shape[1]
    return jnp.transpose(w, (0, 2, 3, 1)).reshape(cin, 4 * cout)


def _tile_cols(v, reps):
    v = v.astype(jnp.float32)
    return jnp.tile(v, reps).reshape(1, reps * v.shape[0])


def _deconv2x2_rows(x2d, w, b):
    """x2d: (M, Cin) -> (M, 4*Cout), columns ordered (dh, dw, cout)."""
    m, cin = x2d.shape
    wk = _fold_deconv_weight(w)
    cout4 = wk.shape[1]
    shift = _tile_cols(b, 4)
    tm = _pick_row_tile(m, (cin + cout4) * 4)
    return pl.pallas_call(
        _deconv2x2_kernel,
        out_shape=jax.ShapeDtypeStruct((m, cout4), x2d.dtype),
        grid_spec=pltpu.PrefetchScalarGridSpec(
            num_scalar_prefetch=0,
            grid=(m // tm,),
            in_specs=[
                pl.BlockSpec((tm, cin), lambda i: (i, 0)),
                pl.BlockSpec((cin, cout4), lambda i: (0, 0)),
                pl.BlockSpec((1, cout4), lambda i: (0, 0)),
            ],
            out_specs=pl.BlockSpec((tm, cout4), lambda i: (i, 0)),
        ),
        compiler_params=pltpu.CompilerParams(
            dimension_semantics=("parallel",)),
    )(x2d, wk, shift)


def _deconv4x_rows(x2d, w1, b1, gamma, beta, mean, var, w2, b2, *, eps=1e-5):
    """x2d: (M, Cin) -> (M, 16*C), columns ordered (dh1, dw1, dh2, dw2, c)."""
    m, cin = x2d.shape
    c = w1.shape[1]
    wk1 = _fold_deconv_weight(w1)
    wk2 = _fold_deconv_weight(w2)
    # Fold inference BatchNorm into the deconv-1 epilogue:
    #   (x@W1 + b1) * s + t,  s = gamma/rsqrt -> gamma/sqrt(var+eps),
    #   t = beta - mean*s  =>  scale = s, shift = b1*s + t.
    s = (gamma / jnp.sqrt(var + eps)).astype(jnp.float32)
    t = b1.astype(jnp.float32) * s + (beta - mean * s).astype(jnp.float32)
    s1 = _tile_cols(s, 4)
    t1 = _tile_cols(t, 4)
    t2 = _tile_cols(b2, 4)
    cout4, cout16 = 4 * c, 16 * c
    tm = _pick_row_tile(m, (cin + cout4 + cout16) * 4)
    kernel = functools.partial(_deconv4x_fused_kernel, c=c)
    return pl.pallas_call(
        kernel,
        out_shape=jax.ShapeDtypeStruct((m, cout16), x2d.dtype),
        grid_spec=pltpu.PrefetchScalarGridSpec(
            num_scalar_prefetch=0,
            grid=(m // tm,),
            in_specs=[
                pl.BlockSpec((tm, cin), lambda i: (i, 0)),
                pl.BlockSpec((cin, cout4), lambda i: (0, 0)),
                pl.BlockSpec((1, cout4), lambda i: (0, 0)),
                pl.BlockSpec((1, cout4), lambda i: (0, 0)),
                pl.BlockSpec((c, cout4), lambda i: (0, 0)),
                pl.BlockSpec((1, cout4), lambda i: (0, 0)),
            ],
            out_specs=pl.BlockSpec((tm, cout16), lambda i: (i, 0)),
        ),
        compiler_params=pltpu.CompilerParams(
            dimension_semantics=("parallel",)),
    )(x2d, wk1, s1, t1, wk2, t2)


def maxpool2x2_nchw(x):
    """MaxPool2d(kernel=2, stride=2) on an NCHW tensor (floor semantics)."""
    n, c, h, w = x.shape
    ho, wo = h // 2, w // 2
    x = x[:, :, : 2 * ho, : 2 * wo]                 # PyTorch floors odd sizes
    xh = jnp.transpose(x, (0, 2, 3, 1))             # NHWC (one layout pass)
    xr = xh.reshape(n * ho, 2, wo, 2 * c)           # free reshape, no gathers
    rows = n * ho
    row_bytes = 2 * wo * 2 * c * x.dtype.itemsize
    tb = _largest_divisor_leq(rows, max(1, (2 << 20) // max(1, row_bytes)))
    out = pl.pallas_call(
        functools.partial(_maxpool2x2_kernel, c=c),
        out_shape=jax.ShapeDtypeStruct((rows, wo, c), x.dtype),
        grid_spec=pltpu.PrefetchScalarGridSpec(
            num_scalar_prefetch=0,
            grid=(rows // tb,),
            in_specs=[pl.BlockSpec((tb, 2, wo, 2 * c),
                                   lambda i: (i, 0, 0, 0))],
            out_specs=pl.BlockSpec((tb, wo, c), lambda i: (i, 0, 0)),
        ),
        compiler_params=pltpu.CompilerParams(
            dimension_semantics=("parallel",)),
    )(xr)
    return jnp.transpose(out.reshape(n, ho, wo, c), (0, 3, 1, 2))  # NCHW


# ----------------------------------------------------------------------------
# Module: parameter init + forward
# ----------------------------------------------------------------------------
def init_params(key, embed_dims, rescales):
    params = []
    for i, k in enumerate(rescales):
        c = embed_dims[i]
        kk = jax.random.fold_in(key, i)
        if k == 4:
            ks = jax.random.split(kk, 8)
            p = dict(
                w1=0.1 * jax.random.normal(ks[0], (c, c, 2, 2), jnp.float32),
                b1=0.1 * jax.random.normal(ks[1], (c,), jnp.float32),
                gamma=1.0 + 0.1 * jax.random.normal(ks[2], (c,), jnp.float32),
                beta=0.1 * jax.random.normal(ks[3], (c,), jnp.float32),
                mean=0.1 * jax.random.normal(ks[4], (c,), jnp.float32),
                var=0.5 + jnp.abs(jax.random.normal(ks[5], (c,), jnp.float32)),
                w2=0.1 * jax.random.normal(ks[6], (c, c, 2, 2), jnp.float32),
                b2=0.1 * jax.random.normal(ks[7], (c,), jnp.float32),
            )
        elif k == 2:
            ks = jax.random.split(kk, 2)
            p = dict(
                w=0.1 * jax.random.normal(ks[0], (c, c, 2, 2), jnp.float32),
                b=0.1 * jax.random.normal(ks[1], (c,), jnp.float32),
            )
        else:
            p = {}
        params.append(p)
    return params


def feature2pyramid(inputs, params, rescales=(4, 2, 1, 0.5)):
    """inputs: list of NCHW arrays. Returns tuple of NCHW arrays."""
    assert len(inputs) == len(rescales)
    outs = []
    for i, k in enumerate(rescales):
        x = inputs[i]
        p = params[i]
        n, c, h, w = x.shape
        if k == 4:
            # TODO(synk): SyncBatchNorm training-mode (cross-device batch
            # statistics) not reproduced; inference-mode affine is fused here.
            x2d = jnp.transpose(x, (0, 2, 3, 1)).reshape(n * h * w, c)
            y = _deconv4x_rows(x2d, p["w1"], p["b1"], p["gamma"], p["beta"],
                               p["mean"], p["var"], p["w2"], p["b2"])
            # rows (n,h,w); cols (dh1,dw1,dh2,dw2,c): single combined reorder
            y = y.reshape(n, h, w, 2, 2, 2, 2, c)
            y = jnp.transpose(y, (0, 7, 1, 3, 5, 2, 4, 6))
            y = y.reshape(n, c, 4 * h, 4 * w)
        elif k == 2:
            x2d = jnp.transpose(x, (0, 2, 3, 1)).reshape(n * h * w, c)
            y = _deconv2x2_rows(x2d, p["w"], p["b"])
            y = y.reshape(n, h, w, 2, 2, c)
            y = jnp.transpose(y, (0, 5, 1, 3, 2, 4)).reshape(n, c, 2 * h, 2 * w)
        elif k == 1:
            y = x  # Identity: no layout passes at all
        elif k == 0.5:
            y = maxpool2x2_nchw(x)
        elif k == 0.25:
            # max over 4x4 blocks == two chained 2x2 max-pools (floor mode)
            y = maxpool2x2_nchw(maxpool2x2_nchw(x))
        else:
            raise KeyError(f"invalid {k} for feature2pyramid")
        outs.append(y)
    return tuple(outs)


# ----------------------------------------------------------------------------
# Pure-JAX reference (NCHW) for correctness check
# ----------------------------------------------------------------------------
def _ref_deconv(x, w, b):
    y = jnp.einsum("nchw,cdij->ndhiwj", x, w)       # (N, Co, H, 2, W, 2)
    n, co, h, _, w_, _ = y.shape
    return y.reshape(n, co, 2 * h, 2 * w_) + b[None, :, None, None]


def _ref_bn_gelu(x, gamma, beta, mean, var, eps=1e-5):
    s = gamma / jnp.sqrt(var + eps)
    y = x * s[None, :, None, None] + (beta - mean * s)[None, :, None, None]
    return 0.5 * y * (1.0 + lax.erf(y * _SQRT_HALF))


def _ref_forward(inputs, params, rescales):
    outs = []
    for i, k in enumerate(rescales):
        x = inputs[i]
        p = params[i]
        if k == 4:
            y = _ref_deconv(x, p["w1"], p["b1"])
            y = _ref_bn_gelu(y, p["gamma"], p["beta"], p["mean"], p["var"])
            y = _ref_deconv(y, p["w2"], p["b2"])
        elif k == 2:
            y = _ref_deconv(x, p["w"], p["b"])
        elif k == 1:
            y = x
        else:
            n, c, h, w = x.shape
            y = x.reshape(n, c, h // 2, 2, w // 2, 2).max(axis=(3, 5))
        outs.append(y)
    return outs


if __name__ == "__main__":
    key = jax.random.PRNGKey(0)
    N, H, W = 2, 16, 16
    rescales = (4, 2, 1, 0.5)
    embed_dims = (4, 4, 4, 4)

    in_keys = jax.random.split(key, len(rescales) + 1)
    inputs = [
        jax.random.normal(in_keys[i], (N, embed_dims[i], H, W), jnp.float32)
        for i in range(len(rescales))
    ]
    params = init_params(in_keys[-1], embed_dims, rescales)

    outs = feature2pyramid(inputs, params, rescales)
    for o in outs:
        jax.block_until_ready(o)

    refs = _ref_forward(inputs, params, rescales)
    expected_hw = {4: (4 * H, 4 * W), 2: (2 * H, 2 * W),
                   1: (H, W), 0.5: (H // 2, W // 2)}
    for i, k in enumerate(rescales):
        assert outs[i].shape == (N, embed_dims[i]) + expected_hw[k], outs[i].shape
        assert jnp.allclose(outs[i], refs[i], rtol=1e-2, atol=1e-2), \
            f"mismatch at scale {k}"

    print("KERNEL_OK")
</pallas_src>

<mosaic_0001>
module attributes {stable_mosaic.version = 11 : i64} {
  func.func @_deconv4x_fused_kernel(%arg0: i32, %arg1: memref<512x4xf32, #tpu.memory_space<vmem>>, %arg2: memref<4x16xf32, #tpu.memory_space<vmem>>, %arg3: memref<1x16xf32, #tpu.memory_space<vmem>>, %arg4: memref<1x16xf32, #tpu.memory_space<vmem>>, %arg5: memref<4x16xf32, #tpu.memory_space<vmem>>, %arg6: memref<1x16xf32, #tpu.memory_space<vmem>>, %arg7: memref<512x64xf32, #tpu.memory_space<vmem>>) attributes {dimension_semantics = [#tpu.dimension_semantics<parallel>], iteration_bounds = array<i64: 1>, scalar_prefetch = 0 : i64, scratch_operands = 0 : i64, tpu.core_type = #tpu.core_type<tc>, window_params = [{transform_indices = @transform_0, window_bounds = array<i64: 512, 4>}, {pipeline_mode = #tpu.pipeline_mode<synchronous>, transform_indices = @transform_1, window_bounds = array<i64: 4, 16>}, {pipeline_mode = #tpu.pipeline_mode<synchronous>, transform_indices = @transform_2, window_bounds = array<i64: 1, 16>}, {pipeline_mode = #tpu.pipeline_mode<synchronous>, transform_indices = @transform_3, window_bounds = array<i64: 1, 16>}, {pipeline_mode = #tpu.pipeline_mode<synchronous>, transform_indices = @transform_4, window_bounds = array<i64: 4, 16>}, {pipeline_mode = #tpu.pipeline_mode<synchronous>, transform_indices = @transform_5, window_bounds = array<i64: 1, 16>}, {transform_indices = @transform_6, window_bounds = array<i64: 512, 64>}]} {
    %c0 = arith.constant 0 : index
    %c0_0 = arith.constant 0 : index
    %0 = vector.load %arg1[%c0, %c0_0] : memref<512x4xf32, #tpu.memory_space<vmem>>, vector<512x4xf32>
    %c0_1 = arith.constant 0 : index
    %c0_2 = arith.constant 0 : index
    %1 = vector.load %arg2[%c0_1, %c0_2] : memref<4x16xf32, #tpu.memory_space<vmem>>, vector<4x16xf32>
    %cst = arith.constant dense<0.000000e+00> : vector<512x16xf32>
    %2 = tpu.matmul %0, %1, %cst {dimension_numbers = #tpu.dot_dimension_numbers<[1], [0], [0], [1], [0, 0, 1, 1], [], []>} : vector<512x4xf32>, vector<4x16xf32>, vector<512x16xf32> -> vector<512x16xf32>
    %c0_3 = arith.constant 0 : index
    %c0_4 = arith.constant 0 : index
    %3 = vector.load %arg3[%c0_3, %c0_4] : memref<1x16xf32, #tpu.memory_space<vmem>>, vector<1x16xf32>
    %4 = vector.broadcast %3 : vector<1x16xf32> to vector<512x16xf32>
    %5 = arith.mulf %2, %4 : vector<512x16xf32>
    %c0_5 = arith.constant 0 : index
    %c0_6 = arith.constant 0 : index
    %6 = vector.load %arg4[%c0_5, %c0_6] : memref<1x16xf32, #tpu.memory_space<vmem>>, vector<1x16xf32>
    %7 = vector.broadcast %6 : vector<1x16xf32> to vector<512x16xf32>
    %8 = arith.addf %5, %7 : vector<512x16xf32>
    %cst_7 = arith.constant 5.000000e-01 : f32
    %9 = vector.broadcast %cst_7 : f32 to vector<512x16xf32>
    %10 = arith.mulf %9, %8 : vector<512x16xf32>
    %cst_8 = arith.constant 0.707106769 : f32
    %11 = vector.broadcast %cst_8 : f32 to vector<512x16xf32>
    %12 = arith.mulf %8, %11 : vector<512x16xf32>
    %cst_9 = arith.constant 0.000000e+00 : f32
    %13 = vector.broadcast %cst_9 : f32 to vector<512x16xf32>
    %14 = arith.cmpf oge, %12, %13 : vector<512x16xf32>
    %cst_10 = arith.constant 1.000000e+00 : f32
    %cst_11 = arith.constant -1.000000e+00 : f32
    %15 = vector.broadcast %cst_10 : f32 to vector<512x16xf32>
    %16 = vector.broadcast %cst_11 : f32 to vector<512x16xf32>
    %17 = arith.select %14, %15, %16 : vector<512x16xi1>, vector<512x16xf32>
    %18 = math.absf %12 : vector<512x16xf32>
    %cst_12 = arith.constant 0.327591091 : f32
    %19 = vector.broadcast %cst_12 : f32 to vector<512x16xf32>
    %20 = arith.mulf %19, %18 : vector<512x16xf32>
    %cst_13 = arith.constant 1.000000e+00 : f32
    %21 = vector.broadcast %cst_13 : f32 to vector<512x16xf32>
    %22 = arith.addf %21, %20 : vector<512x16xf32>
    %cst_14 = arith.constant 1.000000e+00 : f32
    %23 = vector.broadcast %cst_14 : f32 to vector<512x16xf32>
    %24 = arith.divf %23, %22 : vector<512x16xf32>
    %cst_15 = arith.constant 1.06140542 : f32
    %25 = vector.broadcast %cst_15 : f32 to vector<512x16xf32>
    %26 = arith.mulf %25, %24 : vector<512x16xf32>
    %cst_16 = arith.constant -1.45315206 : f32
    %27 = vector.broadcast %cst_16 : f32 to vector<512x16xf32>
    %28 = arith.addf %26, %27 : vector<512x16xf32>
    %29 = arith.mulf %28, %24 : vector<512x16xf32>
    %cst_17 = arith.constant 1.42141378 : f32
    %30 = vector.broadcast %cst_17 : f32 to vector<512x16xf32>
    %31 = arith.addf %29, %30 : vector<512x16xf32>
    %32 = arith.mulf %31, %24 : vector<512x16xf32>
    %cst_18 = arith.constant -0.284496725 : f32
    %33 = vector.broadcast %cst_18 : f32 to vector<512x16xf32>
    %34 = arith.addf %32, %33 : vector<512x16xf32>
    %35 = arith.mulf %34, %24 : vector<512x16xf32>
    %cst_19 = arith.constant 0.254829586 : f32
    %36 = vector.broadcast %cst_19 : f32 to vector<512x16xf32>
    %37 = arith.addf %35, %36 : vector<512x16xf32>
    %38 = arith.mulf %37, %24 : vector<512x16xf32>
    %cst_20 = arith.constant 0.000000e+00 : f32
    %39 = vector.broadcast %cst_20 : f32 to vector<512x16xf32>
    %40 = arith.subf %39, %18 : vector<512x16xf32>
    %41 = arith.mulf %40, %18 : vector<512x16xf32>
    %42 = math.exp %41 : vector<512x16xf32>
    %43 = arith.mulf %38, %42 : vector<512x16xf32>
    %cst_21 = arith.constant 1.000000e+00 : f32
    %44 = vector.broadcast %cst_21 : f32 to vector<512x16xf32>
    %45 = arith.subf %44, %43 : vector<512x16xf32>
    %46 = arith.mulf %17, %45 : vector<512x16xf32>
    %cst_22 = arith.constant 1.000000e+00 : f32
    %47 = vector.broadcast %cst_22 : f32 to vector<512x16xf32>
    %48 = arith.addf %47, %46 : vector<512x16xf32>
    %49 = arith.mulf %10, %48 : vector<512x16xf32>
    %c0_23 = arith.constant 0 : index
    %c0_24 = arith.constant 0 : index
    %50 = vector.load %arg5[%c0_23, %c0_24] : memref<4x16xf32, #tpu.memory_space<vmem>>, vector<4x16xf32>
    %c0_25 = arith.constant 0 : index
    %c0_26 = arith.constant 0 : index
    %51 = vector.load %arg6[%c0_25, %c0_26] : memref<1x16xf32, #tpu.memory_space<vmem>>, vector<1x16xf32>
    %52 = vector.extract_strided_slice %49 {offsets = [0, 0], sizes = [512, 4], strides = [1, 1]} : vector<512x16xf32> to vector<512x4xf32>
    %cst_27 = arith.constant dense<0.000000e+00> : vector<512x16xf32>
    %53 = tpu.matmul %52, %50, %cst_27 {dimension_numbers = #tpu.dot_dimension_numbers<[1], [0], [0], [1], [0, 0, 1, 1], [], []>} : vector<512x4xf32>, vector<4x16xf32>, vector<512x16xf32> -> vector<512x16xf32>
    %54 = vector.broadcast %51 : vector<1x16xf32> to vector<512x16xf32>
    %55 = arith.addf %53, %54 : vector<512x16xf32>
    %c0_28 = arith.constant 0 : index
    %c0_29 = arith.constant 0 : index
    %56 = vector.load %arg7[%c0_28, %c0_29] : memref<512x64xf32, #tpu.memory_space<vmem>>, vector<512x16xf32>
    tpu.vector_store %arg7[%c0_28, %c0_29], %55 {strides = array<i32>} : memref<512x64xf32, #tpu.memory_space<vmem>>, vector<512x16xf32>,
    %57 = vector.extract_strided_slice %49 {offsets = [0, 4], sizes = [512, 4], strides = [1, 1]} : vector<512x16xf32> to vector<512x4xf32>
    %cst_30 = arith.constant dense<0.000000e+00> : vector<512x16xf32>
    %58 = tpu.matmul %57, %50, %cst_30 {dimension_numbers = #tpu.dot_dimension_numbers<[1], [0], [0], [1], [0, 0, 1, 1], [], []>} : vector<512x4xf32>, vector<4x16xf32>, vector<512x16xf32> -> vector<512x16xf32>
    %59 = vector.broadcast %51 : vector<1x16xf32> to vector<512x16xf32>
    %60 = arith.addf %58, %59 : vector<512x16xf32>
    %c0_31 = arith.constant 0 : index
    %c16 = arith.constant 16 : index
    %61 = vector.load %arg7[%c0_31, %c16] : memref<512x64xf32, #tpu.memory_space<vmem>>, vector<512x16xf32>
    tpu.vector_store %arg7[%c0_31, %c16], %60 {strides = array<i32>} : memref<512x64xf32, #tpu.memory_space<vmem>>, vector<512x16xf32>,
    %62 = vector.extract_strided_slice %49 {offsets = [0, 8], sizes = [512, 4], strides = [1, 1]} : vector<512x16xf32> to vector<512x4xf32>
    %cst_32 = arith.constant dense<0.000000e+00> : vector<512x16xf32>
    %63 = tpu.matmul %62, %50, %cst_32 {dimension_numbers = #tpu.dot_dimension_numbers<[1], [0], [0], [1], [0, 0, 1, 1], [], []>} : vector<512x4xf32>, vector<4x16xf32>, vector<512x16xf32> -> vector<512x16xf32>
    %64 = vector.broadcast %51 : vector<1x16xf32> to vector<512x16xf32>
    %65 = arith.addf %63, %64 : vector<512x16xf32>
    %c0_33 = arith.constant 0 : index
    %c32 = arith.constant 32 : index
    %66 = vector.load %arg7[%c0_33, %c32] : memref<512x64xf32, #tpu.memory_space<vmem>>, vector<512x16xf32>
    tpu.vector_store %arg7[%c0_33, %c32], %65 {strides = array<i32>} : memref<512x64xf32, #tpu.memory_space<vmem>>, vector<512x16xf32>,
    %67 = vector.extract_strided_slice %49 {offsets = [0, 12], sizes = [512, 4], strides = [1, 1]} : vector<512x16xf32> to vector<512x4xf32>
    %cst_34 = arith.constant dense<0.000000e+00> : vector<512x16xf32>
    %68 = tpu.matmul %67, %50, %cst_34 {dimension_numbers = #tpu.dot_dimension_numbers<[1], [0], [0], [1], [0, 0, 1, 1], [], []>} : vector<512x4xf32>, vector<4x16xf32>, vector<512x16xf32> -> vector<512x16xf32>
    %69 = vector.broadcast %51 : vector<1x16xf32> to vector<512x16xf32>
    %70 = arith.addf %68, %69 : vector<512x16xf32>
    %c0_35 = arith.constant 0 : index
    %c48 = arith.constant 48 : index
    %71 = vector.load %arg7[%c0_35, %c48] : memref<512x64xf32, #tpu.memory_space<vmem>>, vector<512x16xf32>
    tpu.vector_store %arg7[%c0_35, %c48], %70 {strides = array<i32>} : memref<512x64xf32, #tpu.memory_space<vmem>>, vector<512x16xf32>,
    return
  }
  func.func @transform_0(%arg0: i32) -> (i32, i32) {
    %c0_i32 = arith.constant 0 : i32
    %c0_i32_0 = arith.constant 0 : i32
    return %arg0, %c0_i32 : i32, i32
  }
  func.func @transform_1(%arg0: i32) -> (i32, i32) {
    %c0_i32 = arith.constant 0 : i32
    %c0_i32_0 = arith.constant 0 : i32
    %c0_i32_1 = arith.constant 0 : i32
    return %c0_i32, %c0_i32_0 : i32, i32
  }
  func.func @transform_2(%arg0: i32) -> (i32, i32) {
    %c0_i32 = arith.constant 0 : i32
    %c0_i32_0 = arith.constant 0 : i32
    %c0_i32_1 = arith.constant 0 : i32
    return %c0_i32, %c0_i32_0 : i32, i32
  }
  func.func @transform_3(%arg0: i32) -> (i32, i32) {
    %c0_i32 = arith.constant 0 : i32
    %c0_i32_0 = arith.constant 0 : i32
    %c0_i32_1 = arith.constant 0 : i32
    return %c0_i32, %c0_i32_0 : i32, i32
  }
  func.func @transform_4(%arg0: i32) -> (i32, i32) {
    %c0_i32 = arith.constant 0 : i32
    %c0_i32_0 = arith.constant 0 : i32
    %c0_i32_1 = arith.constant 0 : i32
    return %c0_i32, %c0_i32_0 : i32, i32
  }
  func.func @transform_5(%arg0: i32) -> (i32, i32) {
    %c0_i32 = arith.constant 0 : i32
    %c0_i32_0 = arith.constant 0 : i32
    %c0_i32_1 = arith.constant 0 : i32
    return %c0_i32, %c0_i32_0 : i32, i32
  }
  func.func @transform_6(%arg0: i32) -> (i32, i32) {
    %c0_i32 = arith.constant 0 : i32
    %c0_i32_0 = arith.constant 0 : i32
    return %arg0, %c0_i32 : i32, i32
  }
}

</mosaic_0001>

<llo_original>
// kernel: tpu_custom_call.1
$region0: #{tpu_custom_call.1}
  #allocation0 [shape = 'u32[]', space=smem, size = 0x4, offset = 0x4, fixed_abs, tag = 'smem constant byte address 0x4 - core index']
  #allocation1 [shape = 'u32[144,128]{1,0:T(1,128)}', space=vmem, size = 0x12000, scoped, tag = 'internal scratch']
  %s0 = inlined_call_operand.vmem [shape: f32[512,4], index: 0, kind: input, shape index: {}]
  %s1 = inlined_call_operand.vmem [shape: f32[4,16], index: 1, kind: input, shape index: {}]
  %s2 = inlined_call_operand.vmem [shape: f32[1,16], index: 2, kind: input, shape index: {}]
  %s3 = inlined_call_operand.vmem [shape: f32[1,16], index: 3, kind: input, shape index: {}]
  %s4 = inlined_call_operand.vmem [shape: f32[4,16], index: 4, kind: input, shape index: {}]
  %s5 = inlined_call_operand.vmem [shape: f32[1,16], index: 5, kind: input, shape index: {}]
  %s6 = inlined_call_operand.vmem [shape: f32[512,64], index: 6, kind: output, shape index: {}]
  %s7 = sld [smem:[#allocation0]]
  $region34: #{tpu_custom_call.1} parent=0
    _
  %s9 = ssub.s32 1, %s7
  %s10 = scalar_select 0, %s9, %s7
  // Predicated region
  $region2: #{tpu_custom_call.1} parent=0 // pred_check
    _
  $region3: #{tpu_custom_call.1} parent=0 // pred_check_branch
    %12 = sbr.rel (0) target = $region5
  $region4: #{tpu_custom_call.1} parent=0 // pred_region
    _
  $region5: #{tpu_custom_call.1} parent=0 // pred_fallthru
    _
  // Predicated region
  $region6: #{tpu_custom_call.1} parent=0 // pred_check
    _
  $region7: #{tpu_custom_call.1} parent=0 // pred_check_branch
    %14 = sbr.rel (0) target = $region9
  $region8: #{tpu_custom_call.1} parent=0 // pred_region
    _
  $region9: #{tpu_custom_call.1} parent=0 // pred_fallthru
    _
  // Predicated region
  $region10: #{tpu_custom_call.1} parent=0 // pred_check
    _
  $region11: #{tpu_custom_call.1} parent=0 // pred_check_branch
    %16 = sbr.rel (0) target = $region13
  $region12: #{tpu_custom_call.1} parent=0 // pred_region
    _
  $region13: #{tpu_custom_call.1} parent=0 // pred_fallthru
    _
  // Predicated region
  $region14: #{tpu_custom_call.1} parent=0 // pred_check
    _
  $region15: #{tpu_custom_call.1} parent=0 // pred_check_branch
    %18 = sbr.rel (0) target = $region17
  $region16: #{tpu_custom_call.1} parent=0 // pred_region
    _
  $region17: #{tpu_custom_call.1} parent=0 // pred_fallthru
    _
  // Predicated region
  $region18: #{tpu_custom_call.1} parent=0 // pred_check
    _
  $region19: #{tpu_custom_call.1} parent=0 // pred_check_branch
    %20 = sbr.rel (0) target = $region21
  $region20: #{tpu_custom_call.1} parent=0 // pred_region
    _
  $region21: #{tpu_custom_call.1} parent=0 // pred_fallthru
    _
  // Predicated region
  $region22: #{tpu_custom_call.1} parent=0 // pred_check
    _
  $region23: #{tpu_custom_call.1} parent=0 // pred_check_branch
    %22 = sbr.rel (0) target = $region25
  $region24: #{tpu_custom_call.1} parent=0 // pred_region
    _
  $region25: #{tpu_custom_call.1} parent=0 // pred_fallthru
    _
  %v23 = vld [vmem:[%s0] sm:$0xff]
  %v24 = vld [vmem:[%s0 + $0x8] sm:$0xff]
  %v25 = vld [vmem:[%s0 + $0x10] sm:$0xff]
  %v26 = vld [vmem:[%s0 + $0x18] sm:$0xff]
  %v27 = vld [vmem:[%s0 + $0x20] sm:$0xff]
  %v28 = vld [vmem:[%s0 + $0x28] sm:$0xff]
  %v29 = vld [vmem:[%s0 + $0x30] sm:$0xff]
  %v30 = vld [vmem:[%s0 + $0x38] sm:$0xff]
  %v31 = vld [vmem:[%s0 + $0x40] sm:$0xff]
  %v32 = vld [vmem:[%s0 + $0x48] sm:$0xff]
  %v33 = vld [vmem:[%s0 + $0x50] sm:$0xff]
  %v34 = vld [vmem:[%s0 + $0x58] sm:$0xff]
  %v35 = vld [vmem:[%s0 + $0x60] sm:$0xff]
  %v36 = vld [vmem:[%s0 + $0x68] sm:$0xff]
  %v37 = vld [vmem:[%s0 + $0x70] sm:$0xff]
  %v38 = vld [vmem:[%s0 + $0x78] sm:$0xff]
  %v39 = vld [vmem:[%s0 + $0x80] sm:$0xff]
  %v40 = vld [vmem:[%s0 + $0x88] sm:$0xff]
  %v41 = vld [vmem:[%s0 + $0x90] sm:$0xff]
  %v42 = vld [vmem:[%s0 + $0x98] sm:$0xff]
  %v43 = vld [vmem:[%s0 + $0xa0] sm:$0xff]
  %v44 = vld [vmem:[%s0 + $0xa8] sm:$0xff]
  %v45 = vld [vmem:[%s0 + $0xb0] sm:$0xff]
  %v46 = vld [vmem:[%s0 + $0xb8] sm:$0xff]
  %v47 = vld [vmem:[%s0 + $0xc0] sm:$0xff]
  %v48 = vld [vmem:[%s0 + $0xc8] sm:$0xff]
  %v49 = vld [vmem:[%s0 + $0xd0] sm:$0xff]
  %v50 = vld [vmem:[%s0 + $0xd8] sm:$0xff]
  %v51 = vld [vmem:[%s0 + $0xe0] sm:$0xff]
  %v52 = vld [vmem:[%s0 + $0xe8] sm:$0xff]
  %v53 = vld [vmem:[%s0 + $0xf0] sm:$0xff]
  %v54 = vld [vmem:[%s0 + $0xf8] sm:$0xff]
  %v55 = vld [vmem:[%s0 + $0x100] sm:$0xff]
  %v56 = vld [vmem:[%s0 + $0x108] sm:$0xff]
  %v57 = vld [vmem:[%s0 + $0x110] sm:$0xff]
  %v58 = vld [vmem:[%s0 + $0x118] sm:$0xff]
  %v59 = vld [vmem:[%s0 + $0x120] sm:$0xff]
  %v60 = vld [vmem:[%s0 + $0x128] sm:$0xff]
  %v61 = vld [vmem:[%s0 + $0x130] sm:$0xff]
  %v62 = vld [vmem:[%s0 + $0x138] sm:$0xff]
  %v63 = vld [vmem:[%s0 + $0x140] sm:$0xff]
  %v64 = vld [vmem:[%s0 + $0x148] sm:$0xff]
  %v65 = vld [vmem:[%s0 + $0x150] sm:$0xff]
  %v66 = vld [vmem:[%s0 + $0x158] sm:$0xff]
  %v67 = vld [vmem:[%s0 + $0x160] sm:$0xff]
  %v68 = vld [vmem:[%s0 + $0x168] sm:$0xff]
  %v69 = vld [vmem:[%s0 + $0x170] sm:$0xff]
  %v70 = vld [vmem:[%s0 + $0x178] sm:$0xff]
  %v71 = vld [vmem:[%s0 + $0x180] sm:$0xff]
  %v72 = vld [vmem:[%s0 + $0x188] sm:$0xff]
  %v73 = vld [vmem:[%s0 + $0x190] sm:$0xff]
  %v74 = vld [vmem:[%s0 + $0x198] sm:$0xff]
  %v75 = vld [vmem:[%s0 + $0x1a0] sm:$0xff]
  %v76 = vld [vmem:[%s0 + $0x1a8] sm:$0xff]
  %v77 = vld [vmem:[%s0 + $0x1b0] sm:$0xff]
  %v78 = vld [vmem:[%s0 + $0x1b8] sm:$0xff]
  %v79 = vld [vmem:[%s0 + $0x1c0] sm:$0xff]
  %v80 = vld [vmem:[%s0 + $0x1c8] sm:$0xff]
  %v81 = vld [vmem:[%s0 + $0x1d0] sm:$0xff]
  %v82 = vld [vmem:[%s0 + $0x1d8] sm:$0xff]
  %v83 = vld [vmem:[%s0 + $0x1e0] sm:$0xff]
  %v84 = vld [vmem:[%s0 + $0x1e8] sm:$0xff]
  %v85 = vld [vmem:[%s0 + $0x1f0] sm:$0xff]
  %v86 = vld [vmem:[%s0 + $0x1f8] sm:$0xff]
  %v87 = vld [vmem:[%s1] sm:$0xf]
  %vm88 = vcmask 31744
  %v90 = vsel %vm88, %v23, 0
  %v93 = vsel %vm88, %v24, 0
  %v96 = vsel %vm88, %v25, 0
  %v99 = vsel %vm88, %v26, 0
  %v102 = vsel %vm88, %v27, 0
  %v105 = vsel %vm88, %v28, 0
  %v108 = vsel %vm88, %v29, 0
  %v111 = vsel %vm88, %v30, 0
  %v114 = vsel %vm88, %v31, 0
  %v117 = vsel %vm88, %v32, 0
  %v120 = vsel %vm88, %v33, 0
  %v123 = vsel %vm88, %v34, 0
  %v126 = vsel %vm88, %v35, 0
  %v129 = vsel %vm88, %v36, 0
  %v132 = vsel %vm88, %v37, 0
  %v135 = vsel %vm88, %v38, 0
  %v138 = vsel %vm88, %v39, 0
  %v141 = vsel %vm88, %v40, 0
  %v144 = vsel %vm88, %v41, 0
  %v147 = vsel %vm88, %v42, 0
  %v150 = vsel %vm88, %v43, 0
  %v153 = vsel %vm88, %v44, 0
  %v156 = vsel %vm88, %v45, 0
  %v159 = vsel %vm88, %v46, 0
  %v162 = vsel %vm88, %v47, 0
  %v165 = vsel %vm88, %v48, 0
  %v168 = vsel %vm88, %v49, 0
  %v171 = vsel %vm88, %v50, 0
  %v174 = vsel %vm88, %v51, 0
  %v177 = vsel %vm88, %v52, 0
  %v180 = vsel %vm88, %v53, 0
  %v183 = vsel %vm88, %v54, 0
  %v186 = vsel %vm88, %v55, 0
  %v189 = vsel %vm88, %v56, 0
  %v192 = vsel %vm88, %v57, 0
  %v195 = vsel %vm88, %v58, 0
  %v198 = vsel %vm88, %v59, 0
  %v201 = vsel %vm88, %v60, 0
  %v204 = vsel %vm88, %v61, 0
  %v207 = vsel %vm88, %v62, 0
  %v210 = vsel %vm88, %v63, 0
  %v213 = vsel %vm88, %v64, 0
  %v216 = vsel %vm88, %v65, 0
  %v219 = vsel %vm88, %v66, 0
  %v222 = vsel %vm88, %v67, 0
  %v225 = vsel %vm88, %v68, 0
  %v228 = vsel %vm88, %v69, 0
  %v231 = vsel %vm88, %v70, 0
  %v234 = vsel %vm88, %v71, 0
  %v237 = vsel %vm88, %v72, 0
  %v240 = vsel %vm88, %v73, 0
  %v243 = vsel %vm88, %v74, 0
  %v246 = vsel %vm88, %v75, 0
  %v249 = vsel %vm88, %v76, 0
  %v252 = vsel %vm88, %v77, 0
  %v255 = vsel %vm88, %v78, 0
  %v258 = vsel %vm88, %v79, 0
  %v261 = vsel %vm88, %v80, 0
  %v264 = vsel %vm88, %v81, 0
  %v267 = vsel %vm88, %v82, 0
  %v270 = vsel %vm88, %v83, 0
  %v273 = vsel %vm88, %v84, 0
  %v276 = vsel %vm88, %v85, 0
  %v279 = vsel %vm88, %v86, 0
  %vm281 = vcmask 1043456
  %v283 = vsel %vm281, %v87, 0
  %285 = vmatprep.subr.mxu0 0.0
  %286 = vmatpush1.msra.mxu0 0.0
  %287 = vmatprep.subr.mxu0 0.0
  %288 = vmatpush1.msra.mxu0 0.0
  %289 = vmatprep.subr.mxu0 0.0
  %290 = vmatpush1.msra.mxu0 0.0
  %291 = vmatprep.subr.mxu0 0.0
  %292 = vmatpush1.msra.mxu0 0.0
  %293 = vmatprep.subr.mxu0 0.0
  %294 = vmatpush1.msra.mxu0 0.0
  %295 = vmatprep.subr.mxu0 0.0
  %296 = vmatpush1.msra.mxu0 0.0
  %297 = vmatprep.subr.mxu0 0.0
  %298 = vmatpush1.msra.mxu0 0.0
  %299 = vmatprep.subr.mxu0 0.0
  %300 = vmatpush1.msra.mxu0 0.0
  %301 = vmatprep.subr.mxu0 0.0
  %302 = vmatpush1.msra.mxu0 0.0
  %303 = vmatprep.subr.mxu0 0.0
  %304 = vmatpush1.msra.mxu0 0.0
  %305 = vmatprep.subr.mxu0 0.0
  %306 = vmatpush1.msra.mxu0 0.0
  %307 = vmatprep.subr.mxu0 0.0
  %308 = vmatpush1.msra.mxu0 0.0
  %309 = vmatprep.subr.mxu0 0.0
  %310 = vmatpush1.msra.mxu0 0.0
  %311 = vmatprep.subr.mxu0 0.0
  %312 = vmatpush1.msra.mxu0 0.0
  %313 = vmatprep.subr.mxu0 0.0
  %314 = vmatpush1.msra.mxu0 0.0
  %315 = vmatprep.subr.mxu0 0.0
  %316 = vmatpush1.msra.mxu0 %v283
  %317 = vmatprep.subr.mxu0 0.0
  %318 = vmatpush2.msra.mxu0 0.0
  %319 = vmatprep.subr.mxu0 0.0
  %320 = vmatpush2.msra.mxu0 0.0
  %321 = vmatprep.subr.mxu0 0.0
  %322 = vmatpush2.msra.mxu0 0.0
  %323 = vmatprep.subr.mxu0 0.0
  %324 = vmatpush2.msra.mxu0 0.0
  %325 = vmatprep.subr.mxu0 0.0
  %326 = vmatpush2.msra.mxu0 0.0
  %327 = vmatprep.subr.mxu0 0.0
  %328 = vmatpush2.msra.mxu0 0.0
  %329 = vmatprep.subr.mxu0 0.0
  %330 = vmatpush2.msra.mxu0 0.0
  %331 = vmatprep.subr.mxu0 0.0
  %332 = vmatpush2.msra.mxu0 0.0
  %333 = vmatprep.subr.mxu0 0.0
  %334 = vmatpush2.msra.mxu0 0.0
  %335 = vmatprep.subr.mxu0 0.0
  %336 = vmatpush2.msra.mxu0 0.0
  %337 = vmatprep.subr.mxu0 0.0
  %338 = vmatpush2.msra.mxu0 0.0
  %339 = vmatprep.subr.mxu0 0.0
  %340 = vmatpush2.msra.mxu0 0.0
  %341 = vmatprep.subr.mxu0 0.0
  %342 = vmatpush2.msra.mxu0 0.0
  %343 = vmatprep.subr.mxu0 0.0
  %344 = vmatpush2.msra.mxu0 0.0
  %345 = vmatprep.subr.mxu0 0.0
  %346 = vmatpush2.msra.mxu0 0.0
  %347 = vmatprep.subr.mxu0 0.0
  %348 = vmatpush2.msra.mxu0 0.0
  %349 = vmatprep.mubr.f32.mxu0 0.0
  %350 = vmatmul.mubr.f32.gmra.mxu0 %v90
  %v351 = vpop.f32.mrf.mxu0
  %v352 = vadd.f32 0.0, %v351
  %v353 = vpop.f32.mrf.mxu0
  %354 = vmatprep.mubr.f32.mxu0 0.0
  %355 = vmatmul.mubr.f32.gmra.mxu0 %v93
  %v356 = vpop.f32.mrf.mxu0
  %v357 = vadd.f32 0.0, %v356
  %v358 = vpop.f32.mrf.mxu0
  %359 = vmatprep.mubr.f32.mxu0 0.0
  %360 = vmatmul.mubr.f32.gmra.mxu0 %v96
  %v361 = vpop.f32.mrf.mxu0
  %v362 = vadd.f32 0.0, %v361
  %v363 = vpop.f32.mrf.mxu0
  %364 = vmatprep.mubr.f32.mxu0 0.0
  %365 = vmatmul.mubr.f32.gmra.mxu0 %v99
  %v366 = vpop.f32.mrf.mxu0
  %v367 = vadd.f32 0.0, %v366
  %v368 = vpop.f32.mrf.mxu0
  %369 = vmatprep.mubr.f32.mxu0 0.0
  %370 = vmatmul.mubr.f32.gmra.mxu0 %v102
  %v371 = vpop.f32.mrf.mxu0
  %v372 = vadd.f32 0.0, %v371
  %v373 = vpop.f32.mrf.mxu0
  %374 = vmatprep.mubr.f32.mxu0 0.0
  %375 = vmatmul.mubr.f32.gmra.mxu0 %v105
  %v376 = vpop.f32.mrf.mxu0
  %v377 = vadd.f32 0.0, %v376
  %v378 = vpop.f32.mrf.mxu0
  %379 = vmatprep.mubr.f32.mxu0 0.0
  %380 = vmatmul.mubr.f32.gmra.mxu0 %v108
  %v381 = vpop.f32.mrf.mxu0
  %v382 = vadd.f32 0.0, %v381
  %v383 = vpop.f32.mrf.mxu0
  %384 = vmatprep.mubr.f32.mxu0 0.0
  %385 = vmatmul.mubr.f32.gmra.mxu0 %v111
  %v386 = vpop.f32.mrf.mxu0
  %v387 = vadd.f32 0.0, %v386
  %v388 = vpop.f32.mrf.mxu0
  %389 = vmatprep.mubr.f32.mxu0 0.0
  %390 = vmatmul.mubr.f32.gmra.mxu0 %v114
  %v391 = vpop.f32.mrf.mxu0
  %v392 = vadd.f32 0.0, %v391
  %v393 = vpop.f32.mrf.mxu0
  %394 = vmatprep.mubr.f32.mxu0 0.0
  %395 = vmatmul.mubr.f32.gmra.mxu0 %v117
  %v396 = vpop.f32.mrf.mxu0
  %v397 = vadd.f32 0.0, %v396
  %v398 = vpop.f32.mrf.mxu0
  %399 = vmatprep.mubr.f32.mxu0 0.0
  %400 = vmatmul.mubr.f32.gmra.mxu0 %v120
  %v401 = vpop.f32.mrf.mxu0
  %v402 = vadd.f32 0.0, %v401
  %v403 = vpop.f32.mrf.mxu0
  %404 = vmatprep.mubr.f32.mxu0 0.0
  %405 = vmatmul.mubr.f32.gmra.mxu0 %v123
  %v406 = vpop.f32.mrf.mxu0
  %v407 = vadd.f32 0.0, %v406
  %v408 = vpop.f32.mrf.mxu0
  %409 = vmatprep.mubr.f32.mxu0 0.0
  %410 = vmatmul.mubr.f32.gmra.mxu0 %v126
  %v411 = vpop.f32.mrf.mxu0
  %v412 = vadd.f32 0.0, %v411
  %v413 = vpop.f32.mrf.mxu0
  %414 = vmatprep.mubr.f32.mxu0 0.0
  %415 = vmatmul.mubr.f32.gmra.mxu0 %v129
  %v416 = vpop.f32.mrf.mxu0
  %v417 = vadd.f32 0.0, %v416
  %v418 = vpop.f32.mrf.mxu0
  %419 = vmatprep.mubr.f32.mxu0 0.0
  %420 = vmatmul.mubr.f32.gmra.mxu0 %v132
  %v421 = vpop.f32.mrf.mxu0
  %v422 = vadd.f32 0.0, %v421
  %v423 = vpop.f32.mrf.mxu0
  %424 = vmatprep.mubr.f32.mxu0 0.0
  %425 = vmatmul.mubr.f32.gmra.mxu0 %v135
  %v426 = vpop.f32.mrf.mxu0
  %v427 = vadd.f32 0.0, %v426
  %v428 = vpop.f32.mrf.mxu0
  %429 = vmatprep.mubr.f32.mxu0 0.0
  %430 = vmatmul.mubr.f32.gmra.mxu0 %v138
  %v431 = vpop.f32.mrf.mxu0
  %v432 = vadd.f32 0.0, %v431
  %v433 = vpop.f32.mrf.mxu0
  %434 = vmatprep.mubr.f32.mxu0 0.0
  %435 = vmatmul.mubr.f32.gmra.mxu0 %v141
  %v436 = vpop.f32.mrf.mxu0
  %v437 = vadd.f32 0.0, %v436
  %v438 = vpop.f32.mrf.mxu0
  %439 = vmatprep.mubr.f32.mxu0 0.0
  %440 = vmatmul.mubr.f32.gmra.mxu0 %v144
  %v441 = vpop.f32.mrf.mxu0
  %v442 = vadd.f32 0.0, %v441
  %v443 = vpop.f32.mrf.mxu0
  %444 = vmatprep.mubr.f32.mxu0 0.0
  %445 = vmatmul.mubr.f32.gmra.mxu0 %v147
  %v446 = vpop.f32.mrf.mxu0
  %v447 = vadd.f32 0.0, %v446
  %v448 = vpop.f32.mrf.mxu0
  %449 = vmatprep.mubr.f32.mxu0 0.0
  %450 = vmatmul.mubr.f32.gmra.mxu0 %v150
  %v451 = vpop.f32.mrf.mxu0
  %v452 = vadd.f32 0.0, %v451
  %v453 = vpop.f32.mrf.mxu0
  %454 = vmatprep.mubr.f32.mxu0 0.0
  %455 = vmatmul.mubr.f32.gmra.mxu0 %v153
  %v456 = vpop.f32.mrf.mxu0
  %v457 = vadd.f32 0.0, %v456
  %v458 = vpop.f32.mrf.mxu0
  %459 = vmatprep.mubr.f32.mxu0 0.0
  %460 = vmatmul.mubr.f32.gmra.mxu0 %v156
  %v461 = vpop.f32.mrf.mxu0
  %v462 = vadd.f32 0.0, %v461
  %v463 = vpop.f32.mrf.mxu0
  %464 = vmatprep.mubr.f32.mxu0 0.0
  %465 = vmatmul.mubr.f32.gmra.mxu0 %v159
  %v466 = vpop.f32.mrf.mxu0
  %v467 = vadd.f32 0.0, %v466
  %v468 = vpop.f32.mrf.mxu0
  %469 = vmatprep.mubr.f32.mxu0 0.0
  %470 = vmatmul.mubr.f32.gmra.mxu0 %v162
  %v471 = vpop.f32.mrf.mxu0
  %v472 = vadd.f32 0.0, %v471
  %v473 = vpop.f32.mrf.mxu0
  %474 = vmatprep.mubr.f32.mxu0 0.0
  %475 = vmatmul.mubr.f32.gmra.mxu0 %v165
  %v476 = vpop.f32.mrf.mxu0
  %v477 = vadd.f32 0.0, %v476
  %v478 = vpop.f32.mrf.mxu0
  %479 = vmatprep.mubr.f32.mxu0 0.0
  %480 = vmatmul.mubr.f32.gmra.mxu0 %v168
  %v481 = vpop.f32.mrf.mxu0
  %v482 = vadd.f32 0.0, %v481
  %v483 = vpop.f32.mrf.mxu0
  %484 = vmatprep.mubr.f32.mxu0 0.0
  %485 = vmatmul.mubr.f32.gmra.mxu0 %v171
  %v486 = vpop.f32.mrf.mxu0
  %v487 = vadd.f32 0.0, %v486
  %v488 = vpop.f32.mrf.mxu0
  %489 = vmatprep.mubr.f32.mxu0 0.0
  %490 = vmatmul.mubr.f32.gmra.mxu0 %v174
  %v491 = vpop.f32.mrf.mxu0
  %v492 = vadd.f32 0.0, %v491
  %v493 = vpop.f32.mrf.mxu0
  %494 = vmatprep.mubr.f32.mxu0 0.0
  %495 = vmatmul.mubr.f32.gmra.mxu0 %v177
  %v496 = vpop.f32.mrf.mxu0
  %v497 = vadd.f32 0.0, %v496
  %v498 = vpop.f32.mrf.mxu0
  %499 = vmatprep.mubr.f32.mxu0 0.0
  %500 = vmatmul.mubr.f32.gmra.mxu0 %v180
  %v501 = vpop.f32.mrf.mxu0
  %v502 = vadd.f32 0.0, %v501
  %v503 = vpop.f32.mrf.mxu0
  %504 = vmatprep.mubr.f32.mxu0 0.0
  %505 = vmatmul.mubr.f32.gmra.mxu0 %v183
  %v506 = vpop.f32.mrf.mxu0
  %v507 = vadd.f32 0.0, %v506
  %v508 = vpop.f32.mrf.mxu0
  %509 = vmatprep.mubr.f32.mxu0 0.0
  %510 = vmatmul.mubr.f32.gmra.mxu0 %v186
  %v511 = vpop.f32.mrf.mxu0
  %v512 = vadd.f32 0.0, %v511
  %v513 = vpop.f32.mrf.mxu0
  %514 = vmatprep.mubr.f32.mxu0 0.0
  %515 = vmatmul.mubr.f32.gmra.mxu0 %v189
  %v516 = vpop.f32.mrf.mxu0
  %v517 = vadd.f32 0.0, %v516
  %v518 = vpop.f32.mrf.mxu0
  %519 = vmatprep.mubr.f32.mxu0 0.0
  %520 = vmatmul.mubr.f32.gmra.mxu0 %v192
  %v521 = vpop.f32.mrf.mxu0
  %v522 = vadd.f32 0.0, %v521
  %v523 = vpop.f32.mrf.mxu0
  %524 = vmatprep.mubr.f32.mxu0 0.0
  %525 = vmatmul.mubr.f32.gmra.mxu0 %v195
  %v526 = vpop.f32.mrf.mxu0
  %v527 = vadd.f32 0.0, %v526
  %v528 = vpop.f32.mrf.mxu0
  %529 = vmatprep.mubr.f32.mxu0 0.0
  %530 = vmatmul.mubr.f32.gmra.mxu0 %v198
  %v531 = vpop.f32.mrf.mxu0
  %v532 = vadd.f32 0.0, %v531
  %v533 = vpop.f32.mrf.mxu0
  %534 = vmatprep.mubr.f32.mxu0 0.0
  %535 = vmatmul.mubr.f32.gmra.mxu0 %v201
  %v536 = vpop.f32.mrf.mxu0
  %v537 = vadd.f32 0.0, %v536
  %v538 = vpop.f32.mrf.mxu0
  %539 = vmatprep.mubr.f32.mxu0 0.0
  %540 = vmatmul.mubr.f32.gmra.mxu0 %v204
  %v541 = vpop.f32.mrf.mxu0
  %v542 = vadd.f32 0.0, %v541
  %v543 = vpop.f32.mrf.mxu0
  %544 = vmatprep.mubr.f32.mxu0 0.0
  %545 = vmatmul.mubr.f32.gmra.mxu0 %v207
  %v546 = vpop.f32.mrf.mxu0
  %v547 = vadd.f32 0.0, %v546
  %v548 = vpop.f32.mrf.mxu0
  %549 = vmatprep.mubr.f32.mxu0 0.0
  %550 = vmatmul.mubr.f32.gmra.mxu0 %v210
  %v551 = vpop.f32.mrf.mxu0
  %v552 = vadd.f32 0.0, %v551
  %v553 = vpop.f32.mrf.mxu0
  %554 = vmatprep.mubr.f32.mxu0 0.0
  %555 = vmatmul.mubr.f32.gmra.mxu0 %v213
  %v556 = vpop.f32.mrf.mxu0
  %v557 = vadd.f32 0.0, %v556
  %v558 = vpop.f32.mrf.mxu0
  %559 = vmatprep.mubr.f32.mxu0 0.0
  %560 = vmatmul.mubr.f32.gmra.mxu0 %v216
  %v561 = vpop.f32.mrf.mxu0
  %v562 = vadd.f32 0.0, %v561
  %v563 = vpop.f32.mrf.mxu0
  %564 = vmatprep.mubr.f32.mxu0 0.0
  %565 = vmatmul.mubr.f32.gmra.mxu0 %v219
  %v566 = vpop.f32.mrf.mxu0
  %v567 = vadd.f32 0.0, %v566
  %v568 = vpop.f32.mrf.mxu0
  %569 = vmatprep.mubr.f32.mxu0 0.0
  %570 = vmatmul.mubr.f32.gmra.mxu0 %v222
  %v571 = vpop.f32.mrf.mxu0
  %v572 = vadd.f32 0.0, %v571
  %v573 = vpop.f32.mrf.mxu0
  %574 = vmatprep.mubr.f32.mxu0 0.0
  %575 = vmatmul.mubr.f32.gmra.mxu0 %v225
  %v576 = vpop.f32.mrf.mxu0
  %v577 = vadd.f32 0.0, %v576
  %v578 = vpop.f32.mrf.mxu0
  %579 = vmatprep.mubr.f32.mxu0 0.0
  %580 = vmatmul.mubr.f32.gmra.mxu0 %v228
  %v581 = vpop.f32.mrf.mxu0
  %v582 = vadd.f32 0.0, %v581
  %v583 = vpop.f32.mrf.mxu0
  %584 = vmatprep.mubr.f32.mxu0 0.0
  %585 = vmatmul.mubr.f32.gmra.mxu0 %v231
  %v586 = vpop.f32.mrf.mxu0
  %v587 = vadd.f32 0.0, %v586
  %v588 = vpop.f32.mrf.mxu0
  %589 = vmatprep.mubr.f32.mxu0 0.0
  %590 = vmatmul.mubr.f32.gmra.mxu0 %v234
  %v591 = vpop.f32.mrf.mxu0
  %v592 = vadd.f32 0.0, %v591
  %v593 = vpop.f32.mrf.mxu0
  %594 = vmatprep.mubr.f32.mxu0 0.0
  %595 = vmatmul.mubr.f32.gmra.mxu0 %v237
  %v596 = vpop.f32.mrf.mxu0
  %v597 = vadd.f32 0.0, %v596
  %v598 = vpop.f32.mrf.mxu0
  %599 = vmatprep.mubr.f32.mxu0 0.0
  %600 = vmatmul.mubr.f32.gmra.mxu0 %v240
  %v601 = vpop.f32.mrf.mxu0
  %v602 = vadd.f32 0.0, %v601
  %v603 = vpop.f32.mrf.mxu0
  %604 = vmatprep.mubr.f32.mxu0 0.0
  %605 = vmatmul.mubr.f32.gmra.mxu0 %v243
  %v606 = vpop.f32.mrf.mxu0
  %v607 = vadd.f32 0.0, %v606
  %v608 = vpop.f32.mrf.mxu0
  %609 = vmatprep.mubr.f32.mxu0 0.0
  %610 = vmatmul.mubr.f32.gmra.mxu0 %v246
  %v611 = vpop.f32.mrf.mxu0
  %v612 = vadd.f32 0.0, %v611
  %v613 = vpop.f32.mrf.mxu0
  %614 = vmatprep.mubr.f32.mxu0 0.0
  %615 = vmatmul.mubr.f32.gmra.mxu0 %v249
  %v616 = vpop.f32.mrf.mxu0
  %v617 = vadd.f32 0.0, %v616
  %v618 = vpop.f32.mrf.mxu0
  %619 = vmatprep.mubr.f32.mxu0 0.0
  %620 = vmatmul.mubr.f32.gmra.mxu0 %v252
  %v621 = vpop.f32.mrf.mxu0
  %v622 = vadd.f32 0.0, %v621
  %v623 = vpop.f32.mrf.mxu0
  %624 = vmatprep.mubr.f32.mxu0 0.0
  %625 = vmatmul.mubr.f32.gmra.mxu0 %v255
  %v626 = vpop.f32.mrf.mxu0
  %v627 = vadd.f32 0.0, %v626
  %v628 = vpop.f32.mrf.mxu0
  %629 = vmatprep.mubr.f32.mxu0 0.0
  %630 = vmatmul.mubr.f32.gmra.mxu0 %v258
  %v631 = vpop.f32.mrf.mxu0
  %v632 = vadd.f32 0.0, %v631
  %v633 = vpop.f32.mrf.mxu0
  %634 = vmatprep.mubr.f32.mxu0 0.0
  %635 = vmatmul.mubr.f32.gmra.mxu0 %v261
  %v636 = vpop.f32.mrf.mxu0
  %v637 = vadd.f32 0.0, %v636
  %v638 = vpop.f32.mrf.mxu0
  %639 = vmatprep.mubr.f32.mxu0 0.0
  %640 = vmatmul.mubr.f32.gmra.mxu0 %v264
  %v641 = vpop.f32.mrf.mxu0
  %v642 = vadd.f32 0.0, %v641
  %v643 = vpop.f32.mrf.mxu0
  %644 = vmatprep.mubr.f32.mxu0 0.0
  %645 = vmatmul.mubr.f32.gmra.mxu0 %v267
  %v646 = vpop.f32.mrf.mxu0
  %v647 = vadd.f32 0.0, %v646
  %v648 = vpop.f32.mrf.mxu0
  %649 = vmatprep.mubr.f32.mxu0 0.0
  %650 = vmatmul.mubr.f32.gmra.mxu0 %v270
  %v651 = vpop.f32.mrf.mxu0
  %v652 = vadd.f32 0.0, %v651
  %v653 = vpop.f32.mrf.mxu0
  %654 = vmatprep.mubr.f32.mxu0 0.0
  %655 = vmatmul.mubr.f32.gmra.mxu0 %v273
  %v656 = vpop.f32.mrf.mxu0
  %v657 = vadd.f32 0.0, %v656
  %v658 = vpop.f32.mrf.mxu0
  %659 = vmatprep.mubr.f32.mxu0 0.0
  %660 = vmatmul.mubr.f32.gmra.mxu0 %v276
  %v661 = vpop.f32.mrf.mxu0
  %v662 = vadd.f32 0.0, %v661
  %v663 = vpop.f32.mrf.mxu0
  %664 = vmatprep.mubr.f32.mxu0 0.0
  %665 = vmatmul.mubr.f32.gmra.mxu0 %v279
  %v666 = vpop.f32.mrf.mxu0
  %v667 = vadd.f32 0.0, %v666
  %v668 = vpop.f32.mrf.mxu0
  %669 = vdwg.mxu0
  %v670 = vld [vmem:[%s2] sm:$0x1]
  %v672 = vlaneseq
  %v673 = vshrl.u32 %v672, 7
  %v674 = vsub.s32 0, %v673
  %v675 = vrot.slane %v670, %v674
  %v677 = vmul.f32 %v352, %v675
  %v678 = vmul.f32 %v357, %v675
  %v679 = vmul.f32 %v362, %v675
  %v680 = vmul.f32 %v367, %v675
  %v681 = vmul.f32 %v372, %v675
  %v682 = vmul.f32 %v377, %v675
  %v683 = vmul.f32 %v382, %v675
  %v684 = vmul.f32 %v387, %v675
  %v685 = vmul.f32 %v392, %v675
  %v686 = vmul.f32 %v397, %v675
  %v687 = vmul.f32 %v402, %v675
  %v688 = vmul.f32 %v407, %v675
  %v689 = vmul.f32 %v412, %v675
  %v690 = vmul.f32 %v417, %v675
  %v691 = vmul.f32 %v422, %v675
  %v692 = vmul.f32 %v427, %v675
  %v693 = vmul.f32 %v432, %v675
  %v694 = vmul.f32 %v437, %v675
  %v695 = vmul.f32 %v442, %v675
  %v696 = vmul.f32 %v447, %v675
  %v697 = vmul.f32 %v452, %v675
  %v698 = vmul.f32 %v457, %v675
  %v699 = vmul.f32 %v462, %v675
  %v700 = vmul.f32 %v467, %v675
  %v701 = vmul.f32 %v472, %v675
  %v702 = vmul.f32 %v477, %v675
  %v703 = vmul.f32 %v482, %v675
  %v704 = vmul.f32 %v487, %v675
  %v705 = vmul.f32 %v492, %v675
  %v706 = vmul.f32 %v497, %v675
  %v707 = vmul.f32 %v502, %v675
  %v708 = vmul.f32 %v507, %v675
  %v709 = vmul.f32 %v512, %v675
  %v710 = vmul.f32 %v517, %v675
  %v711 = vmul.f32 %v522, %v675
  %v712 = vmul.f32 %v527, %v675
  %v713 = vmul.f32 %v532, %v675
  %v714 = vmul.f32 %v537, %v675
  %v715 = vmul.f32 %v542, %v675
  %v716 = vmul.f32 %v547, %v675
  %v717 = vmul.f32 %v552, %v675
  %v718 = vmul.f32 %v557, %v675
  %v719 = vmul.f32 %v562, %v675
  %v720 = vmul.f32 %v567, %v675
  %v721 = vmul.f32 %v572, %v675
  %v722 = vmul.f32 %v577, %v675
  %v723 = vmul.f32 %v582, %v675
  %v724 = vmul.f32 %v587, %v675
  %v725 = vmul.f32 %v592, %v675
  %v726 = vmul.f32 %v597, %v675
  %v727 = vmul.f32 %v602, %v675
  %v728 = vmul.f32 %v607, %v675
  %v729 = vmul.f32 %v612, %v675
  %v730 = vmul.f32 %v617, %v675
  %v731 = vmul.f32 %v622, %v675
  %v732 = vmul.f32 %v627, %v675
  %v733 = vmul.f32 %v632, %v675
  %v734 = vmul.f32 %v637, %v675
  %v735 = vmul.f32 %v642, %v675
  %v736 = vmul.f32 %v647, %v675
  %v737 = vmul.f32 %v652, %v675
  %v738 = vmul.f32 %v657, %v675
  %v739 = vmul.f32 %v662, %v675
  %v740 = vmul.f32 %v667, %v675
  %v741 = vld [vmem:[%s3] sm:$0x1]
  %v743 = vlaneseq
  %v744 = vshrl.u32 %v743, 7
  %v745 = vsub.s32 0, %v744
  %v746 = vrot.slane %v741, %v745
  %v748 = vadd.f32 %v677, %v746
  %v749 = vadd.f32 %v678, %v746
  %v750 = vadd.f32 %v679, %v746
  %v751 = vadd.f32 %v680, %v746
  %v752 = vadd.f32 %v681, %v746
  %v753 = vadd.f32 %v682, %v746
  %v754 = vadd.f32 %v683, %v746
  %v755 = vadd.f32 %v684, %v746
  %v756 = vadd.f32 %v685, %v746
  %v757 = vadd.f32 %v686, %v746
  %v758 = vadd.f32 %v687, %v746
  %v759 = vadd.f32 %v688, %v746
  %v760 = vadd.f32 %v689, %v746
  %v761 = vadd.f32 %v690, %v746
  %v762 = vadd.f32 %v691, %v746
  %v763 = vadd.f32 %v692, %v746
  %v764 = vadd.f32 %v693, %v746
  %v765 = vadd.f32 %v694, %v746
  %v766 = vadd.f32 %v695, %v746
  %v767 = vadd.f32 %v696, %v746
  %v768 = vadd.f32 %v697, %v746
  %v769 = vadd.f32 %v698, %v746
  %v770 = vadd.f32 %v699, %v746
  %v771 = vadd.f32 %v700, %v746
  %v772 = vadd.f32 %v701, %v746
  %v773 = vadd.f32 %v702, %v746
  %v774 = vadd.f32 %v703, %v746
  %v775 = vadd.f32 %v704, %v746
  %v776 = vadd.f32 %v705, %v746
  %v777 = vadd.f32 %v706, %v746
  %v778 = vadd.f32 %v707, %v746
  %v779 = vadd.f32 %v708, %v746
  %v780 = vadd.f32 %v709, %v746
  %v781 = vadd.f32 %v710, %v746
  %v782 = vadd.f32 %v711, %v746
  %v783 = vadd.f32 %v712, %v746
  %v784 = vadd.f32 %v713, %v746
  %v785 = vadd.f32 %v714, %v746
  %v786 = vadd.f32 %v715, %v746
  %v787 = vadd.f32 %v716, %v746
  %v788 = vadd.f32 %v717, %v746
  %v789 = vadd.f32 %v718, %v746
  %v790 = vadd.f32 %v719, %v746
  %v791 = vadd.f32 %v720, %v746
  %v792 = vadd.f32 %v721, %v746
  %v793 = vadd.f32 %v722, %v746
  %v794 = vadd.f32 %v723, %v746
  %v795 = vadd.f32 %v724, %v746
  %v796 = vadd.f32 %v725, %v746
  %v797 = vadd.f32 %v726, %v746
  %v798 = vadd.f32 %v727, %v746
  %v799 = vadd.f32 %v728, %v746
  %v800 = vadd.f32 %v729, %v746
  %v801 = vadd.f32 %v730, %v746
  %v802 = vadd.f32 %v731, %v746
  %v803 = vadd.f32 %v732, %v746
  %v804 = vadd.f32 %v733, %v746
  %v805 = vadd.f32 %v734, %v746
  %v806 = vadd.f32 %v735, %v746
  %v807 = vadd.f32 %v736, %v746
  %v808 = vadd.f32 %v737, %v746
  %v809 = vadd.f32 %v738, %v746
  %v810 = vadd.f32 %v739, %v746
  %v811 = vadd.f32 %v740, %v746
  %v812 = vmul.f32 %v748, 0.5
  %v813 = vmul.f32 %v749, 0.5
  %v814 = vmul.f32 %v750, 0.5
  %v815 = vmul.f32 %v751, 0.5
  %v816 = vmul.f32 %v752, 0.5
  %v817 = vmul.f32 %v753, 0.5
  %v818 = vmul.f32 %v754, 0.5
  %v819 = vmul.f32 %v755, 0.5
  %v820 = vmul.f32 %v756, 0.5
  %v821 = vmul.f32 %v757, 0.5
  %v822 = vmul.f32 %v758, 0.5
  %v823 = vmul.f32 %v759, 0.5
  %v824 = vmul.f32 %v760, 0.5
  %v825 = vmul.f32 %v761, 0.5
  %v826 = vmul.f32 %v762, 0.5
  %v827 = vmul.f32 %v763, 0.5
  %v828 = vmul.f32 %v764, 0.5
  %v829 = vmul.f32 %v765, 0.5
  %v830 = vmul.f32 %v766, 0.5
  %v831 = vmul.f32 %v767, 0.5
  %v832 = vmul.f32 %v768, 0.5
  %v833 = vmul.f32 %v769, 0.5
  %v834 = vmul.f32 %v770, 0.5
  %v835 = vmul.f32 %v771, 0.5
  %v836 = vmul.f32 %v772, 0.5
  %v837 = vmul.f32 %v773, 0.5
  %v838 = vmul.f32 %v774, 0.5
  %v839 = vmul.f32 %v775, 0.5
  %v840 = vmul.f32 %v776, 0.5
  %v841 = vmul.f32 %v777, 0.5
  %v842 = vmul.f32 %v778, 0.5
  %v843 = vmul.f32 %v779, 0.5
  %v844 = vmul.f32 %v780, 0.5
  %v845 = vmul.f32 %v781, 0.5
  %v846 = vmul.f32 %v782, 0.5
  %v847 = vmul.f32 %v783, 0.5
  %v848 = vmul.f32 %v784, 0.5
  %v849 = vmul.f32 %v785, 0.5
  %v850 = vmul.f32 %v786, 0.5
  %v851 = vmul.f32 %v787, 0.5
  %v852 = vmul.f32 %v788, 0.5
  %v853 = vmul.f32 %v789, 0.5
  %v854 = vmul.f32 %v790, 0.5
  %v855 = vmul.f32 %v791, 0.5
  %v856 = vmul.f32 %v792, 0.5
  %v857 = vmul.f32 %v793, 0.5
  %v858 = vmul.f32 %v794, 0.5
  %v859 = vmul.f32 %v795, 0.5
  %v860 = vmul.f32 %v796, 0.5
  %v861 = vmul.f32 %v797, 0.5
  %v862 = vmul.f32 %v798, 0.5
  %v863 = vmul.f32 %v799, 0.5
  %v864 = vmul.f32 %v800, 0.5
  %v865 = vmul.f32 %v801, 0.5
  %v866 = vmul.f32 %v802, 0.5
  %v867 = vmul.f32 %v803, 0.5
  %v868 = vmul.f32 %v804, 0.5
  %v869 = vmul.f32 %v805, 0.5
  %v870 = vmul.f32 %v806, 0.5
  %v871 = vmul.f32 %v807, 0.5
  %v872 = vmul.f32 %v808, 0.5
  %v873 = vmul.f32 %v809, 0.5
  %v874 = vmul.f32 %v810, 0.5
  %v875 = vmul.f32 %v811, 0.5
  %v876 = vmul.f32 %v748, 0.70710677
  %v877 = vmul.f32 %v749, 0.70710677
  %v878 = vmul.f32 %v750, 0.70710677
  %v879 = vmul.f32 %v751, 0.70710677
  %v880 = vmul.f32 %v752, 0.70710677
  %v881 = vmul.f32 %v753, 0.70710677
  %v882 = vmul.f32 %v754, 0.70710677
  %v883 = vmul.f32 %v755, 0.70710677
  %v884 = vmul.f32 %v756, 0.70710677
  %v885 = vmul.f32 %v757, 0.70710677
  %v886 = vmul.f32 %v758, 0.70710677
  %v887 = vmul.f32 %v759, 0.70710677
  %v888 = vmul.f32 %v760, 0.70710677
  %v889 = vmul.f32 %v761, 0.70710677
  %v890 = vmul.f32 %v762, 0.70710677
  %v891 = vmul.f32 %v763, 0.70710677
  %v892 = vmul.f32 %v764, 0.70710677
  %v893 = vmul.f32 %v765, 0.70710677
  %v894 = vmul.f32 %v766, 0.70710677
  %v895 = vmul.f32 %v767, 0.70710677
  %v896 = vmul.f32 %v768, 0.70710677
  %v897 = vmul.f32 %v769, 0.70710677
  %v898 = vmul.f32 %v770, 0.70710677
  %v899 = vmul.f32 %v771, 0.70710677
  %v900 = vmul.f32 %v772, 0.70710677
  %v901 = vmul.f32 %v773, 0.70710677
  %v902 = vmul.f32 %v774, 0.70710677
  %v903 = vmul.f32 %v775, 0.70710677
  %v904 = vmul.f32 %v776, 0.70710677
  %v905 = vmul.f32 %v777, 0.70710677
  %v906 = vmul.f32 %v778, 0.70710677
  %v907 = vmul.f32 %v779, 0.70710677
  %v908 = vmul.f32 %v780, 0.70710677
  %v909 = vmul.f32 %v781, 0.70710677
  %v910 = vmul.f32 %v782, 0.70710677
  %v911 = vmul.f32 %v783, 0.70710677
  %v912 = vmul.f32 %v784, 0.70710677
  %v913 = vmul.f32 %v785, 0.70710677
  %v914 = vmul.f32 %v786, 0.70710677
  %v915 = vmul.f32 %v787, 0.70710677
  %v916 = vmul.f32 %v788, 0.70710677
  %v917 = vmul.f32 %v789, 0.70710677
  %v918 = vmul.f32 %v790, 0.70710677
  %v919 = vmul.f32 %v791, 0.70710677
  %v920 = vmul.f32 %v792, 0.70710677
  %v921 = vmul.f32 %v793, 0.70710677
  %v922 = vmul.f32 %v794, 0.70710677
  %v923 = vmul.f32 %v795, 0.70710677
  %v924 = vmul.f32 %v796, 0.70710677
  %v925 = vmul.f32 %v797, 0.70710677
  %v926 = vmul.f32 %v798, 0.70710677
  %v927 = vmul.f32 %v799, 0.70710677
  %v928 = vmul.f32 %v800, 0.70710677
  %v929 = vmul.f32 %v801, 0.70710677
  %v930 = vmul.f32 %v802, 0.70710677
  %v931 = vmul.f32 %v803, 0.70710677
  %v932 = vmul.f32 %v804, 0.70710677
  %v933 = vmul.f32 %v805, 0.70710677
  %v934 = vmul.f32 %v806, 0.70710677
  %v935 = vmul.f32 %v807, 0.70710677
  %v936 = vmul.f32 %v808, 0.70710677
  %v937 = vmul.f32 %v809, 0.70710677
  %v938 = vmul.f32 %v810, 0.70710677
  %v939 = vmul.f32 %v811, 0.70710677
  %vm940 = vcmp.ge.f32.partialorder %v876, 0.0
  %vm941 = vcmp.ge.f32.partialorder %v877, 0.0
  %vm942 = vcmp.ge.f32.partialorder %v878, 0.0
  %vm943 = vcmp.ge.f32.partialorder %v879, 0.0
  %vm944 = vcmp.ge.f32.partialorder %v880, 0.0
  %vm945 = vcmp.ge.f32.partialorder %v881, 0.0
  %vm946 = vcmp.ge.f32.partialorder %v882, 0.0
  %vm947 = vcmp.ge.f32.partialorder %v883, 0.0
  %vm948 = vcmp.ge.f32.partialorder %v884, 0.0
  %vm949 = vcmp.ge.f32.partialorder %v885, 0.0
  %vm950 = vcmp.ge.f32.partialorder %v886, 0.0
  %vm951 = vcmp.ge.f32.partialorder %v887, 0.0
  %vm952 = vcmp.ge.f32.partialorder %v888, 0.0
  %vm953 = vcmp.ge.f32.partialorder %v889, 0.0
  %vm954 = vcmp.ge.f32.partialorder %v890, 0.0
  %vm955 = vcmp.ge.f32.partialorder %v891, 0.0
  %vm956 = vcmp.ge.f32.partialorder %v892, 0.0
  %vm957 = vcmp.ge.f32.partialorder %v893, 0.0
  %vm958 = vcmp.ge.f32.partialorder %v894, 0.0
  %vm959 = vcmp.ge.f32.partialorder %v895, 0.0
  %vm960 = vcmp.ge.f32.partialorder %v896, 0.0
  %vm961 = vcmp.ge.f32.partialorder %v897, 0.0
  %vm962 = vcmp.ge.f32.partialorder %v898, 0.0
  %vm963 = vcmp.ge.f32.partialorder %v899, 0.0
  %vm964 = vcmp.ge.f32.partialorder %v900, 0.0
  %vm965 = vcmp.ge.f32.partialorder %v901, 0.0
  %vm966 = vcmp.ge.f32.partialorder %v902, 0.0
  %vm967 = vcmp.ge.f32.partialorder %v903, 0.0
  %vm968 = vcmp.ge.f32.partialorder %v904, 0.0
  %vm969 = vcmp.ge.f32.partialorder %v905, 0.0
  %vm970 = vcmp.ge.f32.partialorder %v906, 0.0
  %vm971 = vcmp.ge.f32.partialorder %v907, 0.0
  %vm972 = vcmp.ge.f32.partialorder %v908, 0.0
  %vm973 = vcmp.ge.f32.partialorder %v909, 0.0
  %vm974 = vcmp.ge.f32.partialorder %v910, 0.0
  %vm975 = vcmp.ge.f32.partialorder %v911, 0.0
  %vm976 = vcmp.ge.f32.partialorder %v912, 0.0
  %vm977 = vcmp.ge.f32.partialorder %v913, 0.0
  %vm978 = vcmp.ge.f32.partialorder %v914, 0.0
  %vm979 = vcmp.ge.f32.partialorder %v915, 0.0
  %vm980 = vcmp.ge.f32.partialorder %v916, 0.0
  %vm981 = vcmp.ge.f32.partialorder %v917, 0.0
  %vm982 = vcmp.ge.f32.partialorder %v918, 0.0
  %vm983 = vcmp.ge.f32.partialorder %v919, 0.0
  %vm984 = vcmp.ge.f32.partialorder %v920, 0.0
  %vm985 = vcmp.ge.f32.partialorder %v921, 0.0
  %vm986 = vcmp.ge.f32.partialorder %v922, 0.0
  %vm987 = vcmp.ge.f32.partialorder %v923, 0.0
  %vm988 = vcmp.ge.f32.partialorder %v924, 0.0
  %vm989 = vcmp.ge.f32.partialorder %v925, 0.0
  %vm990 = vcmp.ge.f32.partialorder %v926, 0.0
  %vm991 = vcmp.ge.f32.partialorder %v927, 0.0
  %vm992 = vcmp.ge.f32.partialorder %v928, 0.0
  %vm993 = vcmp.ge.f32.partialorder %v929, 0.0
  %vm994 = vcmp.ge.f32.partialorder %v930, 0.0
  %vm995 = vcmp.ge.f32.partialorder %v931, 0.0
  %vm996 = vcmp.ge.f32.partialorder %v932, 0.0
  %vm997 = vcmp.ge.f32.partialorder %v933, 0.0
  %vm998 = vcmp.ge.f32.partialorder %v934, 0.0
  %vm999 = vcmp.ge.f32.partialorder %v935, 0.0
  %vm1000 = vcmp.ge.f32.partialorder %v936, 0.0
  %vm1001 = vcmp.ge.f32.partialorder %v937, 0.0
  %vm1002 = vcmp.ge.f32.partialorder %v938, 0.0
  %vm1003 = vcmp.ge.f32.partialorder %v939, 0.0
  %v1004 = vsel %vm940, 1.0, -1.0
  %v1005 = vsel %vm941, 1.0, -1.0
  %v1006 = vsel %vm942, 1.0, -1.0
  %v1007 = vsel %vm943, 1.0, -1.0
  %v1008 = vsel %vm944, 1.0, -1.0
  %v1009 = vsel %vm945, 1.0, -1.0
  %v1010 = vsel %vm946, 1.0, -1.0
  %v1011 = vsel %vm947, 1.0, -1.0
  %v1012 = vsel %vm948, 1.0, -1.0
  %v1013 = vsel %vm949, 1.0, -1.0
  %v1014 = vsel %vm950, 1.0, -1.0
  %v1015 = vsel %vm951, 1.0, -1.0
  %v1016 = vsel %vm952, 1.0, -1.0
  %v1017 = vsel %vm953, 1.0, -1.0
  %v1018 = vsel %vm954, 1.0, -1.0
  %v1019 = vsel %vm955, 1.0, -1.0
  %v1020 = vsel %vm956, 1.0, -1.0
  %v1021 = vsel %vm957, 1.0, -1.0
  %v1022 = vsel %vm958, 1.0, -1.0
  %v1023 = vsel %vm959, 1.0, -1.0
  %v1024 = vsel %vm960, 1.0, -1.0
  %v1025 = vsel %vm961, 1.0, -1.0
  %v1026 = vsel %vm962, 1.0, -1.0
  %v1027 = vsel %vm963, 1.0, -1.0
  %v1028 = vsel %vm964, 1.0, -1.0
  %v1029 = vsel %vm965, 1.0, -1.0
  %v1030 = vsel %vm966, 1.0, -1.0
  %v1031 = vsel %vm967, 1.0, -1.0
  %v1032 = vsel %vm968, 1.0, -1.0
  %v1033 = vsel %vm969, 1.0, -1.0
  %v1034 = vsel %vm970, 1.0, -1.0
  %v1035 = vsel %vm971, 1.0, -1.0
  %v1036 = vsel %vm972, 1.0, -1.0
  %v1037 = vsel %vm973, 1.0, -1.0
  %v1038 = vsel %vm974, 1.0, -1.0
  %v1039 = vsel %vm975, 1.0, -1.0
  %v1040 = vsel %vm976, 1.0, -1.0
  %v1041 = vsel %vm977, 1.0, -1.0
  %v1042 = vsel %vm978, 1.0, -1.0
  %v1043 = vsel %vm979, 1.0, -1.0
  %v1044 = vsel %vm980, 1.0, -1.0
  %v1045 = vsel %vm981, 1.0, -1.0
  %v1046 = vsel %vm982, 1.0, -1.0
  %v1047 = vsel %vm983, 1.0, -1.0
  %v1048 = vsel %vm984, 1.0, -1.0
  %v1049 = vsel %vm985, 1.0, -1.0
  %v1050 = vsel %vm986, 1.0, -1.0
  %v1051 = vsel %vm987, 1.0, -1.0
  %v1052 = vsel %vm988, 1.0, -1.0
  %v1053 = vsel %vm989, 1.0, -1.0
  %v1054 = vsel %vm990, 1.0, -1.0
  %v1055 = vsel %vm991, 1.0, -1.0
  %v1056 = vsel %vm992, 1.0, -1.0
  %v1057 = vsel %vm993, 1.0, -1.0
  %v1058 = vsel %vm994, 1.0, -1.0
  %v1059 = vsel %vm995, 1.0, -1.0
  %v1060 = vsel %vm996, 1.0, -1.0
  %v1061 = vsel %vm997, 1.0, -1.0
  %v1062 = vsel %vm998, 1.0, -1.0
  %v1063 = vsel %vm999, 1.0, -1.0
  %v1064 = vsel %vm1000, 1.0, -1.0
  %v1065 = vsel %vm1001, 1.0, -1.0
  %v1066 = vsel %vm1002, 1.0, -1.0
  %v1067 = vsel %vm1003, 1.0, -1.0
  %v1068 = vand.u32 2147483647, %v876
  %v1069 = vand.u32 2147483647, %v877
  %v1070 = vand.u32 2147483647, %v878
  %v1071 = vand.u32 2147483647, %v879
  %v1072 = vand.u32 2147483647, %v880
  %v1073 = vand.u32 2147483647, %v881
  %v1074 = vand.u32 2147483647, %v882
  %v1075 = vand.u32 2147483647, %v883
  %v1076 = vand.u32 2147483647, %v884
  %v1077 = vand.u32 2147483647, %v885
  %v1078 = vand.u32 2147483647, %v886
  %v1079 = vand.u32 2147483647, %v887
  %v1080 = vand.u32 2147483647, %v888
  %v1081 = vand.u32 2147483647, %v889
  %v1082 = vand.u32 2147483647, %v890
  %v1083 = vand.u32 2147483647, %v891
  %v1084 = vand.u32 2147483647, %v892
  %v1085 = vand.u32 2147483647, %v893
  %v1086 = vand.u32 2147483647, %v894
  %v1087 = vand.u32 2147483647, %v895
  %v1088 = vand.u32 2147483647, %v896
  %v1089 = vand.u32 2147483647, %v897
  %v1090 = vand.u32 2147483647, %v898
  %v1091 = vand.u32 2147483647, %v899
  %v1092 = vand.u32 2147483647, %v900
  %v1093 = vand.u32 2147483647, %v901
  %v1094 = vand.u32 2147483647, %v902
  %v1095 = vand.u32 2147483647, %v903
  %v1096 = vand.u32 2147483647, %v904
  %v1097 = vand.u32 2147483647, %v905
  %v1098 = vand.u32 2147483647, %v906
  %v1099 = vand.u32 2147483647, %v907
  %v1100 = vand.u32 2147483647, %v908
  %v1101 = vand.u32 2147483647, %v909
  %v1102 = vand.u32 2147483647, %v910
  %v1103 = vand.u32 2147483647, %v911
  %v1104 = vand.u32 2147483647, %v912
  %v1105 = vand.u32 2147483647, %v913
  %v1106 = vand.u32 2147483647, %v914
  %v1107 = vand.u32 2147483647, %v915
  %v1108 = vand.u32 2147483647, %v916
  %v1109 = vand.u32 2147483647, %v917
  %v1110 = vand.u32 2147483647, %v918
  %v1111 = vand.u32 2147483647, %v919
  %v1112 = vand.u32 2147483647, %v920
  %v1113 = vand.u32 2147483647, %v921
  %v1114 = vand.u32 2147483647, %v922
  %v1115 = vand.u32 2147483647, %v923
  %v1116 = vand.u32 2147483647, %v924
  %v1117 = vand.u32 2147483647, %v925
  %v1118 = vand.u32 2147483647, %v926
  %v1119 = vand.u32 2147483647, %v927
  %v1120 = vand.u32 2147483647, %v928
  %v1121 = vand.u32 2147483647, %v929
  %v1122 = vand.u32 2147483647, %v930
  %v1123 = vand.u32 2147483647, %v931
  %v1124 = vand.u32 2147483647, %v932
  %v1125 = vand.u32 2147483647, %v933
  %v1126 = vand.u32 2147483647, %v934
  %v1127 = vand.u32 2147483647, %v935
  %v1128 = vand.u32 2147483647, %v936
  %v1129 = vand.u32 2147483647, %v937
  %v1130 = vand.u32 2147483647, %v938
  %v1131 = vand.u32 2147483647, %v939
  %v1132 = vmul.f32 %v1068, 0.3275911
  %v1133 = vmul.f32 %v1069, 0.3275911
  %v1134 = vmul.f32 %v1070, 0.3275911
  %v1135 = vmul.f32 %v1071, 0.3275911
  %v1136 = vmul.f32 %v1072, 0.3275911
  %v1137 = vmul.f32 %v1073, 0.3275911
  %v1138 = vmul.f32 %v1074, 0.3275911
  %v1139 = vmul.f32 %v1075, 0.3275911
  %v1140 = vmul.f32 %v1076, 0.3275911
  %v1141 = vmul.f32 %v1077, 0.3275911
  %v1142 = vmul.f32 %v1078, 0.3275911
  %v1143 = vmul.f32 %v1079, 0.3275911
  %v1144 = vmul.f32 %v1080, 0.3275911
  %v1145 = vmul.f32 %v1081, 0.3275911
  %v1146 = vmul.f32 %v1082, 0.3275911
  %v1147 = vmul.f32 %v1083, 0.3275911
  %v1148 = vmul.f32 %v1084, 0.3275911
  %v1149 = vmul.f32 %v1085, 0.3275911
  %v1150 = vmul.f32 %v1086, 0.3275911
  %v1151 = vmul.f32 %v1087, 0.3275911
  %v1152 = vmul.f32 %v1088, 0.3275911
  %v1153 = vmul.f32 %v1089, 0.3275911
  %v1154 = vmul.f32 %v1090, 0.3275911
  %v1155 = vmul.f32 %v1091, 0.3275911
  %v1156 = vmul.f32 %v1092, 0.3275911
  %v1157 = vmul.f32 %v1093, 0.3275911
  %v1158 = vmul.f32 %v1094, 0.3275911
  %v1159 = vmul.f32 %v1095, 0.3275911
  %v1160 = vmul.f32 %v1096, 0.3275911
  %v1161 = vmul.f32 %v1097, 0.3275911
  %v1162 = vmul.f32 %v1098, 0.3275911
  %v1163 = vmul.f32 %v1099, 0.3275911
  %v1164 = vmul.f32 %v1100, 0.3275911
  %v1165 = vmul.f32 %v1101, 0.3275911
  %v1166 = vmul.f32 %v1102, 0.3275911
  %v1167 = vmul.f32 %v1103, 0.3275911
  %v1168 = vmul.f32 %v1104, 0.3275911
  %v1169 = vmul.f32 %v1105, 0.3275911
  %v1170 = vmul.f32 %v1106, 0.3275911
  %v1171 = vmul.f32 %v1107, 0.3275911
  %v1172 = vmul.f32 %v1108, 0.3275911
  %v1173 = vmul.f32 %v1109, 0.3275911
  %v1174 = vmul.f32 %v1110, 0.3275911
  %v1175 = vmul.f32 %v1111, 0.3275911
  %v1176 = vmul.f32 %v1112, 0.3275911
  %v1177 = vmul.f32 %v1113, 0.3275911
  %v1178 = vmul.f32 %v1114, 0.3275911
  %v1179 = vmul.f32 %v1115, 0.3275911
  %v1180 = vmul.f32 %v1116, 0.3275911
  %v1181 = vmul.f32 %v1117, 0.3275911
  %v1182 = vmul.f32 %v1118, 0.3275911
  %v1183 = vmul.f32 %v1119, 0.3275911
  %v1184 = vmul.f32 %v1120, 0.3275911
  %v1185 = vmul.f32 %v1121, 0.3275911
  %v1186 = vmul.f32 %v1122, 0.3275911
  %v1187 = vmul.f32 %v1123, 0.3275911
  %v1188 = vmul.f32 %v1124, 0.3275911
  %v1189 = vmul.f32 %v1125, 0.3275911
  %v1190 = vmul.f32 %v1126, 0.3275911
  %v1191 = vmul.f32 %v1127, 0.3275911
  %v1192 = vmul.f32 %v1128, 0.3275911
  %v1193 = vmul.f32 %v1129, 0.3275911
  %v1194 = vmul.f32 %v1130, 0.3275911
  %v1195 = vmul.f32 %v1131, 0.3275911
  %v1196 = vadd.f32 %v1132, 1.0
  %v1197 = vadd.f32 %v1133, 1.0
  %v1198 = vadd.f32 %v1134, 1.0
  %v1199 = vadd.f32 %v1135, 1.0
  %v1200 = vadd.f32 %v1136, 1.0
  %v1201 = vadd.f32 %v1137, 1.0
  %v1202 = vadd.f32 %v1138, 1.0
  %v1203 = vadd.f32 %v1139, 1.0
  %v1204 = vadd.f32 %v1140, 1.0
  %v1205 = vadd.f32 %v1141, 1.0
  %v1206 = vadd.f32 %v1142, 1.0
  %v1207 = vadd.f32 %v1143, 1.0
  %v1208 = vadd.f32 %v1144, 1.0
  %v1209 = vadd.f32 %v1145, 1.0
  %v1210 = vadd.f32 %v1146, 1.0
  %v1211 = vadd.f32 %v1147, 1.0
  %v1212 = vadd.f32 %v1148, 1.0
  %v1213 = vadd.f32 %v1149, 1.0
  %v1214 = vadd.f32 %v1150, 1.0
  %v1215 = vadd.f32 %v1151, 1.0
  %v1216 = vadd.f32 %v1152, 1.0
  %v1217 = vadd.f32 %v1153, 1.0
  %v1218 = vadd.f32 %v1154, 1.0
  %v1219 = vadd.f32 %v1155, 1.0
  %v1220 = vadd.f32 %v1156, 1.0
  %v1221 = vadd.f32 %v1157, 1.0
  %v1222 = vadd.f32 %v1158, 1.0
  %v1223 = vadd.f32 %v1159, 1.0
  %v1224 = vadd.f32 %v1160, 1.0
  %v1225 = vadd.f32 %v1161, 1.0
  %v1226 = vadd.f32 %v1162, 1.0
  %v1227 = vadd.f32 %v1163, 1.0
  %v1228 = vadd.f32 %v1164, 1.0
  %v1229 = vadd.f32 %v1165, 1.0
  %v1230 = vadd.f32 %v1166, 1.0
  %v1231 = vadd.f32 %v1167, 1.0
  %v1232 = vadd.f32 %v1168, 1.0
  %v1233 = vadd.f32 %v1169, 1.0
  %v1234 = vadd.f32 %v1170, 1.0
  %v1235 = vadd.f32 %v1171, 1.0
  %v1236 = vadd.f32 %v1172, 1.0
  %v1237 = vadd.f32 %v1173, 1.0
  %v1238 = vadd.f32 %v1174, 1.0
  %v1239 = vadd.f32 %v1175, 1.0
  %v1240 = vadd.f32 %v1176, 1.0
  %v1241 = vadd.f32 %v1177, 1.0
  %v1242 = vadd.f32 %v1178, 1.0
  %v1243 = vadd.f32 %v1179, 1.0
  %v1244 = vadd.f32 %v1180, 1.0
  %v1245 = vadd.f32 %v1181, 1.0
  %v1246 = vadd.f32 %v1182, 1.0
  %v1247 = vadd.f32 %v1183, 1.0
  %v1248 = vadd.f32 %v1184, 1.0
  %v1249 = vadd.f32 %v1185, 1.0
  %v1250 = vadd.f32 %v1186, 1.0
  %v1251 = vadd.f32 %v1187, 1.0
  %v1252 = vadd.f32 %v1188, 1.0
  %v1253 = vadd.f32 %v1189, 1.0
  %v1254 = vadd.f32 %v1190, 1.0
  %v1255 = vadd.f32 %v1191, 1.0
  %v1256 = vadd.f32 %v1192, 1.0
  %v1257 = vadd.f32 %v1193, 1.0
  %v1258 = vadd.f32 %v1194, 1.0
  %v1259 = vadd.f32 %v1195, 1.0
  %v1260 = vrcp.pop %v1196
  %v1261 = vmul.f32 1.0, %v1260
  %v1262 = vrcp.pop %v1197
  %v1263 = vmul.f32 1.0, %v1262
  %v1264 = vrcp.pop %v1198
  %v1265 = vmul.f32 1.0, %v1264
  %v1266 = vrcp.pop %v1199
  %v1267 = vmul.f32 1.0, %v1266
  %v1268 = vrcp.pop %v1200
  %v1269 = vmul.f32 1.0, %v1268
  %v1270 = vrcp.pop %v1201
  %v1271 = vmul.f32 1.0, %v1270
  %v1272 = vrcp.pop %v1202
  %v1273 = vmul.f32 1.0, %v1272
  %v1274 = vrcp.pop %v1203
  %v1275 = vmul.f32 1.0, %v1274
  %v1276 = vrcp.pop %v1204
  %v1277 = vmul.f32 1.0, %v1276
  %v1278 = vrcp.pop %v1205
  %v1279 = vmul.f32 1.0, %v1278
  %v1280 = vrcp.pop %v1206
  %v1281 = vmul.f32 1.0, %v1280
  %v1282 = vrcp.pop %v1207
  %v1283 = vmul.f32 1.0, %v1282
  %v1284 = vrcp.pop %v1208
  %v1285 = vmul.f32 1.0, %v1284
  %v1286 = vrcp.pop %v1209
  %v1287 = vmul.f32 1.0, %v1286
  %v1288 = vrcp.pop %v1210
  %v1289 = vmul.f32 1.0, %v1288
  %v1290 = vrcp.pop %v1211
  %v1291 = vmul.f32 1.0, %v1290
  %v1292 = vrcp.pop %v1212
  %v1293 = vmul.f32 1.0, %v1292
  %v1294 = vrcp.pop %v1213
  %v1295 = vmul.f32 1.0, %v1294
  %v1296 = vrcp.pop %v1214
  %v1297 = vmul.f32 1.0, %v1296
  %v1298 = vrcp.pop %v1215
  %v1299 = vmul.f32 1.0, %v1298
  %v1300 = vrcp.pop %v1216
  %v1301 = vmul.f32 1.0, %v1300
  %v1302 = vrcp.pop %v1217
  %v1303 = vmul.f32 1.0, %v1302
  %v1304 = vrcp.pop %v1218
  %v1305 = vmul.f32 1.0, %v1304
  %v1306 = vrcp.pop %v1219
  %v1307 = vmul.f32 1.0, %v1306
  %v1308 = vrcp.pop %v1220
  %v1309 = vmul.f32 1.0, %v1308
  %v1310 = vrcp.pop %v1221
  %v1311 = vmul.f32 1.0, %v1310
  %v1312 = vrcp.pop %v1222
  %v1313 = vmul.f32 1.0, %v1312
  %v1314 = vrcp.pop %v1223
  %v1315 = vmul.f32 1.0, %v1314
  %v1316 = vrcp.pop %v1224
  %v1317 = vmul.f32 1.0, %v1316
  %v1318 = vrcp.pop %v1225
  %v1319 = vmul.f32 1.0, %v1318
  %v1320 = vrcp.pop %v1226
  %v1321 = vmul.f32 1.0, %v1320
  %v1322 = vrcp.pop %v1227
  %v1323 = vmul.f32 1.0, %v1322
  %v1324 = vrcp.pop %v1228
  %v1325 = vmul.f32 1.0, %v1324
  %v1326 = vrcp.pop %v1229
  %v1327 = vmul.f32 1.0, %v1326
  %v1328 = vrcp.pop %v1230
  %v1329 = vmul.f32 1.0, %v1328
  %v1330 = vrcp.pop %v1231
  %v1331 = vmul.f32 1.0, %v1330
  %v1332 = vrcp.pop %v1232
  %v1333 = vmul.f32 1.0, %v1332
  %v1334 = vrcp.pop %v1233
  %v1335 = vmul.f32 1.0, %v1334
  %v1336 = vrcp.pop %v1234
  %v1337 = vmul.f32 1.0, %v1336
  %v1338 = vrcp.pop %v1235
  %v1339 = vmul.f32 1.0, %v1338
  %v1340 = vrcp.pop %v1236
  %v1341 = vmul.f32 1.0, %v1340
  %v1342 = vrcp.pop %v1237
  %v1343 = vmul.f32 1.0, %v1342
  %v1344 = vrcp.pop %v1238
  %v1345 = vmul.f32 1.0, %v1344
  %v1346 = vrcp.pop %v1239
  %v1347 = vmul.f32 1.0, %v1346
  %v1348 = vrcp.pop %v1240
  %v1349 = vmul.f32 1.0, %v1348
  %v1350 = vrcp.pop %v1241
  %v1351 = vmul.f32 1.0, %v1350
  %v1352 = vrcp.pop %v1242
  %v1353 = vmul.f32 1.0, %v1352
  %v1354 = vrcp.pop %v1243
  %v1355 = vmul.f32 1.0, %v1354
  %v1356 = vrcp.pop %v1244
  %v1357 = vmul.f32 1.0, %v1356
  %v1358 = vrcp.pop %v1245
  %v1359 = vmul.f32 1.0, %v1358
  %v1360 = vrcp.pop %v1246
  %v1361 = vmul.f32 1.0, %v1360
  %v1362 = vrcp.pop %v1247
  %v1363 = vmul.f32 1.0, %v1362
  %v1364 = vrcp.pop %v1248
  %v1365 = vmul.f32 1.0, %v1364
  %v1366 = vrcp.pop %v1249
  %v1367 = vmul.f32 1.0, %v1366
  %v1368 = vrcp.pop %v1250
  %v1369 = vmul.f32 1.0, %v1368
  %v1370 = vrcp.pop %v1251
  %v1371 = vmul.f32 1.0, %v1370
  %v1372 = vrcp.pop %v1252
  %v1373 = vmul.f32 1.0, %v1372
  %v1374 = vrcp.pop %v1253
  %v1375 = vmul.f32 1.0, %v1374
  %v1376 = vrcp.pop %v1254
  %v1377 = vmul.f32 1.0, %v1376
  %v1378 = vrcp.pop %v1255
  %v1379 = vmul.f32 1.0, %v1378
  %v1380 = vrcp.pop %v1256
  %v1381 = vmul.f32 1.0, %v1380
  %v1382 = vrcp.pop %v1257
  %v1383 = vmul.f32 1.0, %v1382
  %v1384 = vrcp.pop %v1258
  %v1385 = vmul.f32 1.0, %v1384
  %v1386 = vrcp.pop %v1259
  %v1387 = vmul.f32 1.0, %v1386
  %v1388 = vmul.f32 %v1261, 1.0614054
  %v1389 = vmul.f32 %v1263, 1.0614054
  %v1390 = vmul.f32 %v1265, 1.0614054
  %v1391 = vmul.f32 %v1267, 1.0614054
  %v1392 = vmul.f32 %v1269, 1.0614054
  %v1393 = vmul.f32 %v1271, 1.0614054
  %v1394 = vmul.f32 %v1273, 1.0614054
  %v1395 = vmul.f32 %v1275, 1.0614054
  %v1396 = vmul.f32 %v1277, 1.0614054
  %v1397 = vmul.f32 %v1279, 1.0614054
  %v1398 = vmul.f32 %v1281, 1.0614054
  %v1399 = vmul.f32 %v1283, 1.0614054
  %v1400 = vmul.f32 %v1285, 1.0614054
  %v1401 = vmul.f32 %v1287, 1.0614054
  %v1402 = vmul.f32 %v1289, 1.0614054
  %v1403 = vmul.f32 %v1291, 1.0614054
  %v1404 = vmul.f32 %v1293, 1.0614054
  %v1405 = vmul.f32 %v1295, 1.0614054
  %v1406 = vmul.f32 %v1297, 1.0614054
  %v1407 = vmul.f32 %v1299, 1.0614054
  %v1408 = vmul.f32 %v1301, 1.0614054
  %v1409 = vmul.f32 %v1303, 1.0614054
  %v1410 = vmul.f32 %v1305, 1.0614054
  %v1411 = vmul.f32 %v1307, 1.0614054
  %v1412 = vmul.f32 %v1309, 1.0614054
  %v1413 = vmul.f32 %v1311, 1.0614054
  %v1414 = vmul.f32 %v1313, 1.0614054
  %v1415 = vmul.f32 %v1315, 1.0614054
  %v1416 = vmul.f32 %v1317, 1.0614054
  %v1417 = vmul.f32 %v1319, 1.0614054
  %v1418 = vmul.f32 %v1321, 1.0614054
  %v1419 = vmul.f32 %v1323, 1.0614054
  %v1420 = vmul.f32 %v1325, 1.0614054
  %v1421 = vmul.f32 %v1327, 1.0614054
  %v1422 = vmul.f32 %v1329, 1.0614054
  %v1423 = vmul.f32 %v1331, 1.0614054
  %v1424 = vmul.f32 %v1333, 1.0614054
  %v1425 = vmul.f32 %v1335, 1.0614054
  %v1426 = vmul.f32 %v1337, 1.0614054
  %v1427 = vmul.f32 %v1339, 1.0614054
  %v1428 = vmul.f32 %v1341, 1.0614054
  %v1429 = vmul.f32 %v1343, 1.0614054
  %v1430 = vmul.f32 %v1345, 1.0614054
  %v1431 = vmul.f32 %v1347, 1.0614054
  %v1432 = vmul.f32 %v1349, 1.0614054
  %v1433 = vmul.f32 %v1351, 1.0614054
  %v1434 = vmul.f32 %v1353, 1.0614054
  %v1435 = vmul.f32 %v1355, 1.0614054
  %v1436 = vmul.f32 %v1357, 1.0614054
  %v1437 = vmul.f32 %v1359, 1.0614054
  %v1438 = vmul.f32 %v1361, 1.0614054
  %v1439 = vmul.f32 %v1363, 1.0614054
  %v1440 = vmul.f32 %v1365, 1.0614054
  %v1441 = vmul.f32 %v1367, 1.0614054
  %v1442 = vmul.f32 %v1369, 1.0614054
  %v1443 = vmul.f32 %v1371, 1.0614054
  %v1444 = vmul.f32 %v1373, 1.0614054
  %v1445 = vmul.f32 %v1375, 1.0614054
  %v1446 = vmul.f32 %v1377, 1.0614054
  %v1447 = vmul.f32 %v1379, 1.0614054
  %v1448 = vmul.f32 %v1381, 1.0614054
  %v1449 = vmul.f32 %v1383, 1.0614054
  %v1450 = vmul.f32 %v1385, 1.0614054
  %v1451 = vmul.f32 %v1387, 1.0614054
  %v1452 = vadd.f32 %v1388, -1.4531521
  %v1453 = vadd.f32 %v1389, -1.4531521
  %v1454 = vadd.f32 %v1390, -1.4531521
  %v1455 = vadd.f32 %v1391, -1.4531521
  %v1456 = vadd.f32 %v1392, -1.4531521
  %v1457 = vadd.f32 %v1393, -1.4531521
  %v1458 = vadd.f32 %v1394, -1.4531521
  %v1459 = vadd.f32 %v1395, -1.4531521
  %v1460 = vadd.f32 %v1396, -1.4531521
  %v1461 = vadd.f32 %v1397, -1.4531521
  %v1462 = vadd.f32 %v1398, -1.4531521
  %v1463 = vadd.f32 %v1399, -1.4531521
  %v1464 = vadd.f32 %v1400, -1.4531521
  %v1465 = vadd.f32 %v1401, -1.4531521
  %v1466 = vadd.f32 %v1402, -1.4531521
  %v1467 = vadd.f32 %v1403, -1.4531521
  %v1468 = vadd.f32 %v1404, -1.4531521
  %v1469 = vadd.f32 %v1405, -1.4531521
  %v1470 = vadd.f32 %v1406, -1.4531521
  %v1471 = vadd.f32 %v1407, -1.4531521
  %v1472 = vadd.f32 %v1408, -1.4531521
  %v1473 = vadd.f32 %v1409, -1.4531521
  %v1474 = vadd.f32 %v1410, -1.4531521
  %v1475 = vadd.f32 %v1411, -1.4531521
  %v1476 = vadd.f32 %v1412, -1.4531521
  %v1477 = vadd.f32 %v1413, -1.4531521
  %v1478 = vadd.f32 %v1414, -1.4531521
  %v1479 = vadd.f32 %v1415, -1.4531521
  %v1480 = vadd.f32 %v1416, -1.4531521
  %v1481 = vadd.f32 %v1417, -1.4531521
  %v1482 = vadd.f32 %v1418, -1.4531521
  %v1483 = vadd.f32 %v1419, -1.4531521
  %v1484 = vadd.f32 %v1420, -1.4531521
  %v1485 = vadd.f32 %v1421, -1.4531521
  %v1486 = vadd.f32 %v1422, -1.4531521
  %v1487 = vadd.f32 %v1423, -1.4531521
  %v1488 = vadd.f32 %v1424, -1.4531521
  %v1489 = vadd.f32 %v1425, -1.4531521
  %v1490 = vadd.f32 %v1426, -1.4531521
  %v1491 = vadd.f32 %v1427, -1.4531521
  %v1492 = vadd.f32 %v1428, -1.4531521
  %v1493 = vadd.f32 %v1429, -1.4531521
  %v1494 = vadd.f32 %v1430, -1.4531521
  %v1495 = vadd.f32 %v1431, -1.4531521
  %v1496 = vadd.f32 %v1432, -1.4531521
  %v1497 = vadd.f32 %v1433, -1.4531521
  %v1498 = vadd.f32 %v1434, -1.4531521
  %v1499 = vadd.f32 %v1435, -1.4531521
  %v1500 = vadd.f32 %v1436, -1.4531521
  %v1501 = vadd.f32 %v1437, -1.4531521
  %v1502 = vadd.f32 %v1438, -1.4531521
  %v1503 = vadd.f32 %v1439, -1.4531521
  %v1504 = vadd.f32 %v1440, -1.4531521
  %v1505 = vadd.f32 %v1441, -1.4531521
  %v1506 = vadd.f32 %v1442, -1.4531521
  %v1507 = vadd.f32 %v1443, -1.4531521
  %v1508 = vadd.f32 %v1444, -1.4531521
  %v1509 = vadd.f32 %v1445, -1.4531521
  %v1510 = vadd.f32 %v1446, -1.4531521
  %v1511 = vadd.f32 %v1447, -1.4531521
  %v1512 = vadd.f32 %v1448, -1.4531521
  %v1513 = vadd.f32 %v1449, -1.4531521
  %v1514 = vadd.f32 %v1450, -1.4531521
  %v1515 = vadd.f32 %v1451, -1.4531521
  %v1516 = vmul.f32 %v1452, %v1261
  %v1517 = vmul.f32 %v1453, %v1263
  %v1518 = vmul.f32 %v1454, %v1265
  %v1519 = vmul.f32 %v1455, %v1267
  %v1520 = vmul.f32 %v1456, %v1269
  %v1521 = vmul.f32 %v1457, %v1271
  %v1522 = vmul.f32 %v1458, %v1273
  %v1523 = vmul.f32 %v1459, %v1275
  %v1524 = vmul.f32 %v1460, %v1277
  %v1525 = vmul.f32 %v1461, %v1279
  %v1526 = vmul.f32 %v1462, %v1281
  %v1527 = vmul.f32 %v1463, %v1283
  %v1528 = vmul.f32 %v1464, %v1285
  %v1529 = vmul.f32 %v1465, %v1287
  %v1530 = vmul.f32 %v1466, %v1289
  %v1531 = vmul.f32 %v1467, %v1291
  %v1532 = vmul.f32 %v1468, %v1293
  %v1533 = vmul.f32 %v1469, %v1295
  %v1534 = vmul.f32 %v1470, %v1297
  %v1535 = vmul.f32 %v1471, %v1299
  %v1536 = vmul.f32 %v1472, %v1301
  %v1537 = vmul.f32 %v1473, %v1303
  %v1538 = vmul.f32 %v1474, %v1305
  %v1539 = vmul.f32 %v1475, %v1307
  %v1540 = vmul.f32 %v1476, %v1309
  %v1541 = vmul.f32 %v1477, %v1311
  %v1542 = vmul.f32 %v1478, %v1313
  %v1543 = vmul.f32 %v1479, %v1315
  %v1544 = vmul.f32 %v1480, %v1317
  %v1545 = vmul.f32 %v1481, %v1319
  %v1546 = vmul.f32 %v1482, %v1321
  %v1547 = vmul.f32 %v1483, %v1323
  %v1548 = vmul.f32 %v1484, %v1325
  %v1549 = vmul.f32 %v1485, %v1327
  %v1550 = vmul.f32 %v1486, %v1329
  %v1551 = vmul.f32 %v1487, %v1331
  %v1552 = vmul.f32 %v1488, %v1333
  %v1553 = vmul.f32 %v1489, %v1335
  %v1554 = vmul.f32 %v1490, %v1337
  %v1555 = vmul.f32 %v1491, %v1339
  %v1556 = vmul.f32 %v1492, %v1341
  %v1557 = vmul.f32 %v1493, %v1343
  %v1558 = vmul.f32 %v1494, %v1345
  %v1559 = vmul.f32 %v1495, %v1347
  %v1560 = vmul.f32 %v1496, %v1349
  %v1561 = vmul.f32 %v1497, %v1351
  %v1562 = vmul.f32 %v1498, %v1353
  %v1563 = vmul.f32 %v1499, %v1355
  %v1564 = vmul.f32 %v1500, %v1357
  %v1565 = vmul.f32 %v1501, %v1359
  %v1566 = vmul.f32 %v1502, %v1361
  %v1567 = vmul.f32 %v1503, %v1363
  %v1568 = vmul.f32 %v1504, %v1365
  %v1569 = vmul.f32 %v1505, %v1367
  %v1570 = vmul.f32 %v1506, %v1369
  %v1571 = vmul.f32 %v1507, %v1371
  %v1572 = vmul.f32 %v1508, %v1373
  %v1573 = vmul.f32 %v1509, %v1375
  %v1574 = vmul.f32 %v1510, %v1377
  %v1575 = vmul.f32 %v1511, %v1379
  %v1576 = vmul.f32 %v1512, %v1381
  %v1577 = vmul.f32 %v1513, %v1383
  %v1578 = vmul.f32 %v1514, %v1385
  %v1579 = vmul.f32 %v1515, %v1387
  %v1580 = vadd.f32 %v1516, 1.4214138
  %v1581 = vadd.f32 %v1517, 1.4214138
  %v1582 = vadd.f32 %v1518, 1.4214138
  %v1583 = vadd.f32 %v1519, 1.4214138
  %v1584 = vadd.f32 %v1520, 1.4214138
  %v1585 = vadd.f32 %v1521, 1.4214138
  %v1586 = vadd.f32 %v1522, 1.4214138
  %v1587 = vadd.f32 %v1523, 1.4214138
  %v1588 = vadd.f32 %v1524, 1.4214138
  %v1589 = vadd.f32 %v1525, 1.4214138
  %v1590 = vadd.f32 %v1526, 1.4214138
  %v1591 = vadd.f32 %v1527, 1.4214138
  %v1592 = vadd.f32 %v1528, 1.4214138
  %v1593 = vadd.f32 %v1529, 1.4214138
  %v1594 = vadd.f32 %v1530, 1.4214138
  %v1595 = vadd.f32 %v1531, 1.4214138
  %v1596 = vadd.f32 %v1532, 1.4214138
  %v1597 = vadd.f32 %v1533, 1.4214138
  %v1598 = vadd.f32 %v1534, 1.4214138
  %v1599 = vadd.f32 %v1535, 1.4214138
  %v1600 = vadd.f32 %v1536, 1.4214138
  %v1601 = vadd.f32 %v1537, 1.4214138
  %v1602 = vadd.f32 %v1538, 1.4214138
  %v1603 = vadd.f32 %v1539, 1.4214138
  %v1604 = vadd.f32 %v1540, 1.4214138
  %v1605 = vadd.f32 %v1541, 1.4214138
  %v1606 = vadd.f32 %v1542, 1.4214138
  %v1607 = vadd.f32 %v1543, 1.4214138
  %v1608 = vadd.f32 %v1544, 1.4214138
  %v1609 = vadd.f32 %v1545, 1.4214138
  %v1610 = vadd.f32 %v1546, 1.4214138
  %v1611 = vadd.f32 %v1547, 1.4214138
  %v1612 = vadd.f32 %v1548, 1.4214138
  %v1613 = vadd.f32 %v1549, 1.4214138
  %v1614 = vadd.f32 %v1550, 1.4214138
  %v1615 = vadd.f32 %v1551, 1.4214138
  %v1616 = vadd.f32 %v1552, 1.4214138
  %v1617 = vadd.f32 %v1553, 1.4214138
  %v1618 = vadd.f32 %v1554, 1.4214138
  %v1619 = vadd.f32 %v1555, 1.4214138
  %v1620 = vadd.f32 %v1556, 1.4214138
  %v1621 = vadd.f32 %v1557, 1.4214138
  %v1622 = vadd.f32 %v1558, 1.4214138
  %v1623 = vadd.f32 %v1559, 1.4214138
  %v1624 = vadd.f32 %v1560, 1.4214138
  %v1625 = vadd.f32 %v1561, 1.4214138
  %v1626 = vadd.f32 %v1562, 1.4214138
  %v1627 = vadd.f32 %v1563, 1.4214138
  %v1628 = vadd.f32 %v1564, 1.4214138
  %v1629 = vadd.f32 %v1565, 1.4214138
  %v1630 = vadd.f32 %v1566, 1.4214138
  %v1631 = vadd.f32 %v1567, 1.4214138
  %v1632 = vadd.f32 %v1568, 1.4214138
  %v1633 = vadd.f32 %v1569, 1.4214138
  %v1634 = vadd.f32 %v1570, 1.4214138
  %v1635 = vadd.f32 %v1571, 1.4214138
  %v1636 = vadd.f32 %v1572, 1.4214138
  %v1637 = vadd.f32 %v1573, 1.4214138
  %v1638 = vadd.f32 %v1574, 1.4214138
  %v1639 = vadd.f32 %v1575, 1.4214138
  %v1640 = vadd.f32 %v1576, 1.4214138
  %v1641 = vadd.f32 %v1577, 1.4214138
  %v1642 = vadd.f32 %v1578, 1.4214138
  %v1643 = vadd.f32 %v1579, 1.4214138
  %v1644 = vmul.f32 %v1580, %v1261
  %v1645 = vmul.f32 %v1581, %v1263
  %v1646 = vmul.f32 %v1582, %v1265
  %v1647 = vmul.f32 %v1583, %v1267
  %v1648 = vmul.f32 %v1584, %v1269
  %v1649 = vmul.f32 %v1585, %v1271
  %v1650 = vmul.f32 %v1586, %v1273
  %v1651 = vmul.f32 %v1587, %v1275
  %v1652 = vmul.f32 %v1588, %v1277
  %v1653 = vmul.f32 %v1589, %v1279
  %v1654 = vmul.f32 %v1590, %v1281
  %v1655 = vmul.f32 %v1591, %v1283
  %v1656 = vmul.f32 %v1592, %v1285
  %v1657 = vmul.f32 %v1593, %v1287
  %v1658 = vmul.f32 %v1594, %v1289
  %v1659 = vmul.f32 %v1595, %v1291
  %v1660 = vmul.f32 %v1596, %v1293
  %v1661 = vmul.f32 %v1597, %v1295
  %v1662 = vmul.f32 %v1598, %v1297
  %v1663 = vmul.f32 %v1599, %v1299
  %v1664 = vmul.f32 %v1600, %v1301
  %v1665 = vmul.f32 %v1601, %v1303
  %v1666 = vmul.f32 %v1602, %v1305
  %v1667 = vmul.f32 %v1603, %v1307
  %v1668 = vmul.f32 %v1604, %v1309
  %v1669 = vmul.f32 %v1605, %v1311
  %v1670 = vmul.f32 %v1606, %v1313
  %v1671 = vmul.f32 %v1607, %v1315
  %v1672 = vmul.f32 %v1608, %v1317
  %v1673 = vmul.f32 %v1609, %v1319
  %v1674 = vmul.f32 %v1610, %v1321
  %v1675 = vmul.f32 %v1611, %v1323
  %v1676 = vmul.f32 %v1612, %v1325
  %v1677 = vmul.f32 %v1613, %v1327
  %v1678 = vmul.f32 %v1614, %v1329
  %v1679 = vmul.f32 %v1615, %v1331
  %v1680 = vmul.f32 %v1616, %v1333
  %v1681 = vmul.f32 %v1617, %v1335
  %v1682 = vmul.f32 %v1618, %v1337
  %v1683 = vmul.f32 %v1619, %v1339
  %v1684 = vmul.f32 %v1620, %v1341
  %v1685 = vmul.f32 %v1621, %v1343
  %v1686 = vmul.f32 %v1622, %v1345
  %v1687 = vmul.f32 %v1623, %v1347
  %v1688 = vmul.f32 %v1624, %v1349
  %v1689 = vmul.f32 %v1625, %v1351
  %v1690 = vmul.f32 %v1626, %v1353
  %v1691 = vmul.f32 %v1627, %v1355
  %v1692 = vmul.f32 %v1628, %v1357
  %v1693 = vmul.f32 %v1629, %v1359
  %v1694 = vmul.f32 %v1630, %v1361
  %v1695 = vmul.f32 %v1631, %v1363
  %v1696 = vmul.f32 %v1632, %v1365
  %v1697 = vmul.f32 %v1633, %v1367
  %v1698 = vmul.f32 %v1634, %v1369
  %v1699 = vmul.f32 %v1635, %v1371
  %v1700 = vmul.f32 %v1636, %v1373
  %v1701 = vmul.f32 %v1637, %v1375
  %v1702 = vmul.f32 %v1638, %v1377
  %v1703 = vmul.f32 %v1639, %v1379
  %v1704 = vmul.f32 %v1640, %v1381
  %v1705 = vmul.f32 %v1641, %v1383
  %v1706 = vmul.f32 %v1642, %v1385
  %v1707 = vmul.f32 %v1643, %v1387
  %v1708 = vadd.f32 %v1644, -0.28449672
  %v1709 = vadd.f32 %v1645, -0.28449672
  %v1710 = vadd.f32 %v1646, -0.28449672
  %v1711 = vadd.f32 %v1647, -0.28449672
  %v1712 = vadd.f32 %v1648, -0.28449672
  %v1713 = vadd.f32 %v1649, -0.28449672
  %v1714 = vadd.f32 %v1650, -0.28449672
  %v1715 = vadd.f32 %v1651, -0.28449672
  %v1716 = vadd.f32 %v1652, -0.28449672
  %v1717 = vadd.f32 %v1653, -0.28449672
  %v1718 = vadd.f32 %v1654, -0.28449672
  %v1719 = vadd.f32 %v1655, -0.28449672
  %v1720 = vadd.f32 %v1656, -0.28449672
  %v1721 = vadd.f32 %v1657, -0.28449672
  %v1722 = vadd.f32 %v1658, -0.28449672
  %v1723 = vadd.f32 %v1659, -0.28449672
  %v1724 = vadd.f32 %v1660, -0.28449672
  %v1725 = vadd.f32 %v1661, -0.28449672
  %v1726 = vadd.f32 %v1662, -0.28449672
  %v1727 = vadd.f32 %v1663, -0.28449672
  %v1728 = vadd.f32 %v1664, -0.28449672
  %v1729 = vadd.f32 %v1665, -0.28449672
  %v1730 = vadd.f32 %v1666, -0.28449672
  %v1731 = vadd.f32 %v1667, -0.28449672
  %v1732 = vadd.f32 %v1668, -0.28449672
  %v1733 = vadd.f32 %v1669, -0.28449672
  %v1734 = vadd.f32 %v1670, -0.28449672
  %v1735 = vadd.f32 %v1671, -0.28449672
  %v1736 = vadd.f32 %v1672, -0.28449672
  %v1737 = vadd.f32 %v1673, -0.28449672
  %v1738 = vadd.f32 %v1674, -0.28449672
  %v1739 = vadd.f32 %v1675, -0.28449672
  %v1740 = vadd.f32 %v1676, -0.28449672
  %v1741 = vadd.f32 %v1677, -0.28449672
  %v1742 = vadd.f32 %v1678, -0.28449672
  %v1743 = vadd.f32 %v1679, -0.28449672
  %v1744 = vadd.f32 %v1680, -0.28449672
  %v1745 = vadd.f32 %v1681, -0.28449672
  %v1746 = vadd.f32 %v1682, -0.28449672
  %v1747 = vadd.f32 %v1683, -0.28449672
  %v1748 = vadd.f32 %v1684, -0.28449672
  %v1749 = vadd.f32 %v1685, -0.28449672
  %v1750 = vadd.f32 %v1686, -0.28449672
  %v1751 = vadd.f32 %v1687, -0.28449672
  %v1752 = vadd.f32 %v1688, -0.28449672
  %v1753 = vadd.f32 %v1689, -0.28449672
  %v1754 = vadd.f32 %v1690, -0.28449672
  %v1755 = vadd.f32 %v1691, -0.28449672
  %v1756 = vadd.f32 %v1692, -0.28449672
  %v1757 = vadd.f32 %v1693, -0.28449672
  %v1758 = vadd.f32 %v1694, -0.28449672
  %v1759 = vadd.f32 %v1695, -0.28449672
  %v1760 = vadd.f32 %v1696, -0.28449672
  %v1761 = vadd.f32 %v1697, -0.28449672
  %v1762 = vadd.f32 %v1698, -0.28449672
  %v1763 = vadd.f32 %v1699, -0.28449672
  %v1764 = vadd.f32 %v1700, -0.28449672
  %v1765 = vadd.f32 %v1701, -0.28449672
  %v1766 = vadd.f32 %v1702, -0.28449672
  %v1767 = vadd.f32 %v1703, -0.28449672
  %v1768 = vadd.f32 %v1704, -0.28449672
  %v1769 = vadd.f32 %v1705, -0.28449672
  %v1770 = vadd.f32 %v1706, -0.28449672
  %v1771 = vadd.f32 %v1707, -0.28449672
  %v1772 = vmul.f32 %v1708, %v1261
  %v1773 = vmul.f32 %v1709, %v1263
  %v1774 = vmul.f32 %v1710, %v1265
  %v1775 = vmul.f32 %v1711, %v1267
  %v1776 = vmul.f32 %v1712, %v1269
  %v1777 = vmul.f32 %v1713, %v1271
  %v1778 = vmul.f32 %v1714, %v1273
  %v1779 = vmul.f32 %v1715, %v1275
  %v1780 = vmul.f32 %v1716, %v1277
  %v1781 = vmul.f32 %v1717, %v1279
  %v1782 = vmul.f32 %v1718, %v1281
  %v1783 = vmul.f32 %v1719, %v1283
  %v1784 = vmul.f32 %v1720, %v1285
  %v1785 = vmul.f32 %v1721, %v1287
  %v1786 = vmul.f32 %v1722, %v1289
  %v1787 = vmul.f32 %v1723, %v1291
  %v1788 = vmul.f32 %v1724, %v1293
  %v1789 = vmul.f32 %v1725, %v1295
  %v1790 = vmul.f32 %v1726, %v1297
  %v1791 = vmul.f32 %v1727, %v1299
  %v1792 = vmul.f32 %v1728, %v1301
  %v1793 = vmul.f32 %v1729, %v1303
  %v1794 = vmul.f32 %v1730, %v1305
  %v1795 = vmul.f32 %v1731, %v1307
  %v1796 = vmul.f32 %v1732, %v1309
  %v1797 = vmul.f32 %v1733, %v1311
  %v1798 = vmul.f32 %v1734, %v1313
  %v1799 = vmul.f32 %v1735, %v1315
  %v1800 = vmul.f32 %v1736, %v1317
  %v1801 = vmul.f32 %v1737, %v1319
  %v1802 = vmul.f32 %v1738, %v1321
  %v1803 = vmul.f32 %v1739, %v1323
  %v1804 = vmul.f32 %v1740, %v1325
  %v1805 = vmul.f32 %v1741, %v1327
  %v1806 = vmul.f32 %v1742, %v1329
  %v1807 = vmul.f32 %v1743, %v1331
  %v1808 = vmul.f32 %v1744, %v1333
  %v1809 = vmul.f32 %v1745, %v1335
  %v1810 = vmul.f32 %v1746, %v1337
  %v1811 = vmul.f32 %v1747, %v1339
  %v1812 = vmul.f32 %v1748, %v1341
  %v1813 = vmul.f32 %v1749, %v1343
  %v1814 = vmul.f32 %v1750, %v1345
  %v1815 = vmul.f32 %v1751, %v1347
  %v1816 = vmul.f32 %v1752, %v1349
  %v1817 = vmul.f32 %v1753, %v1351
  %v1818 = vmul.f32 %v1754, %v1353
  %v1819 = vmul.f32 %v1755, %v1355
  %v1820 = vmul.f32 %v1756, %v1357
  %v1821 = vmul.f32 %v1757, %v1359
  %v1822 = vmul.f32 %v1758, %v1361
  %v1823 = vmul.f32 %v1759, %v1363
  %v1824 = vmul.f32 %v1760, %v1365
  %v1825 = vmul.f32 %v1761, %v1367
  %v1826 = vmul.f32 %v1762, %v1369
  %v1827 = vmul.f32 %v1763, %v1371
  %v1828 = vmul.f32 %v1764, %v1373
  %v1829 = vmul.f32 %v1765, %v1375
  %v1830 = vmul.f32 %v1766, %v1377
  %v1831 = vmul.f32 %v1767, %v1379
  %v1832 = vmul.f32 %v1768, %v1381
  %v1833 = vmul.f32 %v1769, %v1383
  %v1834 = vmul.f32 %v1770, %v1385
  %v1835 = vmul.f32 %v1771, %v1387
  %v1836 = vadd.f32 %v1772, 0.2548296
  %v1837 = vadd.f32 %v1773, 0.2548296
  %v1838 = vadd.f32 %v1774, 0.2548296
  %v1839 = vadd.f32 %v1775, 0.2548296
  %v1840 = vadd.f32 %v1776, 0.2548296
  %v1841 = vadd.f32 %v1777, 0.2548296
  %v1842 = vadd.f32 %v1778, 0.2548296
  %v1843 = vadd.f32 %v1779, 0.2548296
  %v1844 = vadd.f32 %v1780, 0.2548296
  %v1845 = vadd.f32 %v1781, 0.2548296
  %v1846 = vadd.f32 %v1782, 0.2548296
  %v1847 = vadd.f32 %v1783, 0.2548296
  %v1848 = vadd.f32 %v1784, 0.2548296
  %v1849 = vadd.f32 %v1785, 0.2548296
  %v1850 = vadd.f32 %v1786, 0.2548296
  %v1851 = vadd.f32 %v1787, 0.2548296
  %v1852 = vadd.f32 %v1788, 0.2548296
  %v1853 = vadd.f32 %v1789, 0.2548296
  %v1854 = vadd.f32 %v1790, 0.2548296
  %v1855 = vadd.f32 %v1791, 0.2548296
  %v1856 = vadd.f32 %v1792, 0.2548296
  %v1857 = vadd.f32 %v1793, 0.2548296
  %v1858 = vadd.f32 %v1794, 0.2548296
  %v1859 = vadd.f32 %v1795, 0.2548296
  %v1860 = vadd.f32 %v1796, 0.2548296
  %v1861 = vadd.f32 %v1797, 0.2548296
  %v1862 = vadd.f32 %v1798, 0.2548296
  %v1863 = vadd.f32 %v1799, 0.2548296
  %v1864 = vadd.f32 %v1800, 0.2548296
  %v1865 = vadd.f32 %v1801, 0.2548296
  %v1866 = vadd.f32 %v1802, 0.2548296
  %v1867 = vadd.f32 %v1803, 0.2548296
  %v1868 = vadd.f32 %v1804, 0.2548296
  %v1869 = vadd.f32 %v1805, 0.2548296
  %v1870 = vadd.f32 %v1806, 0.2548296
  %v1871 = vadd.f32 %v1807, 0.2548296
  %v1872 = vadd.f32 %v1808, 0.2548296
  %v1873 = vadd.f32 %v1809, 0.2548296
  %v1874 = vadd.f32 %v1810, 0.2548296
  %v1875 = vadd.f32 %v1811, 0.2548296
  %v1876 = vadd.f32 %v1812, 0.2548296
  %v1877 = vadd.f32 %v1813, 0.2548296
  %v1878 = vadd.f32 %v1814, 0.2548296
  %v1879 = vadd.f32 %v1815, 0.2548296
  %v1880 = vadd.f32 %v1816, 0.2548296
  %v1881 = vadd.f32 %v1817, 0.2548296
  %v1882 = vadd.f32 %v1818, 0.2548296
  %v1883 = vadd.f32 %v1819, 0.2548296
  %v1884 = vadd.f32 %v1820, 0.2548296
  %v1885 = vadd.f32 %v1821, 0.2548296
  %v1886 = vadd.f32 %v1822, 0.2548296
  %v1887 = vadd.f32 %v1823, 0.2548296
  %v1888 = vadd.f32 %v1824, 0.2548296
  %v1889 = vadd.f32 %v1825, 0.2548296
  %v1890 = vadd.f32 %v1826, 0.2548296
  %v1891 = vadd.f32 %v1827, 0.2548296
  %v1892 = vadd.f32 %v1828, 0.2548296
  %v1893 = vadd.f32 %v1829, 0.2548296
  %v1894 = vadd.f32 %v1830, 0.2548296
  %v1895 = vadd.f32 %v1831, 0.2548296
  %v1896 = vadd.f32 %v1832, 0.2548296
  %v1897 = vadd.f32 %v1833, 0.2548296
  %v1898 = vadd.f32 %v1834, 0.2548296
  %v1899 = vadd.f32 %v1835, 0.2548296
  %v1900 = vmul.f32 %v1836, %v1261
  %v1901 = vmul.f32 %v1837, %v1263
  %v1902 = vmul.f32 %v1838, %v1265
  %v1903 = vmul.f32 %v1839, %v1267
  %v1904 = vmul.f32 %v1840, %v1269
  %v1905 = vmul.f32 %v1841, %v1271
  %v1906 = vmul.f32 %v1842, %v1273
  %v1907 = vmul.f32 %v1843, %v1275
  %v1908 = vmul.f32 %v1844, %v1277
  %v1909 = vmul.f32 %v1845, %v1279
  %v1910 = vmul.f32 %v1846, %v1281
  %v1911 = vmul.f32 %v1847, %v1283
  %v1912 = vmul.f32 %v1848, %v1285
  %v1913 = vmul.f32 %v1849, %v1287
  %v1914 = vmul.f32 %v1850, %v1289
  %v1915 = vmul.f32 %v1851, %v1291
  %v1916 = vmul.f32 %v1852, %v1293
  %v1917 = vmul.f32 %v1853, %v1295
  %v1918 = vmul.f32 %v1854, %v1297
  %v1919 = vmul.f32 %v1855, %v1299
  %v1920 = vmul.f32 %v1856, %v1301
  %v1921 = vmul.f32 %v1857, %v1303
  %v1922 = vmul.f32 %v1858, %v1305
  %v1923 = vmul.f32 %v1859, %v1307
  %v1924 = vmul.f32 %v1860, %v1309
  %v1925 = vmul.f32 %v1861, %v1311
  %v1926 = vmul.f32 %v1862, %v1313
  %v1927 = vmul.f32 %v1863, %v1315
  %v1928 = vmul.f32 %v1864, %v1317
  %v1929 = vmul.f32 %v1865, %v1319
  %v1930 = vmul.f32 %v1866, %v1321
  %v1931 = vmul.f32 %v1867, %v1323
  %v1932 = vmul.f32 %v1868, %v1325
  %v1933 = vmul.f32 %v1869, %v1327
  %v1934 = vmul.f32 %v1870, %v1329
  %v1935 = vmul.f32 %v1871, %v1331
  %v1936 = vmul.f32 %v1872, %v1333
  %v1937 = vmul.f32 %v1873, %v1335
  %v1938 = vmul.f32 %v1874, %v1337
  %v1939 = vmul.f32 %v1875, %v1339
  %v1940 = vmul.f32 %v1876, %v1341
  %v1941 = vmul.f32 %v1877, %v1343
  %v1942 = vmul.f32 %v1878, %v1345
  %v1943 = vmul.f32 %v1879, %v1347
  %v1944 = vmul.f32 %v1880, %v1349
  %v1945 = vmul.f32 %v1881, %v1351
  %v1946 = vmul.f32 %v1882, %v1353
  %v1947 = vmul.f32 %v1883, %v1355
  %v1948 = vmul.f32 %v1884, %v1357
  %v1949 = vmul.f32 %v1885, %v1359
  %v1950 = vmul.f32 %v1886, %v1361
  %v1951 = vmul.f32 %v1887, %v1363
  %v1952 = vmul.f32 %v1888, %v1365
  %v1953 = vmul.f32 %v1889, %v1367
  %v1954 = vmul.f32 %v1890, %v1369
  %v1955 = vmul.f32 %v1891, %v1371
  %v1956 = vmul.f32 %v1892, %v1373
  %v1957 = vmul.f32 %v1893, %v1375
  %v1958 = vmul.f32 %v1894, %v1377
  %v1959 = vmul.f32 %v1895, %v1379
  %v1960 = vmul.f32 %v1896, %v1381
  %v1961 = vmul.f32 %v1897, %v1383
  %v1962 = vmul.f32 %v1898, %v1385
  %v1963 = vmul.f32 %v1899, %v1387
  %v1964 = vsub.f32 0.0, %v1068
  %v1965 = vsub.f32 0.0, %v1069
  %v1966 = vsub.f32 0.0, %v1070
  %v1967 = vsub.f32 0.0, %v1071
  %v1968 = vsub.f32 0.0, %v1072
  %v1969 = vsub.f32 0.0, %v1073
  %v1970 = vsub.f32 0.0, %v1074
  %v1971 = vsub.f32 0.0, %v1075
  %v1972 = vsub.f32 0.0, %v1076
  %v1973 = vsub.f32 0.0, %v1077
  %v1974 = vsub.f32 0.0, %v1078
  %v1975 = vsub.f32 0.0, %v1079
  %v1976 = vsub.f32 0.0, %v1080
  %v1977 = vsub.f32 0.0, %v1081
  %v1978 = vsub.f32 0.0, %v1082
  %v1979 = vsub.f32 0.0, %v1083
  %v1980 = vsub.f32 0.0, %v1084
  %v1981 = vsub.f32 0.0, %v1085
  %v1982 = vsub.f32 0.0, %v1086
  %v1983 = vsub.f32 0.0, %v1087
  %v1984 = vsub.f32 0.0, %v1088
  %v1985 = vsub.f32 0.0, %v1089
  %v1986 = vsub.f32 0.0, %v1090
  %v1987 = vsub.f32 0.0, %v1091
  %v1988 = vsub.f32 0.0, %v1092
  %v1989 = vsub.f32 0.0, %v1093
  %v1990 = vsub.f32 0.0, %v1094
  %v1991 = vsub.f32 0.0, %v1095
  %v1992 = vsub.f32 0.0, %v1096
  %v1993 = vsub.f32 0.0, %v1097
  %v1994 = vsub.f32 0.0, %v1098
  %v1995 = vsub.f32 0.0, %v1099
  %v1996 = vsub.f32 0.0, %v1100
  %v1997 = vsub.f32 0.0, %v1101
  %v1998 = vsub.f32 0.0, %v1102
  %v1999 = vsub.f32 0.0, %v1103
  %v2000 = vsub.f32 0.0, %v1104
  %v2001 = vsub.f32 0.0, %v1105
  %v2002 = vsub.f32 0.0, %v1106
  %v2003 = vsub.f32 0.0, %v1107
  %v2004 = vsub.f32 0.0, %v1108
  %v2005 = vsub.f32 0.0, %v1109
  %v2006 = vsub.f32 0.0, %v1110
  %v2007 = vsub.f32 0.0, %v1111
  %v2008 = vsub.f32 0.0, %v1112
  %v2009 = vsub.f32 0.0, %v1113
  %v2010 = vsub.f32 0.0, %v1114
  %v2011 = vsub.f32 0.0, %v1115
  %v2012 = vsub.f32 0.0, %v1116
  %v2013 = vsub.f32 0.0, %v1117
  %v2014 = vsub.f32 0.0, %v1118
  %v2015 = vsub.f32 0.0, %v1119
  %v2016 = vsub.f32 0.0, %v1120
  %v2017 = vsub.f32 0.0, %v1121
  %v2018 = vsub.f32 0.0, %v1122
  %v2019 = vsub.f32 0.0, %v1123
  %v2020 = vsub.f32 0.0, %v1124
  %v2021 = vsub.f32 0.0, %v1125
  %v2022 = vsub.f32 0.0, %v1126
  %v2023 = vsub.f32 0.0, %v1127
  %v2024 = vsub.f32 0.0, %v1128
  %v2025 = vsub.f32 0.0, %v1129
  %v2026 = vsub.f32 0.0, %v1130
  %v2027 = vsub.f32 0.0, %v1131
  %v2028 = vmul.f32 %v1964, %v1068
  %v2029 = vmul.f32 %v1965, %v1069
  %v2030 = vmul.f32 %v1966, %v1070
  %v2031 = vmul.f32 %v1967, %v1071
  %v2032 = vmul.f32 %v1968, %v1072
  %v2033 = vmul.f32 %v1969, %v1073
  %v2034 = vmul.f32 %v1970, %v1074
  %v2035 = vmul.f32 %v1971, %v1075
  %v2036 = vmul.f32 %v1972, %v1076
  %v2037 = vmul.f32 %v1973, %v1077
  %v2038 = vmul.f32 %v1974, %v1078
  %v2039 = vmul.f32 %v1975, %v1079
  %v2040 = vmul.f32 %v1976, %v1080
  %v2041 = vmul.f32 %v1977, %v1081
  %v2042 = vmul.f32 %v1978, %v1082
  %v2043 = vmul.f32 %v1979, %v1083
  %v2044 = vmul.f32 %v1980, %v1084
  %v2045 = vmul.f32 %v1981, %v1085
  %v2046 = vmul.f32 %v1982, %v1086
  %v2047 = vmul.f32 %v1983, %v1087
  %v2048 = vmul.f32 %v1984, %v1088
  %v2049 = vmul.f32 %v1985, %v1089
  %v2050 = vmul.f32 %v1986, %v1090
  %v2051 = vmul.f32 %v1987, %v1091
  %v2052 = vmul.f32 %v1988, %v1092
  %v2053 = vmul.f32 %v1989, %v1093
  %v2054 = vmul.f32 %v1990, %v1094
  %v2055 = vmul.f32 %v1991, %v1095
  %v2056 = vmul.f32 %v1992, %v1096
  %v2057 = vmul.f32 %v1993, %v1097
  %v2058 = vmul.f32 %v1994, %v1098
  %v2059 = vmul.f32 %v1995, %v1099
  %v2060 = vmul.f32 %v1996, %v1100
  %v2061 = vmul.f32 %v1997, %v1101
  %v2062 = vmul.f32 %v1998, %v1102
  %v2063 = vmul.f32 %v1999, %v1103
  %v2064 = vmul.f32 %v2000, %v1104
  %v2065 = vmul.f32 %v2001, %v1105
  %v2066 = vmul.f32 %v2002, %v1106
  %v2067 = vmul.f32 %v2003, %v1107
  %v2068 = vmul.f32 %v2004, %v1108
  %v2069 = vmul.f32 %v2005, %v1109
  %v2070 = vmul.f32 %v2006, %v1110
  %v2071 = vmul.f32 %v2007, %v1111
  %v2072 = vmul.f32 %v2008, %v1112
  %v2073 = vmul.f32 %v2009, %v1113
  %v2074 = vmul.f32 %v2010, %v1114
  %v2075 = vmul.f32 %v2011, %v1115
  %v2076 = vmul.f32 %v2012, %v1116
  %v2077 = vmul.f32 %v2013, %v1117
  %v2078 = vmul.f32 %v2014, %v1118
  %v2079 = vmul.f32 %v2015, %v1119
  %v2080 = vmul.f32 %v2016, %v1120
  %v2081 = vmul.f32 %v2017, %v1121
  %v2082 = vmul.f32 %v2018, %v1122
  %v2083 = vmul.f32 %v2019, %v1123
  %v2084 = vmul.f32 %v2020, %v1124
  %v2085 = vmul.f32 %v2021, %v1125
  %v2086 = vmul.f32 %v2022, %v1126
  %v2087 = vmul.f32 %v2023, %v1127
  %v2088 = vmul.f32 %v2024, %v1128
  %v2089 = vmul.f32 %v2025, %v1129
  %v2090 = vmul.f32 %v2026, %v1130
  %v2091 = vmul.f32 %v2027, %v1131
  %v2092 = vmul.f32 %v2028, 1.442695
  %v2093 = vpow.pop %v2092
  %v2094 = vmul.f32 %v2029, 1.442695
  %v2095 = vpow.pop %v2094
  %v2096 = vmul.f32 %v2030, 1.442695
  %v2097 = vpow.pop %v2096
  %v2098 = vmul.f32 %v2031, 1.442695
  %v2099 = vpow.pop %v2098
  %v2100 = vmul.f32 %v2032, 1.442695
  %v2101 = vpow.pop %v2100
  %v2102 = vmul.f32 %v2033, 1.442695
  %v2103 = vpow.pop %v2102
  %v2104 = vmul.f32 %v2034, 1.442695
  %v2105 = vpow.pop %v2104
  %v2106 = vmul.f32 %v2035, 1.442695
  %v2107 = vpow.pop %v2106
  %v2108 = vmul.f32 %v2036, 1.442695
  %v2109 = vpow.pop %v2108
  %v2110 = vmul.f32 %v2037, 1.442695
  %v2111 = vpow.pop %v2110
  %v2112 = vmul.f32 %v2038, 1.442695
  %v2113 = vpow.pop %v2112
  %v2114 = vmul.f32 %v2039, 1.442695
  %v2115 = vpow.pop %v2114
  %v2116 = vmul.f32 %v2040, 1.442695
  %v2117 = vpow.pop %v2116
  %v2118 = vmul.f32 %v2041, 1.442695
  %v2119 = vpow.pop %v2118
  %v2120 = vmul.f32 %v2042, 1.442695
  %v2121 = vpow.pop %v2120
  %v2122 = vmul.f32 %v2043, 1.442695
  %v2123 = vpow.pop %v2122
  %v2124 = vmul.f32 %v2044, 1.442695
  %v2125 = vpow.pop %v2124
  %v2126 = vmul.f32 %v2045, 1.442695
  %v2127 = vpow.pop %v2126
  %v2128 = vmul.f32 %v2046, 1.442695
  %v2129 = vpow.pop %v2128
  %v2130 = vmul.f32 %v2047, 1.442695
  %v2131 = vpow.pop %v2130
  %v2132 = vmul.f32 %v2048, 1.442695
  %v2133 = vpow.pop %v2132
  %v2134 = vmul.f32 %v2049, 1.442695
  %v2135 = vpow.pop %v2134
  %v2136 = vmul.f32 %v2050, 1.442695
  %v2137 = vpow.pop %v2136
  %v2138 = vmul.f32 %v2051, 1.442695
  %v2139 = vpow.pop %v2138
  %v2140 = vmul.f32 %v2052, 1.442695
  %v2141 = vpow.pop %v2140
  %v2142 = vmul.f32 %v2053, 1.442695
  %v2143 = vpow.pop %v2142
  %v2144 = vmul.f32 %v2054, 1.442695
  %v2145 = vpow.pop %v2144
  %v2146 = vmul.f32 %v2055, 1.442695
  %v2147 = vpow.pop %v2146
  %v2148 = vmul.f32 %v2056, 1.442695
  %v2149 = vpow.pop %v2148
  %v2150 = vmul.f32 %v2057, 1.442695
  %v2151 = vpow.pop %v2150
  %v2152 = vmul.f32 %v2058, 1.442695
  %v2153 = vpow.pop %v2152
  %v2154 = vmul.f32 %v2059, 1.442695
  %v2155 = vpow.pop %v2154
  %v2156 = vmul.f32 %v2060, 1.442695
  %v2157 = vpow.pop %v2156
  %v2158 = vmul.f32 %v2061, 1.442695
  %v2159 = vpow.pop %v2158
  %v2160 = vmul.f32 %v2062, 1.442695
  %v2161 = vpow.pop %v2160
  %v2162 = vmul.f32 %v2063, 1.442695
  %v2163 = vpow.pop %v2162
  %v2164 = vmul.f32 %v2064, 1.442695
  %v2165 = vpow.pop %v2164
  %v2166 = vmul.f32 %v2065, 1.442695
  %v2167 = vpow.pop %v2166
  %v2168 = vmul.f32 %v2066, 1.442695
  %v2169 = vpow.pop %v2168
  %v2170 = vmul.f32 %v2067, 1.442695
  %v2171 = vpow.pop %v2170
  %v2172 = vmul.f32 %v2068, 1.442695
  %v2173 = vpow.pop %v2172
  %v2174 = vmul.f32 %v2069, 1.442695
  %v2175 = vpow.pop %v2174
  %v2176 = vmul.f32 %v2070, 1.442695
  %v2177 = vpow.pop %v2176
  %v2178 = vmul.f32 %v2071, 1.442695
  %v2179 = vpow.pop %v2178
  %v2180 = vmul.f32 %v2072, 1.442695
  %v2181 = vpow.pop %v2180
  %v2182 = vmul.f32 %v2073, 1.442695
  %v2183 = vpow.pop %v2182
  %v2184 = vmul.f32 %v2074, 1.442695
  %v2185 = vpow.pop %v2184
  %v2186 = vmul.f32 %v2075, 1.442695
  %v2187 = vpow.pop %v2186
  %v2188 = vmul.f32 %v2076, 1.442695
  %v2189 = vpow.pop %v2188
  %v2190 = vmul.f32 %v2077, 1.442695
  %v2191 = vpow.pop %v2190
  %v2192 = vmul.f32 %v2078, 1.442695
  %v2193 = vpow.pop %v2192
  %v2194 = vmul.f32 %v2079, 1.442695
  %v2195 = vpow.pop %v2194
  %v2196 = vmul.f32 %v2080, 1.442695
  %v2197 = vpow.pop %v2196
  %v2198 = vmul.f32 %v2081, 1.442695
  %v2199 = vpow.pop %v2198
  %v2200 = vmul.f32 %v2082, 1.442695
  %v2201 = vpow.pop %v2200
  %v2202 = vmul.f32 %v2083, 1.442695
  %v2203 = vpow.pop %v2202
  %v2204 = vmul.f32 %v2084, 1.442695
  %v2205 = vpow.pop %v2204
  %v2206 = vmul.f32 %v2085, 1.442695
  %v2207 = vpow.pop %v2206
  %v2208 = vmul.f32 %v2086, 1.442695
  %v2209 = vpow.pop %v2208
  %v2210 = vmul.f32 %v2087, 1.442695
  %v2211 = vpow.pop %v2210
  %v2212 = vmul.f32 %v2088, 1.442695
  %v2213 = vpow.pop %v2212
  %v2214 = vmul.f32 %v2089, 1.442695
  %v2215 = vpow.pop %v2214
  %v2216 = vmul.f32 %v2090, 1.442695
  %v2217 = vpow.pop %v2216
  %v2218 = vmul.f32 %v2091, 1.442695
  %v2219 = vpow.pop %v2218
  %v2220 = vmul.f32 %v1900, %v2093
  %v2221 = vmul.f32 %v1901, %v2095
  %v2222 = vmul.f32 %v1902, %v2097
  %v2223 = vmul.f32 %v1903, %v2099
  %v2224 = vmul.f32 %v1904, %v2101
  %v2225 = vmul.f32 %v1905, %v2103
  %v2226 = vmul.f32 %v1906, %v2105
  %v2227 = vmul.f32 %v1907, %v2107
  %v2228 = vmul.f32 %v1908, %v2109
  %v2229 = vmul.f32 %v1909, %v2111
  %v2230 = vmul.f32 %v1910, %v2113
  %v2231 = vmul.f32 %v1911, %v2115
  %v2232 = vmul.f32 %v1912, %v2117
  %v2233 = vmul.f32 %v1913, %v2119
  %v2234 = vmul.f32 %v1914, %v2121
  %v2235 = vmul.f32 %v1915, %v2123
  %v2236 = vmul.f32 %v1916, %v2125
  %v2237 = vmul.f32 %v1917, %v2127
  %v2238 = vmul.f32 %v1918, %v2129
  %v2239 = vmul.f32 %v1919, %v2131
  %v2240 = vmul.f32 %v1920, %v2133
  %v2241 = vmul.f32 %v1921, %v2135
  %v2242 = vmul.f32 %v1922, %v2137
  %v2243 = vmul.f32 %v1923, %v2139
  %v2244 = vmul.f32 %v1924, %v2141
  %v2245 = vmul.f32 %v1925, %v2143
  %v2246 = vmul.f32 %v1926, %v2145
  %v2247 = vmul.f32 %v1927, %v2147
  %v2248 = vmul.f32 %v1928, %v2149
  %v2249 = vmul.f32 %v1929, %v2151
  %v2250 = vmul.f32 %v1930, %v2153
  %v2251 = vmul.f32 %v1931, %v2155
  %v2252 = vmul.f32 %v1932, %v2157
  %v2253 = vmul.f32 %v1933, %v2159
  %v2254 = vmul.f32 %v1934, %v2161
  %v2255 = vmul.f32 %v1935, %v2163
  %v2256 = vmul.f32 %v1936, %v2165
  %v2257 = vmul.f32 %v1937, %v2167
  %v2258 = vmul.f32 %v1938, %v2169
  %v2259 = vmul.f32 %v1939, %v2171
  %v2260 = vmul.f32 %v1940, %v2173
  %v2261 = vmul.f32 %v1941, %v2175
  %v2262 = vmul.f32 %v1942, %v2177
  %v2263 = vmul.f32 %v1943, %v2179
  %v2264 = vmul.f32 %v1944, %v2181
  %v2265 = vmul.f32 %v1945, %v2183
  %v2266 = vmul.f32 %v1946, %v2185
  %v2267 = vmul.f32 %v1947, %v2187
  %v2268 = vmul.f32 %v1948, %v2189
  %v2269 = vmul.f32 %v1949, %v2191
  %v2270 = vmul.f32 %v1950, %v2193
  %v2271 = vmul.f32 %v1951, %v2195
  %v2272 = vmul.f32 %v1952, %v2197
  %v2273 = vmul.f32 %v1953, %v2199
  %v2274 = vmul.f32 %v1954, %v2201
  %v2275 = vmul.f32 %v1955, %v2203
  %v2276 = vmul.f32 %v1956, %v2205
  %v2277 = vmul.f32 %v1957, %v2207
  %v2278 = vmul.f32 %v1958, %v2209
  %v2279 = vmul.f32 %v1959, %v2211
  %v2280 = vmul.f32 %v1960, %v2213
  %v2281 = vmul.f32 %v1961, %v2215
  %v2282 = vmul.f32 %v1962, %v2217
  %v2283 = vmul.f32 %v1963, %v2219
  %v2284 = vsub.f32 1.0, %v2220
  %v2285 = vsub.f32 1.0, %v2221
  %v2286 = vsub.f32 1.0, %v2222
  %v2287 = vsub.f32 1.0, %v2223
  %v2288 = vsub.f32 1.0, %v2224
  %v2289 = vsub.f32 1.0, %v2225
  %v2290 = vsub.f32 1.0, %v2226
  %v2291 = vsub.f32 1.0, %v2227
  %v2292 = vsub.f32 1.0, %v2228
  %v2293 = vsub.f32 1.0, %v2229
  %v2294 = vsub.f32 1.0, %v2230
  %v2295 = vsub.f32 1.0, %v2231
  %v2296 = vsub.f32 1.0, %v2232
  %v2297 = vsub.f32 1.0, %v2233
  %v2298 = vsub.f32 1.0, %v2234
  %v2299 = vsub.f32 1.0, %v2235
  %v2300 = vsub.f32 1.0, %v2236
  %v2301 = vsub.f32 1.0, %v2237
  %v2302 = vsub.f32 1.0, %v2238
  %v2303 = vsub.f32 1.0, %v2239
  %v2304 = vsub.f32 1.0, %v2240
  %v2305 = vsub.f32 1.0, %v2241
  %v2306 = vsub.f32 1.0, %v2242
  %v2307 = vsub.f32 1.0, %v2243
  %v2308 = vsub.f32 1.0, %v2244
  %v2309 = vsub.f32 1.0, %v2245
  %v2310 = vsub.f32 1.0, %v2246
  %v2311 = vsub.f32 1.0, %v2247
  %v2312 = vsub.f32 1.0, %v2248
  %v2313 = vsub.f32 1.0, %v2249
  %v2314 = vsub.f32 1.0, %v2250
  %v2315 = vsub.f32 1.0, %v2251
  %v2316 = vsub.f32 1.0, %v2252
  %v2317 = vsub.f32 1.0, %v2253
  %v2318 = vsub.f32 1.0, %v2254
  %v2319 = vsub.f32 1.0, %v2255
  %v2320 = vsub.f32 1.0, %v2256
  %v2321 = vsub.f32 1.0, %v2257
  %v2322 = vsub.f32 1.0, %v2258
  %v2323 = vsub.f32 1.0, %v2259
  %v2324 = vsub.f32 1.0, %v2260
  %v2325 = vsub.f32 1.0, %v2261
  %v2326 = vsub.f32 1.0, %v2262
  %v2327 = vsub.f32 1.0, %v2263
  %v2328 = vsub.f32 1.0, %v2264
  %v2329 = vsub.f32 1.0, %v2265
  %v2330 = vsub.f32 1.0, %v2266
  %v2331 = vsub.f32 1.0, %v2267
  %v2332 = vsub.f32 1.0, %v2268
  %v2333 = vsub.f32 1.0, %v2269
  %v2334 = vsub.f32 1.0, %v2270
  %v2335 = vsub.f32 1.0, %v2271
  %v2336 = vsub.f32 1.0, %v2272
  %v2337 = vsub.f32 1.0, %v2273
  %v2338 = vsub.f32 1.0, %v2274
  %v2339 = vsub.f32 1.0, %v2275
  %v2340 = vsub.f32 1.0, %v2276
  %v2341 = vsub.f32 1.0, %v2277
  %v2342 = vsub.f32 1.0, %v2278
  %v2343 = vsub.f32 1.0, %v2279
  %v2344 = vsub.f32 1.0, %v2280
  %v2345 = vsub.f32 1.0, %v2281
  %v2346 = vsub.f32 1.0, %v2282
  %v2347 = vsub.f32 1.0, %v2283
  %v2348 = vmul.f32 %v1004, %v2284
  %v2349 = vmul.f32 %v1005, %v2285
  %v2350 = vmul.f32 %v1006, %v2286
  %v2351 = vmul.f32 %v1007, %v2287
  %v2352 = vmul.f32 %v1008, %v2288
  %v2353 = vmul.f32 %v1009, %v2289
  %v2354 = vmul.f32 %v1010, %v2290
  %v2355 = vmul.f32 %v1011, %v2291
  %v2356 = vmul.f32 %v1012, %v2292
  %v2357 = vmul.f32 %v1013, %v2293
  %v2358 = vmul.f32 %v1014, %v2294
  %v2359 = vmul.f32 %v1015, %v2295
  %v2360 = vmul.f32 %v1016, %v2296
  %v2361 = vmul.f32 %v1017, %v2297
  %v2362 = vmul.f32 %v1018, %v2298
  %v2363 = vmul.f32 %v1019, %v2299
  %v2364 = vmul.f32 %v1020, %v2300
  %v2365 = vmul.f32 %v1021, %v2301
  %v2366 = vmul.f32 %v1022, %v2302
  %v2367 = vmul.f32 %v1023, %v2303
  %v2368 = vmul.f32 %v1024, %v2304
  %v2369 = vmul.f32 %v1025, %v2305
  %v2370 = vmul.f32 %v1026, %v2306
  %v2371 = vmul.f32 %v1027, %v2307
  %v2372 = vmul.f32 %v1028, %v2308
  %v2373 = vmul.f32 %v1029, %v2309
  %v2374 = vmul.f32 %v1030, %v2310
  %v2375 = vmul.f32 %v1031, %v2311
  %v2376 = vmul.f32 %v1032, %v2312
  %v2377 = vmul.f32 %v1033, %v2313
  %v2378 = vmul.f32 %v1034, %v2314
  %v2379 = vmul.f32 %v1035, %v2315
  %v2380 = vmul.f32 %v1036, %v2316
  %v2381 = vmul.f32 %v1037, %v2317
  %v2382 = vmul.f32 %v1038, %v2318
  %v2383 = vmul.f32 %v1039, %v2319
  %v2384 = vmul.f32 %v1040, %v2320
  %v2385 = vmul.f32 %v1041, %v2321
  %v2386 = vmul.f32 %v1042, %v2322
  %v2387 = vmul.f32 %v1043, %v2323
  %v2388 = vmul.f32 %v1044, %v2324
  %v2389 = vmul.f32 %v1045, %v2325
  %v2390 = vmul.f32 %v1046, %v2326
  %v2391 = vmul.f32 %v1047, %v2327
  %v2392 = vmul.f32 %v1048, %v2328
  %v2393 = vmul.f32 %v1049, %v2329
  %v2394 = vmul.f32 %v1050, %v2330
  %v2395 = vmul.f32 %v1051, %v2331
  %v2396 = vmul.f32 %v1052, %v2332
  %v2397 = vmul.f32 %v1053, %v2333
  %v2398 = vmul.f32 %v1054, %v2334
  %v2399 = vmul.f32 %v1055, %v2335
  %v2400 = vmul.f32 %v1056, %v2336
  %v2401 = vmul.f32 %v1057, %v2337
  %v2402 = vmul.f32 %v1058, %v2338
  %v2403 = vmul.f32 %v1059, %v2339
  %v2404 = vmul.f32 %v1060, %v2340
  %v2405 = vmul.f32 %v1061, %v2341
  %v2406 = vmul.f32 %v1062, %v2342
  %v2407 = vmul.f32 %v1063, %v2343
  %v2408 = vmul.f32 %v1064, %v2344
  %v2409 = vmul.f32 %v1065, %v2345
  %v2410 = vmul.f32 %v1066, %v2346
  %v2411 = vmul.f32 %v1067, %v2347
  %v2412 = vadd.f32 %v2348, 1.0
  %v2413 = vadd.f32 %v2349, 1.0
  %v2414 = vadd.f32 %v2350, 1.0
  %v2415 = vadd.f32 %v2351, 1.0
  %v2416 = vadd.f32 %v2352, 1.0
  %v2417 = vadd.f32 %v2353, 1.0
  %v2418 = vadd.f32 %v2354, 1.0
  %v2419 = vadd.f32 %v2355, 1.0
  %v2420 = vadd.f32 %v2356, 1.0
  %v2421 = vadd.f32 %v2357, 1.0
  %v2422 = vadd.f32 %v2358, 1.0
  %v2423 = vadd.f32 %v2359, 1.0
  %v2424 = vadd.f32 %v2360, 1.0
  %v2425 = vadd.f32 %v2361, 1.0
  %v2426 = vadd.f32 %v2362, 1.0
  %v2427 = vadd.f32 %v2363, 1.0
  %v2428 = vadd.f32 %v2364, 1.0
  %v2429 = vadd.f32 %v2365, 1.0
  %v2430 = vadd.f32 %v2366, 1.0
  %v2431 = vadd.f32 %v2367, 1.0
  %v2432 = vadd.f32 %v2368, 1.0
  %v2433 = vadd.f32 %v2369, 1.0
  %v2434 = vadd.f32 %v2370, 1.0
  %v2435 = vadd.f32 %v2371, 1.0
  %v2436 = vadd.f32 %v2372, 1.0
  %v2437 = vadd.f32 %v2373, 1.0
  %v2438 = vadd.f32 %v2374, 1.0
  %v2439 = vadd.f32 %v2375, 1.0
  %v2440 = vadd.f32 %v2376, 1.0
  %v2441 = vadd.f32 %v2377, 1.0
  %v2442 = vadd.f32 %v2378, 1.0
  %v2443 = vadd.f32 %v2379, 1.0
  %v2444 = vadd.f32 %v2380, 1.0
  %v2445 = vadd.f32 %v2381, 1.0
  %v2446 = vadd.f32 %v2382, 1.0
  %v2447 = vadd.f32 %v2383, 1.0
  %v2448 = vadd.f32 %v2384, 1.0
  %v2449 = vadd.f32 %v2385, 1.0
  %v2450 = vadd.f32 %v2386, 1.0
  %v2451 = vadd.f32 %v2387, 1.0
  %v2452 = vadd.f32 %v2388, 1.0
  %v2453 = vadd.f32 %v2389, 1.0
  %v2454 = vadd.f32 %v2390, 1.0
  %v2455 = vadd.f32 %v2391, 1.0
  %v2456 = vadd.f32 %v2392, 1.0
  %v2457 = vadd.f32 %v2393, 1.0
  %v2458 = vadd.f32 %v2394, 1.0
  %v2459 = vadd.f32 %v2395, 1.0
  %v2460 = vadd.f32 %v2396, 1.0
  %v2461 = vadd.f32 %v2397, 1.0
  %v2462 = vadd.f32 %v2398, 1.0
  %v2463 = vadd.f32 %v2399, 1.0
  %v2464 = vadd.f32 %v2400, 1.0
  %v2465 = vadd.f32 %v2401, 1.0
  %v2466 = vadd.f32 %v2402, 1.0
  %v2467 = vadd.f32 %v2403, 1.0
  %v2468 = vadd.f32 %v2404, 1.0
  %v2469 = vadd.f32 %v2405, 1.0
  %v2470 = vadd.f32 %v2406, 1.0
  %v2471 = vadd.f32 %v2407, 1.0
  %v2472 = vadd.f32 %v2408, 1.0
  %v2473 = vadd.f32 %v2409, 1.0
  %v2474 = vadd.f32 %v2410, 1.0
  %v2475 = vadd.f32 %v2411, 1.0
  %v2476 = vmul.f32 %v812, %v2412
  %v2477 = vmul.f32 %v813, %v2413
  %v2478 = vmul.f32 %v814, %v2414
  %v2479 = vmul.f32 %v815, %v2415
  %v2480 = vmul.f32 %v816, %v2416
  %v2481 = vmul.f32 %v817, %v2417
  %v2482 = vmul.f32 %v818, %v2418
  %v2483 = vmul.f32 %v819, %v2419
  %v2484 = vmul.f32 %v820, %v2420
  %v2485 = vmul.f32 %v821, %v2421
  %v2486 = vmul.f32 %v822, %v2422
  %v2487 = vmul.f32 %v823, %v2423
  %v2488 = vmul.f32 %v824, %v2424
  %v2489 = vmul.f32 %v825, %v2425
  %v2490 = vmul.f32 %v826, %v2426
  %v2491 = vmul.f32 %v827, %v2427
  %v2492 = vmul.f32 %v828, %v2428
  %v2493 = vmul.f32 %v829, %v2429
  %v2494 = vmul.f32 %v830, %v2430
  %v2495 = vmul.f32 %v831, %v2431
  %v2496 = vmul.f32 %v832, %v2432
  %v2497 = vmul.f32 %v833, %v2433
  %v2498 = vmul.f32 %v834, %v2434
  %v2499 = vmul.f32 %v835, %v2435
  %v2500 = vmul.f32 %v836, %v2436
  %v2501 = vmul.f32 %v837, %v2437
  %v2502 = vmul.f32 %v838, %v2438
  %v2503 = vmul.f32 %v839, %v2439
  %v2504 = vmul.f32 %v840, %v2440
  %v2505 = vmul.f32 %v841, %v2441
  %v2506 = vmul.f32 %v842, %v2442
  %v2507 = vmul.f32 %v843, %v2443
  %v2508 = vmul.f32 %v844, %v2444
  %v2509 = vmul.f32 %v845, %v2445
  %v2510 = vmul.f32 %v846, %v2446
  %v2511 = vmul.f32 %v847, %v2447
  %v2512 = vmul.f32 %v848, %v2448
  %v2513 = vmul.f32 %v849, %v2449
  %v2514 = vmul.f32 %v850, %v2450
  %v2515 = vmul.f32 %v851, %v2451
  %v2516 = vmul.f32 %v852, %v2452
  %v2517 = vmul.f32 %v853, %v2453
  %v2518 = vmul.f32 %v854, %v2454
  %v2519 = vmul.f32 %v855, %v2455
  %v2520 = vmul.f32 %v856, %v2456
  %v2521 = vmul.f32 %v857, %v2457
  %v2522 = vmul.f32 %v858, %v2458
  %v2523 = vmul.f32 %v859, %v2459
  %v2524 = vmul.f32 %v860, %v2460
  %v2525 = vmul.f32 %v861, %v2461
  %v2526 = vmul.f32 %v862, %v2462
  %v2527 = vmul.f32 %v863, %v2463
  %v2528 = vmul.f32 %v864, %v2464
  %v2529 = vmul.f32 %v865, %v2465
  %v2530 = vmul.f32 %v866, %v2466
  %v2531 = vmul.f32 %v867, %v2467
  %v2532 = vmul.f32 %v868, %v2468
  %v2533 = vmul.f32 %v869, %v2469
  %v2534 = vmul.f32 %v870, %v2470
  %v2535 = vmul.f32 %v871, %v2471
  %v2536 = vmul.f32 %v872, %v2472
  %v2537 = vmul.f32 %v873, %v2473
  %v2538 = vmul.f32 %v874, %v2474
  %v2539 = vmul.f32 %v875, %v2475
  %v2540 = vld [vmem:[%s4] sm:$0xf]
  %v2541 = vld [vmem:[%s5] sm:$0x1]
  %v2543 = vlaneseq
  %v2544 = vshrl.u32 %v2543, 7
  %v2545 = vsub.s32 0, %v2544
  %v2546 = vrot.slane %v2541, %v2545
  %v2549 = vsel %vm88, %v2476, 0
  %v2552 = vsel %vm88, %v2477, 0
  %v2555 = vsel %vm88, %v2478, 0
  %v2558 = vsel %vm88, %v2479, 0
  %v2561 = vsel %vm88, %v2480, 0
  %v2564 = vsel %vm88, %v2481, 0
  %v2567 = vsel %vm88, %v2482, 0
  %v2570 = vsel %vm88, %v2483, 0
  %v2573 = vsel %vm88, %v2484, 0
  %v2576 = vsel %vm88, %v2485, 0
  %v2579 = vsel %vm88, %v2486, 0
  %v2582 = vsel %vm88, %v2487, 0
  %v2585 = vsel %vm88, %v2488, 0
  %v2588 = vsel %vm88, %v2489, 0
  %v2591 = vsel %vm88, %v2490, 0
  %v2594 = vsel %vm88, %v2491, 0
  %v2597 = vsel %vm88, %v2492, 0
  %v2600 = vsel %vm88, %v2493, 0
  %v2603 = vsel %vm88, %v2494, 0
  %v2606 = vsel %vm88, %v2495, 0
  %v2609 = vsel %vm88, %v2496, 0
  %v2612 = vsel %vm88, %v2497, 0
  %v2615 = vsel %vm88, %v2498, 0
  %v2618 = vsel %vm88, %v2499, 0
  %v2621 = vsel %vm88, %v2500, 0
  %v2624 = vsel %vm88, %v2501, 0
  %v2627 = vsel %vm88, %v2502, 0
  %v2630 = vsel %vm88, %v2503, 0
  %v2633 = vsel %vm88, %v2504, 0
  %v2636 = vsel %vm88, %v2505, 0
  %v2639 = vsel %vm88, %v2506, 0
  %v2642 = vsel %vm88, %v2507, 0
  %v2645 = vsel %vm88, %v2508, 0
  %v2648 = vsel %vm88, %v2509, 0
  %v2651 = vsel %vm88, %v2510, 0
  %v2654 = vsel %vm88, %v2511, 0
  %v2657 = vsel %vm88, %v2512, 0
  %v2660 = vsel %vm88, %v2513, 0
  %v2663 = vsel %vm88, %v2514, 0
  %v2666 = vsel %vm88, %v2515, 0
  %v2669 = vsel %vm88, %v2516, 0
  %v2672 = vsel %vm88, %v2517, 0
  %v2675 = vsel %vm88, %v2518, 0
  %v2678 = vsel %vm88, %v2519, 0
  %v2681 = vsel %vm88, %v2520, 0
  %v2684 = vsel %vm88, %v2521, 0
  %v2687 = vsel %vm88, %v2522, 0
  %v2690 = vsel %vm88, %v2523, 0
  %v2693 = vsel %vm88, %v2524, 0
  %v2696 = vsel %vm88, %v2525, 0
  %v2699 = vsel %vm88, %v2526, 0
  %v2702 = vsel %vm88, %v2527, 0
  %v2705 = vsel %vm88, %v2528, 0
  %v2708 = vsel %vm88, %v2529, 0
  %v2711 = vsel %vm88, %v2530, 0
  %v2714 = vsel %vm88, %v2531, 0
  %v2717 = vsel %vm88, %v2532, 0
  %v2720 = vsel %vm88, %v2533, 0
  %v2723 = vsel %vm88, %v2534, 0
  %v2726 = vsel %vm88, %v2535, 0
  %v2729 = vsel %vm88, %v2536, 0
  %v2732 = vsel %vm88, %v2537, 0
  %v2735 = vsel %vm88, %v2538, 0
  %v2738 = vsel %vm88, %v2539, 0
  %v2741 = vsel %vm281, %v2540, 0
  %2743 = vmatprep.subr.mxu0 0.0
  %2744 = vmatpush1.msra.mxu0 0.0
  %2745 = vmatprep.subr.mxu0 0.0
  %2746 = vmatpush1.msra.mxu0 0.0
  %2747 = vmatprep.subr.mxu0 0.0
  %2748 = vmatpush1.msra.mxu0 0.0
  %2749 = vmatprep.subr.mxu0 0.0
  %2750 = vmatpush1.msra.mxu0 0.0
  %2751 = vmatprep.subr.mxu0 0.0
  %2752 = vmatpush1.msra.mxu0 0.0
  %2753 = vmatprep.subr.mxu0 0.0
  %2754 = vmatpush1.msra.mxu0 0.0
  %2755 = vmatprep.subr.mxu0 0.0
  %2756 = vmatpush1.msra.mxu0 0.0
  %2757 = vmatprep.subr.mxu0 0.0
  %2758 = vmatpush1.msra.mxu0 0.0
  %2759 = vmatprep.subr.mxu0 0.0
  %2760 = vmatpush1.msra.mxu0 0.0
  %2761 = vmatprep.subr.mxu0 0.0
  %2762 = vmatpush1.msra.mxu0 0.0
  %2763 = vmatprep.subr.mxu0 0.0
  %2764 = vmatpush1.msra.mxu0 0.0
  %2765 = vmatprep.subr.mxu0 0.0
  %2766 = vmatpush1.msra.mxu0 0.0
  %2767 = vmatprep.subr.mxu0 0.0
  %2768 = vmatpush1.msra.mxu0 0.0
  %2769 = vmatprep.subr.mxu0 0.0
  %2770 = vmatpush1.msra.mxu0 0.0
  %2771 = vmatprep.subr.mxu0 0.0
  %2772 = vmatpush1.msra.mxu0 0.0
  %2773 = vmatprep.subr.mxu0 0.0
  %2774 = vmatpush1.msra.mxu0 %v2741
  %2775 = vmatprep.subr.mxu0 0.0
  %2776 = vmatpush2.msra.mxu0 0.0
  %2777 = vmatprep.subr.mxu0 0.0
  %2778 = vmatpush2.msra.mxu0 0.0
  %2779 = vmatprep.subr.mxu0 0.0
  %2780 = vmatpush2.msra.mxu0 0.0
  %2781 = vmatprep.subr.mxu0 0.0
  %2782 = vmatpush2.msra.mxu0 0.0
  %2783 = vmatprep.subr.mxu0 0.0
  %2784 = vmatpush2.msra.mxu0 0.0
  %2785 = vmatprep.subr.mxu0 0.0
  %2786 = vmatpush2.msra.mxu0 0.0
  %2787 = vmatprep.subr.mxu0 0.0
  %2788 = vmatpush2.msra.mxu0 0.0
  %2789 = vmatprep.subr.mxu0 0.0
  %2790 = vmatpush2.msra.mxu0 0.0
  %2791 = vmatprep.subr.mxu0 0.0
  %2792 = vmatpush2.msra.mxu0 0.0
  %2793 = vmatprep.subr.mxu0 0.0
  %2794 = vmatpush2.msra.mxu0 0.0
  %2795 = vmatprep.subr.mxu0 0.0
  %2796 = vmatpush2.msra.mxu0 0.0
  %2797 = vmatprep.subr.mxu0 0.0
  %2798 = vmatpush2.msra.mxu0 0.0
  %2799 = vmatprep.subr.mxu0 0.0
  %2800 = vmatpush2.msra.mxu0 0.0
  %2801 = vmatprep.subr.mxu0 0.0
  %2802 = vmatpush2.msra.mxu0 0.0
  %2803 = vmatprep.subr.mxu0 0.0
  %2804 = vmatpush2.msra.mxu0 0.0
  %2805 = vmatprep.subr.mxu0 0.0
  %2806 = vmatpush2.msra.mxu0 0.0
  %2807 = vmatprep.mubr.f32.mxu0 0.0
  %2808 = vmatmul.mubr.f32.gmra.mxu0 %v2549
  %v2809 = vpop.f32.mrf.mxu0
  %v2810 = vadd.f32 %v2546, %v2809
  %v2811 = vpop.f32.mrf.mxu0
  %2812 = vmatprep.mubr.f32.mxu0 0.0
  %2813 = vmatmul.mubr.f32.gmra.mxu0 %v2552
  %v2814 = vpop.f32.mrf.mxu0
  %v2815 = vadd.f32 %v2546, %v2814
  %v2816 = vpop.f32.mrf.mxu0
  %2817 = vmatprep.mubr.f32.mxu0 0.0
  %2818 = vmatmul.mubr.f32.gmra.mxu0 %v2555
  %v2819 = vpop.f32.mrf.mxu0
  %v2820 = vadd.f32 %v2546, %v2819
  %v2821 = vpop.f32.mrf.mxu0
  %2822 = vmatprep.mubr.f32.mxu0 0.0
  %2823 = vmatmul.mubr.f32.gmra.mxu0 %v2558
  %v2824 = vpop.f32.mrf.mxu0
  %v2825 = vadd.f32 %v2546, %v2824
  %v2826 = vpop.f32.mrf.mxu0
  %2827 = vmatprep.mubr.f32.mxu0 0.0
  %2828 = vmatmul.mubr.f32.gmra.mxu0 %v2561
  %v2829 = vpop.f32.mrf.mxu0
  %v2830 = vadd.f32 %v2546, %v2829
  %v2831 = vpop.f32.mrf.mxu0
  %2832 = vmatprep.mubr.f32.mxu0 0.0
  %2833 = vmatmul.mubr.f32.gmra.mxu0 %v2564
  %v2834 = vpop.f32.mrf.mxu0
  %v2835 = vadd.f32 %v2546, %v2834
  %v2836 = vpop.f32.mrf.mxu0
  %2837 = vmatprep.mubr.f32.mxu0 0.0
  %2838 = vmatmul.mubr.f32.gmra.mxu0 %v2567
  %v2839 = vpop.f32.mrf.mxu0
  %v2840 = vadd.f32 %v2546, %v2839
  %v2841 = vpop.f32.mrf.mxu0
  %2842 = vmatprep.mubr.f32.mxu0 0.0
  %2843 = vmatmul.mubr.f32.gmra.mxu0 %v2570
  %v2844 = vpop.f32.mrf.mxu0
  %v2845 = vadd.f32 %v2546, %v2844
  %v2846 = vpop.f32.mrf.mxu0
  %2847 = vmatprep.mubr.f32.mxu0 0.0
  %2848 = vmatmul.mubr.f32.gmra.mxu0 %v2573
  %v2849 = vpop.f32.mrf.mxu0
  %v2850 = vadd.f32 %v2546, %v2849
  %v2851 = vpop.f32.mrf.mxu0
  %2852 = vmatprep.mubr.f32.mxu0 0.0
  %2853 = vmatmul.mubr.f32.gmra.mxu0 %v2576
  %v2854 = vpop.f32.mrf.mxu0
  %v2855 = vadd.f32 %v2546, %v2854
  %v2856 = vpop.f32.mrf.mxu0
  %2857 = vmatprep.mubr.f32.mxu0 0.0
  %2858 = vmatmul.mubr.f32.gmra.mxu0 %v2579
  %v2859 = vpop.f32.mrf.mxu0
  %v2860 = vadd.f32 %v2546, %v2859
  %v2861 = vpop.f32.mrf.mxu0
  %2862 = vmatprep.mubr.f32.mxu0 0.0
  %2863 = vmatmul.mubr.f32.gmra.mxu0 %v2582
  %v2864 = vpop.f32.mrf.mxu0
  %v2865 = vadd.f32 %v2546, %v2864
  %v2866 = vpop.f32.mrf.mxu0
  %2867 = vmatprep.mubr.f32.mxu0 0.0
  %2868 = vmatmul.mubr.f32.gmra.mxu0 %v2585
  %v2869 = vpop.f32.mrf.mxu0
  %v2870 = vadd.f32 %v2546, %v2869
  %v2871 = vpop.f32.mrf.mxu0
  %2872 = vmatprep.mubr.f32.mxu0 0.0
  %2873 = vmatmul.mubr.f32.gmra.mxu0 %v2588
  %v2874 = vpop.f32.mrf.mxu0
  %v2875 = vadd.f32 %v2546, %v2874
  %v2876 = vpop.f32.mrf.mxu0
  %2877 = vmatprep.mubr.f32.mxu0 0.0
  %2878 = vmatmul.mubr.f32.gmra.mxu0 %v2591
  %v2879 = vpop.f32.mrf.mxu0
  %v2880 = vadd.f32 %v2546, %v2879
  %v2881 = vpop.f32.mrf.mxu0
  %2882 = vmatprep.mubr.f32.mxu0 0.0
  %2883 = vmatmul.mubr.f32.gmra.mxu0 %v2594
  %v2884 = vpop.f32.mrf.mxu0
  %v2885 = vadd.f32 %v2546, %v2884
  %v2886 = vpop.f32.mrf.mxu0
  %2887 = vmatprep.mubr.f32.mxu0 0.0
  %2888 = vmatmul.mubr.f32.gmra.mxu0 %v2597
  %v2889 = vpop.f32.mrf.mxu0
  %v2890 = vadd.f32 %v2546, %v2889
  %v2891 = vpop.f32.mrf.mxu0
  %2892 = vmatprep.mubr.f32.mxu0 0.0
  %2893 = vmatmul.mubr.f32.gmra.mxu0 %v2600
  %v2894 = vpop.f32.mrf.mxu0
  %v2895 = vadd.f32 %v2546, %v2894
  %v2896 = vpop.f32.mrf.mxu0
  %2897 = vmatprep.mubr.f32.mxu0 0.0
  %2898 = vmatmul.mubr.f32.gmra.mxu0 %v2603
  %v2899 = vpop.f32.mrf.mxu0
  %v2900 = vadd.f32 %v2546, %v2899
  %v2901 = vpop.f32.mrf.mxu0
  %2902 = vmatprep.mubr.f32.mxu0 0.0
  %2903 = vmatmul.mubr.f32.gmra.mxu0 %v2606
  %v2904 = vpop.f32.mrf.mxu0
  %v2905 = vadd.f32 %v2546, %v2904
  %v2906 = vpop.f32.mrf.mxu0
  %2907 = vmatprep.mubr.f32.mxu0 0.0
  %2908 = vmatmul.mubr.f32.gmra.mxu0 %v2609
  %v2909 = vpop.f32.mrf.mxu0
  %v2910 = vadd.f32 %v2546, %v2909
  %v2911 = vpop.f32.mrf.mxu0
  %2912 = vmatprep.mubr.f32.mxu0 0.0
  %2913 = vmatmul.mubr.f32.gmra.mxu0 %v2612
  %v2914 = vpop.f32.mrf.mxu0
  %v2915 = vadd.f32 %v2546, %v2914
  %v2916 = vpop.f32.mrf.mxu0
  %2917 = vmatprep.mubr.f32.mxu0 0.0
  %2918 = vmatmul.mubr.f32.gmra.mxu0 %v2615
  %v2919 = vpop.f32.mrf.mxu0
  %v2920 = vadd.f32 %v2546, %v2919
  %v2921 = vpop.f32.mrf.mxu0
  %2922 = vmatprep.mubr.f32.mxu0 0.0
  %2923 = vmatmul.mubr.f32.gmra.mxu0 %v2618
  %v2924 = vpop.f32.mrf.mxu0
  %v2925 = vadd.f32 %v2546, %v2924
  %v2926 = vpop.f32.mrf.mxu0
  %2927 = vmatprep.mubr.f32.mxu0 0.0
  %2928 = vmatmul.mubr.f32.gmra.mxu0 %v2621
  %v2929 = vpop.f32.mrf.mxu0
  %v2930 = vadd.f32 %v2546, %v2929
  %v2931 = vpop.f32.mrf.mxu0
  %2932 = vmatprep.mubr.f32.mxu0 0.0
  %2933 = vmatmul.mubr.f32.gmra.mxu0 %v2624
  %v2934 = vpop.f32.mrf.mxu0
  %v2935 = vadd.f32 %v2546, %v2934
  %v2936 = vpop.f32.mrf.mxu0
  %2937 = vmatprep.mubr.f32.mxu0 0.0
  %2938 = vmatmul.mubr.f32.gmra.mxu0 %v2627
  %v2939 = vpop.f32.mrf.mxu0
  %v2940 = vadd.f32 %v2546, %v2939
  %v2941 = vpop.f32.mrf.mxu0
  %2942 = vmatprep.mubr.f32.mxu0 0.0
  %2943 = vmatmul.mubr.f32.gmra.mxu0 %v2630
  %v2944 = vpop.f32.mrf.mxu0
  %v2945 = vadd.f32 %v2546, %v2944
  %v2946 = vpop.f32.mrf.mxu0
  %2947 = vmatprep.mubr.f32.mxu0 0.0
  %2948 = vmatmul.mubr.f32.gmra.mxu0 %v2633
  %v2949 = vpop.f32.mrf.mxu0
  %v2950 = vadd.f32 %v2546, %v2949
  %v2951 = vpop.f32.mrf.mxu0
  %2952 = vmatprep.mubr.f32.mxu0 0.0
  %2953 = vmatmul.mubr.f32.gmra.mxu0 %v2636
  %v2954 = vpop.f32.mrf.mxu0
  %v2955 = vadd.f32 %v2546, %v2954
  %v2956 = vpop.f32.mrf.mxu0
  %2957 = vmatprep.mubr.f32.mxu0 0.0
  %2958 = vmatmul.mubr.f32.gmra.mxu0 %v2639
  %v2959 = vpop.f32.mrf.mxu0
  %v2960 = vadd.f32 %v2546, %v2959
  %v2961 = vpop.f32.mrf.mxu0
  %2962 = vmatprep.mubr.f32.mxu0 0.0
  %2963 = vmatmul.mubr.f32.gmra.mxu0 %v2642
  %v2964 = vpop.f32.mrf.mxu0
  %v2965 = vadd.f32 %v2546, %v2964
  %v2966 = vpop.f32.mrf.mxu0
  %2967 = vmatprep.mubr.f32.mxu0 0.0
  %2968 = vmatmul.mubr.f32.gmra.mxu0 %v2645
  %v2969 = vpop.f32.mrf.mxu0
  %v2970 = vadd.f32 %v2546, %v2969
  %v2971 = vpop.f32.mrf.mxu0
  %2972 = vmatprep.mubr.f32.mxu0 0.0
  %2973 = vmatmul.mubr.f32.gmra.mxu0 %v2648
  %v2974 = vpop.f32.mrf.mxu0
  %v2975 = vadd.f32 %v2546, %v2974
  %v2976 = vpop.f32.mrf.mxu0
  %2977 = vmatprep.mubr.f32.mxu0 0.0
  %2978 = vmatmul.mubr.f32.gmra.mxu0 %v2651
  %v2979 = vpop.f32.mrf.mxu0
  %v2980 = vadd.f32 %v2546, %v2979
  %v2981 = vpop.f32.mrf.mxu0
  %2982 = vmatprep.mubr.f32.mxu0 0.0
  %2983 = vmatmul.mubr.f32.gmra.mxu0 %v2654
  %v2984 = vpop.f32.mrf.mxu0
  %v2985 = vadd.f32 %v2546, %v2984
  %v2986 = vpop.f32.mrf.mxu0
  %2987 = vmatprep.mubr.f32.mxu0 0.0
  %2988 = vmatmul.mubr.f32.gmra.mxu0 %v2657
  %v2989 = vpop.f32.mrf.mxu0
  %v2990 = vadd.f32 %v2546, %v2989
  %v2991 = vpop.f32.mrf.mxu0
  %2992 = vmatprep.mubr.f32.mxu0 0.0
  %2993 = vmatmul.mubr.f32.gmra.mxu0 %v2660
  %v2994 = vpop.f32.mrf.mxu0
  %v2995 = vadd.f32 %v2546, %v2994
  %v2996 = vpop.f32.mrf.mxu0
  %2997 = vmatprep.mubr.f32.mxu0 0.0
  %2998 = vmatmul.mubr.f32.gmra.mxu0 %v2663
  %v2999 = vpop.f32.mrf.mxu0
  %v3000 = vadd.f32 %v2546, %v2999
  %v3001 = vpop.f32.mrf.mxu0
  %3002 = vmatprep.mubr.f32.mxu0 0.0
  %3003 = vmatmul.mubr.f32.gmra.mxu0 %v2666
  %v3004 = vpop.f32.mrf.mxu0
  %v3005 = vadd.f32 %v2546, %v3004
  %v3006 = vpop.f32.mrf.mxu0
  %3007 = vmatprep.mubr.f32.mxu0 0.0
  %3008 = vmatmul.mubr.f32.gmra.mxu0 %v2669
  %v3009 = vpop.f32.mrf.mxu0
  %v3010 = vadd.f32 %v2546, %v3009
  %v3011 = vpop.f32.mrf.mxu0
  %3012 = vmatprep.mubr.f32.mxu0 0.0
  %3013 = vmatmul.mubr.f32.gmra.mxu0 %v2672
  %v3014 = vpop.f32.mrf.mxu0
  %v3015 = vadd.f32 %v2546, %v3014
  %v3016 = vpop.f32.mrf.mxu0
  %3017 = vmatprep.mubr.f32.mxu0 0.0
  %3018 = vmatmul.mubr.f32.gmra.mxu0 %v2675
  %v3019 = vpop.f32.mrf.mxu0
  %v3020 = vadd.f32 %v2546, %v3019
  %v3021 = vpop.f32.mrf.mxu0
  %3022 = vmatprep.mubr.f32.mxu0 0.0
  %3023 = vmatmul.mubr.f32.gmra.mxu0 %v2678
  %v3024 = vpop.f32.mrf.mxu0
  %v3025 = vadd.f32 %v2546, %v3024
  %v3026 = vpop.f32.mrf.mxu0
  %3027 = vmatprep.mubr.f32.mxu0 0.0
  %3028 = vmatmul.mubr.f32.gmra.mxu0 %v2681
  %v3029 = vpop.f32.mrf.mxu0
  %v3030 = vadd.f32 %v2546, %v3029
  %v3031 = vpop.f32.mrf.mxu0
  %3032 = vmatprep.mubr.f32.mxu0 0.0
  %3033 = vmatmul.mubr.f32.gmra.mxu0 %v2684
  %v3034 = vpop.f32.mrf.mxu0
  %v3035 = vadd.f32 %v2546, %v3034
  %v3036 = vpop.f32.mrf.mxu0
  %3037 = vmatprep.mubr.f32.mxu0 0.0
  %3038 = vmatmul.mubr.f32.gmra.mxu0 %v2687
  %v3039 = vpop.f32.mrf.mxu0
  %v3040 = vadd.f32 %v2546, %v3039
  %v3041 = vpop.f32.mrf.mxu0
  %3042 = vmatprep.mubr.f32.mxu0 0.0
  %3043 = vmatmul.mubr.f32.gmra.mxu0 %v2690
  %v3044 = vpop.f32.mrf.mxu0
  %v3045 = vadd.f32 %v2546, %v3044
  %v3046 = vpop.f32.mrf.mxu0
  %3047 = vmatprep.mubr.f32.mxu0 0.0
  %3048 = vmatmul.mubr.f32.gmra.mxu0 %v2693
  %v3049 = vpop.f32.mrf.mxu0
  %v3050 = vadd.f32 %v2546, %v3049
  %v3051 = vpop.f32.mrf.mxu0
  %3052 = vmatprep.mubr.f32.mxu0 0.0
  %3053 = vmatmul.mubr.f32.gmra.mxu0 %v2696
  %v3054 = vpop.f32.mrf.mxu0
  %v3055 = vadd.f32 %v2546, %v3054
  %v3056 = vpop.f32.mrf.mxu0
  %3057 = vmatprep.mubr.f32.mxu0 0.0
  %3058 = vmatmul.mubr.f32.gmra.mxu0 %v2699
  %v3059 = vpop.f32.mrf.mxu0
  %v3060 = vadd.f32 %v2546, %v3059
  %v3061 = vpop.f32.mrf.mxu0
  %3062 = vmatprep.mubr.f32.mxu0 0.0
  %3063 = vmatmul.mubr.f32.gmra.mxu0 %v2702
  %v3064 = vpop.f32.mrf.mxu0
  %v3065 = vadd.f32 %v2546, %v3064
  %v3066 = vpop.f32.mrf.mxu0
  %3067 = vmatprep.mubr.f32.mxu0 0.0
  %3068 = vmatmul.mubr.f32.gmra.mxu0 %v2705
  %v3069 = vpop.f32.mrf.mxu0
  %v3070 = vadd.f32 %v2546, %v3069
  %v3071 = vpop.f32.mrf.mxu0
  %3072 = vmatprep.mubr.f32.mxu0 0.0
  %3073 = vmatmul.mubr.f32.gmra.mxu0 %v2708
  %v3074 = vpop.f32.mrf.mxu0
  %v3075 = vadd.f32 %v2546, %v3074
  %v3076 = vpop.f32.mrf.mxu0
  %3077 = vmatprep.mubr.f32.mxu0 0.0
  %3078 = vmatmul.mubr.f32.gmra.mxu0 %v2711
  %v3079 = vpop.f32.mrf.mxu0
  %v3080 = vadd.f32 %v2546, %v3079
  %v3081 = vpop.f32.mrf.mxu0
  %3082 = vmatprep.mubr.f32.mxu0 0.0
  %3083 = vmatmul.mubr.f32.gmra.mxu0 %v2714
  %v3084 = vpop.f32.mrf.mxu0
  %v3085 = vadd.f32 %v2546, %v3084
  %v3086 = vpop.f32.mrf.mxu0
  %3087 = vmatprep.mubr.f32.mxu0 0.0
  %3088 = vmatmul.mubr.f32.gmra.mxu0 %v2717
  %v3089 = vpop.f32.mrf.mxu0
  %v3090 = vadd.f32 %v2546, %v3089
  %v3091 = vpop.f32.mrf.mxu0
  %3092 = vmatprep.mubr.f32.mxu0 0.0
  %3093 = vmatmul.mubr.f32.gmra.mxu0 %v2720
  %v3094 = vpop.f32.mrf.mxu0
  %v3095 = vadd.f32 %v2546, %v3094
  %v3096 = vpop.f32.mrf.mxu0
  %3097 = vmatprep.mubr.f32.mxu0 0.0
  %3098 = vmatmul.mubr.f32.gmra.mxu0 %v2723
  %v3099 = vpop.f32.mrf.mxu0
  %v3100 = vadd.f32 %v2546, %v3099
  %v3101 = vpop.f32.mrf.mxu0
  %3102 = vmatprep.mubr.f32.mxu0 0.0
  %3103 = vmatmul.mubr.f32.gmra.mxu0 %v2726
  %v3104 = vpop.f32.mrf.mxu0
  %v3105 = vadd.f32 %v2546, %v3104
  %v3106 = vpop.f32.mrf.mxu0
  %3107 = vmatprep.mubr.f32.mxu0 0.0
  %3108 = vmatmul.mubr.f32.gmra.mxu0 %v2729
  %v3109 = vpop.f32.mrf.mxu0
  %v3110 = vadd.f32 %v2546, %v3109
  %v3111 = vpop.f32.mrf.mxu0
  %3112 = vmatprep.mubr.f32.mxu0 0.0
  %3113 = vmatmul.mubr.f32.gmra.mxu0 %v2732
  %v3114 = vpop.f32.mrf.mxu0
  %v3115 = vadd.f32 %v2546, %v3114
  %v3116 = vpop.f32.mrf.mxu0
  %3117 = vmatprep.mubr.f32.mxu0 0.0
  %3118 = vmatmul.mubr.f32.gmra.mxu0 %v2735
  %v3119 = vpop.f32.mrf.mxu0
  %v3120 = vadd.f32 %v2546, %v3119
  %v3121 = vpop.f32.mrf.mxu0
  %3122 = vmatprep.mubr.f32.mxu0 0.0
  %3123 = vmatmul.mubr.f32.gmra.mxu0 %v2738
  %v3124 = vpop.f32.mrf.mxu0
  %v3125 = vadd.f32 %v2546, %v3124
  %v3126 = vpop.f32.mrf.mxu0
  %3127 = vdwg.mxu0
  %vm3128 = vcmask 130048
  %3129 = vst.msk [vmem:[%s6] sm:$0xff] %vm3128, %v2810
  %3130 = vst.msk [vmem:[%s6 + $0x8] sm:$0xff] %vm3128, %v2815
  %3131 = vst.msk [vmem:[%s6 + $0x10] sm:$0xff] %vm3128, %v2820
  %3132 = vst.msk [vmem:[%s6 + $0x18] sm:$0xff] %vm3128, %v2825
  %3133 = vst.msk [vmem:[%s6 + $0x20] sm:$0xff] %vm3128, %v2830
  %3134 = vst.msk [vmem:[%s6 + $0x28] sm:$0xff] %vm3128, %v2835
  %3135 = vst.msk [vmem:[%s6 + $0x30] sm:$0xff] %vm3128, %v2840
  %3136 = vst.msk [vmem:[%s6 + $0x38] sm:$0xff] %vm3128, %v2845
  %3137 = vst.msk [vmem:[%s6 + $0x40] sm:$0xff] %vm3128, %v2850
  %3138 = vst.msk [vmem:[%s6 + $0x48] sm:$0xff] %vm3128, %v2855
  %3139 = vst.msk [vmem:[%s6 + $0x50] sm:$0xff] %vm3128, %v2860
  %3140 = vst.msk [vmem:[%s6 + $0x58] sm:$0xff] %vm3128, %v2865
  %3141 = vst.msk [vmem:[%s6 + $0x60] sm:$0xff] %vm3128, %v2870
  %3142 = vst.msk [vmem:[%s6 + $0x68] sm:$0xff] %vm3128, %v2875
  %3143 = vst.msk [vmem:[%s6 + $0x70] sm:$0xff] %vm3128, %v2880
  %3144 = vst.msk [vmem:[%s6 + $0x78] sm:$0xff] %vm3128, %v2885
  %3145 = vst.msk [vmem:[%s6 + $0x80] sm:$0xff] %vm3128, %v2890
  %3146 = vst.msk [vmem:[%s6 + $0x88] sm:$0xff] %vm3128, %v2895
  %3147 = vst.msk [vmem:[%s6 + $0x90] sm:$0xff] %vm3128, %v2900
  %3148 = vst.msk [vmem:[%s6 + $0x98] sm:$0xff] %vm3128, %v2905
  %3149 = vst.msk [vmem:[%s6 + $0xa0] sm:$0xff] %vm3128, %v2910
  %3150 = vst.msk [vmem:[%s6 + $0xa8] sm:$0xff] %vm3128, %v2915
  %3151 = vst.msk [vmem:[%s6 + $0xb0] sm:$0xff] %vm3128, %v2920
  %3152 = vst.msk [vmem:[%s6 + $0xb8] sm:$0xff] %vm3128, %v2925
  %3153 = vst.msk [vmem:[%s6 + $0xc0] sm:$0xff] %vm3128, %v2930
  %3154 = vst.msk [vmem:[%s6 + $0xc8] sm:$0xff] %vm3128, %v2935
  %3155 = vst.msk [vmem:[%s6 + $0xd0] sm:$0xff] %vm3128, %v2940
  %3156 = vst.msk [vmem:[%s6 + $0xd8] sm:$0xff] %vm3128, %v2945
  %3157 = vst.msk [vmem:[%s6 + $0xe0] sm:$0xff] %vm3128, %v2950
  %3158 = vst.msk [vmem:[%s6 + $0xe8] sm:$0xff] %vm3128, %v2955
  %3159 = vst.msk [vmem:[%s6 + $0xf0] sm:$0xff] %vm3128, %v2960
  %3160 = vst.msk [vmem:[%s6 + $0xf8] sm:$0xff] %vm3128, %v2965
  %3161 = vst.msk [vmem:[%s6 + $0x100] sm:$0xff] %vm3128, %v2970
  %3162 = vst.msk [vmem:[%s6 + $0x108] sm:$0xff] %vm3128, %v2975
  %3163 = vst.msk [vmem:[%s6 + $0x110] sm:$0xff] %vm3128, %v2980
  %3164 = vst.msk [vmem:[%s6 + $0x118] sm:$0xff] %vm3128, %v2985
  %3165 = vst.msk [vmem:[%s6 + $0x120] sm:$0xff] %vm3128, %v2990
  %3166 = vst.msk [vmem:[%s6 + $0x128] sm:$0xff] %vm3128, %v2995
  %3167 = vst.msk [vmem:[%s6 + $0x130] sm:$0xff] %vm3128, %v3000
  %3168 = vst.msk [vmem:[%s6 + $0x138] sm:$0xff] %vm3128, %v3005
  %3169 = vst.msk [vmem:[%s6 + $0x140] sm:$0xff] %vm3128, %v3010
  %3170 = vst.msk [vmem:[%s6 + $0x148] sm:$0xff] %vm3128, %v3015
  %3171 = vst.msk [vmem:[%s6 + $0x150] sm:$0xff] %vm3128, %v3020
  %3172 = vst.msk [vmem:[%s6 + $0x158] sm:$0xff] %vm3128, %v3025
  %3173 = vst.msk [vmem:[%s6 + $0x160] sm:$0xff] %vm3128, %v3030
  %3174 = vst.msk [vmem:[%s6 + $0x168] sm:$0xff] %vm3128, %v3035
  %3175 = vst.msk [vmem:[%s6 + $0x170] sm:$0xff] %vm3128, %v3040
  %3176 = vst.msk [vmem:[%s6 + $0x178] sm:$0xff] %vm3128, %v3045
  %3177 = vst.msk [vmem:[%s6 + $0x180] sm:$0xff] %vm3128, %v3050
  %3178 = vst.msk [vmem:[%s6 + $0x188] sm:$0xff] %vm3128, %v3055
  %3179 = vst.msk [vmem:[%s6 + $0x190] sm:$0xff] %vm3128, %v3060
  %3180 = vst.msk [vmem:[%s6 + $0x198] sm:$0xff] %vm3128, %v3065
  %3181 = vst.msk [vmem:[%s6 + $0x1a0] sm:$0xff] %vm3128, %v3070
  %3182 = vst.msk [vmem:[%s6 + $0x1a8] sm:$0xff] %vm3128, %v3075
  %3183 = vst.msk [vmem:[%s6 + $0x1b0] sm:$0xff] %vm3128, %v3080
  %3184 = vst.msk [vmem:[%s6 + $0x1b8] sm:$0xff] %vm3128, %v3085
  %3185 = vst.msk [vmem:[%s6 + $0x1c0] sm:$0xff] %vm3128, %v3090
  %3186 = vst.msk [vmem:[%s6 + $0x1c8] sm:$0xff] %vm3128, %v3095
  %3187 = vst.msk [vmem:[%s6 + $0x1d0] sm:$0xff] %vm3128, %v3100
  %3188 = vst.msk [vmem:[%s6 + $0x1d8] sm:$0xff] %vm3128, %v3105
  %3189 = vst.msk [vmem:[%s6 + $0x1e0] sm:$0xff] %vm3128, %v3110
  %3190 = vst.msk [vmem:[%s6 + $0x1e8] sm:$0xff] %vm3128, %v3115
  %3191 = vst.msk [vmem:[%s6 + $0x1f0] sm:$0xff] %vm3128, %v3120
  %3192 = vst.msk [vmem:[%s6 + $0x1f8] sm:$0xff] %vm3128, %v3125
  %3193 = vrot.lane.b32.xlu0 %v2476, 124
  %v3194 = vpop.permute.xlu0 %3193
  %3195 = vrot.lane.b32.xlu0 %v2477, 124
  %v3196 = vpop.permute.xlu0 %3195
  %3197 = vrot.lane.b32.xlu0 %v2478, 124
  %v3198 = vpop.permute.xlu0 %3197
  %3199 = vrot.lane.b32.xlu0 %v2479, 124
  %v3200 = vpop.permute.xlu0 %3199
  %3201 = vrot.lane.b32.xlu0 %v2480, 124
  %v3202 = vpop.permute.xlu0 %3201
  %3203 = vrot.lane.b32.xlu0 %v2481, 124
  %v3204 = vpop.permute.xlu0 %3203
  %3205 = vrot.lane.b32.xlu0 %v2482, 124
  %v3206 = vpop.permute.xlu0 %3205
  %3207 = vrot.lane.b32.xlu0 %v2483, 124
  %v3208 = vpop.permute.xlu0 %3207
  %3209 = vrot.lane.b32.xlu0 %v2484, 124
  %v3210 = vpop.permute.xlu0 %3209
  %3211 = vrot.lane.b32.xlu0 %v2485, 124
  %v3212 = vpop.permute.xlu0 %3211
  %3213 = vrot.lane.b32.xlu0 %v2486, 124
  %v3214 = vpop.permute.xlu0 %3213
  %3215 = vrot.lane.b32.xlu0 %v2487, 124
  %v3216 = vpop.permute.xlu0 %3215
  %3217 = vrot.lane.b32.xlu0 %v2488, 124
  %v3218 = vpop.permute.xlu0 %3217
  %3219 = vrot.lane.b32.xlu0 %v2489, 124
  %v3220 = vpop.permute.xlu0 %3219
  %3221 = vrot.lane.b32.xlu0 %v2490, 124
  %v3222 = vpop.permute.xlu0 %3221
  %3223 = vrot.lane.b32.xlu0 %v2491, 124
  %v3224 = vpop.permute.xlu0 %3223
  %3225 = vrot.lane.b32.xlu0 %v2492, 124
  %v3226 = vpop.permute.xlu0 %3225
  %3227 = vrot.lane.b32.xlu0 %v2493, 124
  %v3228 = vpop.permute.xlu0 %3227
  %3229 = vrot.lane.b32.xlu0 %v2494, 124
  %v3230 = vpop.permute.xlu0 %3229
  %3231 = vrot.lane.b32.xlu0 %v2495, 124
  %v3232 = vpop.permute.xlu0 %3231
  %3233 = vrot.lane.b32.xlu0 %v2496, 124
  %v3234 = vpop.permute.xlu0 %3233
  %3235 = vrot.lane.b32.xlu0 %v2497, 124
  %v3236 = vpop.permute.xlu0 %3235
  %3237 = vrot.lane.b32.xlu0 %v2498, 124
  %v3238 = vpop.permute.xlu0 %3237
  %3239 = vrot.lane.b32.xlu0 %v2499, 124
  %v3240 = vpop.permute.xlu0 %3239
  %3241 = vrot.lane.b32.xlu0 %v2500, 124
  %v3242 = vpop.permute.xlu0 %3241
  %3243 = vrot.lane.b32.xlu0 %v2501, 124
  %v3244 = vpop.permute.xlu0 %3243
  %3245 = vrot.lane.b32.xlu0 %v2502, 124
  %v3246 = vpop.permute.xlu0 %3245
  %3247 = vrot.lane.b32.xlu0 %v2503, 124
  %v3248 = vpop.permute.xlu0 %3247
  %3249 = vrot.lane.b32.xlu0 %v2504, 124
  %v3250 = vpop.permute.xlu0 %3249
  %3251 = vrot.lane.b32.xlu0 %v2505, 124
  %v3252 = vpop.permute.xlu0 %3251
  %3253 = vrot.lane.b32.xlu0 %v2506, 124
  %v3254 = vpop.permute.xlu0 %3253
  %3255 = vrot.lane.b32.xlu0 %v2507, 124
  %v3256 = vpop.permute.xlu0 %3255
  %3257 = vrot.lane.b32.xlu0 %v2508, 124
  %v3258 = vpop.permute.xlu0 %3257
  %3259 = vrot.lane.b32.xlu0 %v2509, 124
  %v3260 = vpop.permute.xlu0 %3259
  %3261 = vrot.lane.b32.xlu0 %v2510, 124
  %v3262 = vpop.permute.xlu0 %3261
  %3263 = vrot.lane.b32.xlu0 %v2511, 124
  %v3264 = vpop.permute.xlu0 %3263
  %3265 = vrot.lane.b32.xlu0 %v2512, 124
  %v3266 = vpop.permute.xlu0 %3265
  %3267 = vrot.lane.b32.xlu0 %v2513, 124
  %v3268 = vpop.permute.xlu0 %3267
  %3269 = vrot.lane.b32.xlu0 %v2514, 124
  %v3270 = vpop.permute.xlu0 %3269
  %3271 = vrot.lane.b32.xlu0 %v2515, 124
  %v3272 = vpop.permute.xlu0 %3271
  %3273 = vrot.lane.b32.xlu0 %v2516, 124
  %v3274 = vpop.permute.xlu0 %3273
  %3275 = vrot.lane.b32.xlu0 %v2517, 124
  %v3276 = vpop.permute.xlu0 %3275
  %3277 = vrot.lane.b32.xlu0 %v2518, 124
  %v3278 = vpop.permute.xlu0 %3277
  %3279 = vrot.lane.b32.xlu0 %v2519, 124
  %v3280 = vpop.permute.xlu0 %3279
  %3281 = vrot.lane.b32.xlu0 %v2520, 124
  %v3282 = vpop.permute.xlu0 %3281
  %3283 = vrot.lane.b32.xlu0 %v2521, 124
  %v3284 = vpop.permute.xlu0 %3283
  %3285 = vrot.lane.b32.xlu0 %v2522, 124
  %v3286 = vpop.permute.xlu0 %3285
  %3287 = vrot.lane.b32.xlu0 %v2523, 124
  %v3288 = vpop.permute.xlu0 %3287
  %3289 = vrot.lane.b32.xlu0 %v2524, 124
  %v3290 = vpop.permute.xlu0 %3289
  %3291 = vrot.lane.b32.xlu0 %v2525, 124
  %v3292 = vpop.permute.xlu0 %3291
  %3293 = vrot.lane.b32.xlu0 %v2526, 124
  %v3294 = vpop.permute.xlu0 %3293
  %3295 = vrot.lane.b32.xlu0 %v2527, 124
  %v3296 = vpop.permute.xlu0 %3295
  %3297 = vrot.lane.b32.xlu0 %v2528, 124
  %v3298 = vpop.permute.xlu0 %3297
  %3299 = vrot.lane.b32.xlu0 %v2529, 124
  %v3300 = vpop.permute.xlu0 %3299
  %3301 = vrot.lane.b32.xlu0 %v2530, 124
  %v3302 = vpop.permute.xlu0 %3301
  %3303 = vrot.lane.b32.xlu0 %v2531, 124
  %v3304 = vpop.permute.xlu0 %3303
  %3305 = vrot.lane.b32.xlu0 %v2532, 124
  %v3306 = vpop.permute.xlu0 %3305
  %3307 = vrot.lane.b32.xlu0 %v2533, 124
  %v3308 = vpop.permute.xlu0 %3307
  %3309 = vrot.lane.b32.xlu0 %v2534, 124
  %v3310 = vpop.permute.xlu0 %3309
  %3311 = vrot.lane.b32.xlu0 %v2535, 124
  %v3312 = vpop.permute.xlu0 %3311
  %3313 = vrot.lane.b32.xlu0 %v2536, 124
  %v3314 = vpop.permute.xlu0 %3313
  %3315 = vrot.lane.b32.xlu0 %v2537, 124
  %v3316 = vpop.permute.xlu0 %3315
  %3317 = vrot.lane.b32.xlu0 %v2538, 124
  %v3318 = vpop.permute.xlu0 %3317
  %3319 = vrot.lane.b32.xlu0 %v2539, 124
  %v3320 = vpop.permute.xlu0 %3319
  %v3321 = vsel %vm88, %v3194, 0
  %v3323 = vsel %vm88, %v3196, 0
  %v3325 = vsel %vm88, %v3198, 0
  %v3327 = vsel %vm88, %v3200, 0
  %v3329 = vsel %vm88, %v3202, 0
  %v3331 = vsel %vm88, %v3204, 0
  %v3333 = vsel %vm88, %v3206, 0
  %v3335 = vsel %vm88, %v3208, 0
  %v3337 = vsel %vm88, %v3210, 0
  %v3339 = vsel %vm88, %v3212, 0
  %v3341 = vsel %vm88, %v3214, 0
  %v3343 = vsel %vm88, %v3216, 0
  %v3345 = vsel %vm88, %v3218, 0
  %v3347 = vsel %vm88, %v3220, 0
  %v3349 = vsel %vm88, %v3222, 0
  %v3351 = vsel %vm88, %v3224, 0
  %v3353 = vsel %vm88, %v3226, 0
  %v3355 = vsel %vm88, %v3228, 0
  %v3357 = vsel %vm88, %v3230, 0
  %v3359 = vsel %vm88, %v3232, 0
  %v3361 = vsel %vm88, %v3234, 0
  %v3363 = vsel %vm88, %v3236, 0
  %v3365 = vsel %vm88, %v3238, 0
  %v3367 = vsel %vm88, %v3240, 0
  %v3369 = vsel %vm88, %v3242, 0
  %v3371 = vsel %vm88, %v3244, 0
  %v3373 = vsel %vm88, %v3246, 0
  %v3375 = vsel %vm88, %v3248, 0
  %v3377 = vsel %vm88, %v3250, 0
  %v3379 = vsel %vm88, %v3252, 0
  %v3381 = vsel %vm88, %v3254, 0
  %v3383 = vsel %vm88, %v3256, 0
  %v3385 = vsel %vm88, %v3258, 0
  %v3387 = vsel %vm88, %v3260, 0
  %v3389 = vsel %vm88, %v3262, 0
  %v3391 = vsel %vm88, %v3264, 0
  %v3393 = vsel %vm88, %v3266, 0
  %v3395 = vsel %vm88, %v3268, 0
  %v3397 = vsel %vm88, %v3270, 0
  %v3399 = vsel %vm88, %v3272, 0
  %v3401 = vsel %vm88, %v3274, 0
  %v3403 = vsel %vm88, %v3276, 0
  %v3405 = vsel %vm88, %v3278, 0
  %v3407 = vsel %vm88, %v3280, 0
  %v3409 = vsel %vm88, %v3282, 0
  %v3411 = vsel %vm88, %v3284, 0
  %v3413 = vsel %vm88, %v3286, 0
  %v3415 = vsel %vm88, %v3288, 0
  %v3417 = vsel %vm88, %v3290, 0
  %v3419 = vsel %vm88, %v3292, 0
  %v3421 = vsel %vm88, %v3294, 0
  %v3423 = vsel %vm88, %v3296, 0
  %v3425 = vsel %vm88, %v3298, 0
  %v3427 = vsel %vm88, %v3300, 0
  %v3429 = vsel %vm88, %v3302, 0
  %v3431 = vsel %vm88, %v3304, 0
  %v3433 = vsel %vm88, %v3306, 0
  %v3435 = vsel %vm88, %v3308, 0
  %v3437 = vsel %vm88, %v3310, 0
  %v3439 = vsel %vm88, %v3312, 0
  %v3441 = vsel %vm88, %v3314, 0
  %v3443 = vsel %vm88, %v3316, 0
  %v3445 = vsel %vm88, %v3318, 0
  %v3447 = vsel %vm88, %v3320, 0
  %3449 = vmatprep.subr.mxu0 0.0
  %3450 = vmatpush1.msra.mxu0 0.0
  %3451 = vmatprep.subr.mxu0 0.0
  %3452 = vmatpush1.msra.mxu0 0.0
  %3453 = vmatprep.subr.mxu0 0.0
  %3454 = vmatpush1.msra.mxu0 0.0
  %3455 = vmatprep.subr.mxu0 0.0
  %3456 = vmatpush1.msra.mxu0 0.0
  %3457 = vmatprep.subr.mxu0 0.0
  %3458 = vmatpush1.msra.mxu0 0.0
  %3459 = vmatprep.subr.mxu0 0.0
  %3460 = vmatpush1.msra.mxu0 0.0
  %3461 = vmatprep.subr.mxu0 0.0
  %3462 = vmatpush1.msra.mxu0 0.0
  %3463 = vmatprep.subr.mxu0 0.0
  %3464 = vmatpush1.msra.mxu0 0.0
  %3465 = vmatprep.subr.mxu0 0.0
  %3466 = vmatpush1.msra.mxu0 0.0
  %3467 = vmatprep.subr.mxu0 0.0
  %3468 = vmatpush1.msra.mxu0 0.0
  %3469 = vmatprep.subr.mxu0 0.0
  %3470 = vmatpush1.msra.mxu0 0.0
  %3471 = vmatprep.subr.mxu0 0.0
  %3472 = vmatpush1.msra.mxu0 0.0
  %3473 = vmatprep.subr.mxu0 0.0
  %3474 = vmatpush1.msra.mxu0 0.0
  %3475 = vmatprep.subr.mxu0 0.0
  %3476 = vmatpush1.msra.mxu0 0.0
  %3477 = vmatprep.subr.mxu0 0.0
  %3478 = vmatpush1.msra.mxu0 0.0
  %3479 = vmatprep.subr.mxu0 0.0
  %3480 = vmatpush1.msra.mxu0 %v2741
  %3481 = vmatprep.subr.mxu0 0.0
  %3482 = vmatpush2.msra.mxu0 0.0
  %3483 = vmatprep.subr.mxu0 0.0
  %3484 = vmatpush2.msra.mxu0 0.0
  %3485 = vmatprep.subr.mxu0 0.0
  %3486 = vmatpush2.msra.mxu0 0.0
  %3487 = vmatprep.subr.mxu0 0.0
  %3488 = vmatpush2.msra.mxu0 0.0
  %3489 = vmatprep.subr.mxu0 0.0
  %3490 = vmatpush2.msra.mxu0 0.0
  %3491 = vmatprep.subr.mxu0 0.0
  %3492 = vmatpush2.msra.mxu0 0.0
  %3493 = vmatprep.subr.mxu0 0.0
  %3494 = vmatpush2.msra.mxu0 0.0
  %3495 = vmatprep.subr.mxu0 0.0
  %3496 = vmatpush2.msra.mxu0 0.0
  %3497 = vmatprep.subr.mxu0 0.0
  %3498 = vmatpush2.msra.mxu0 0.0
  %3499 = vmatprep.subr.mxu0 0.0
  %3500 = vmatpush2.msra.mxu0 0.0
  %3501 = vmatprep.subr.mxu0 0.0
  %3502 = vmatpush2.msra.mxu0 0.0
  %3503 = vmatprep.subr.mxu0 0.0
  %3504 = vmatpush2.msra.mxu0 0.0
  %3505 = vmatprep.subr.mxu0 0.0
  %3506 = vmatpush2.msra.mxu0 0.0
  %3507 = vmatprep.subr.mxu0 0.0
  %3508 = vmatpush2.msra.mxu0 0.0
  %3509 = vmatprep.subr.mxu0 0.0
  %3510 = vmatpush2.msra.mxu0 0.0
  %3511 = vmatprep.subr.mxu0 0.0
  %3512 = vmatpush2.msra.mxu0 0.0
  %3513 = vmatprep.mubr.f32.mxu0 0.0
  %3514 = vmatmul.mubr.f32.gmra.mxu0 %v3321
  %v3515 = vpop.f32.mrf.mxu0
  %v3516 = vadd.f32 %v2546, %v3515
  %v3517 = vpop.f32.mrf.mxu0
  %3518 = vmatprep.mubr.f32.mxu0 0.0
  %3519 = vmatmul.mubr.f32.gmra.mxu0 %v3323
  %v3520 = vpop.f32.mrf.mxu0
  %v3521 = vadd.f32 %v2546, %v3520
  %v3522 = vpop.f32.mrf.mxu0
  %3523 = vmatprep.mubr.f32.mxu0 0.0
  %3524 = vmatmul.mubr.f32.gmra.mxu0 %v3325
  %v3525 = vpop.f32.mrf.mxu0
  %v3526 = vadd.f32 %v2546, %v3525
  %v3527 = vpop.f32.mrf.mxu0
  %3528 = vmatprep.mubr.f32.mxu0 0.0
  %3529 = vmatmul.mubr.f32.gmra.mxu0 %v3327
  %v3530 = vpop.f32.mrf.mxu0
  %v3531 = vadd.f32 %v2546, %v3530
  %v3532 = vpop.f32.mrf.mxu0
  %3533 = vmatprep.mubr.f32.mxu0 0.0
  %3534 = vmatmul.mubr.f32.gmra.mxu0 %v3329
  %v3535 = vpop.f32.mrf.mxu0
  %v3536 = vadd.f32 %v2546, %v3535
  %v3537 = vpop.f32.mrf.mxu0
  %3538 = vmatprep.mubr.f32.mxu0 0.0
  %3539 = vmatmul.mubr.f32.gmra.mxu0 %v3331
  %v3540 = vpop.f32.mrf.mxu0
  %v3541 = vadd.f32 %v2546, %v3540
  %v3542 = vpop.f32.mrf.mxu0
  %3543 = vmatprep.mubr.f32.mxu0 0.0
  %3544 = vmatmul.mubr.f32.gmra.mxu0 %v3333
  %v3545 = vpop.f32.mrf.mxu0
  %v3546 = vadd.f32 %v2546, %v3545
  %v3547 = vpop.f32.mrf.mxu0
  %3548 = vmatprep.mubr.f32.mxu0 0.0
  %3549 = vmatmul.mubr.f32.gmra.mxu0 %v3335
  %v3550 = vpop.f32.mrf.mxu0
  %v3551 = vadd.f32 %v2546, %v3550
  %v3552 = vpop.f32.mrf.mxu0
  %3553 = vmatprep.mubr.f32.mxu0 0.0
  %3554 = vmatmul.mubr.f32.gmra.mxu0 %v3337
  %v3555 = vpop.f32.mrf.mxu0
  %v3556 = vadd.f32 %v2546, %v3555
  %v3557 = vpop.f32.mrf.mxu0
  %3558 = vmatprep.mubr.f32.mxu0 0.0
  %3559 = vmatmul.mubr.f32.gmra.mxu0 %v3339
  %v3560 = vpop.f32.mrf.mxu0
  %v3561 = vadd.f32 %v2546, %v3560
  %v3562 = vpop.f32.mrf.mxu0
  %3563 = vmatprep.mubr.f32.mxu0 0.0
  %3564 = vmatmul.mubr.f32.gmra.mxu0 %v3341
  %v3565 = vpop.f32.mrf.mxu0
  %v3566 = vadd.f32 %v2546, %v3565
  %v3567 = vpop.f32.mrf.mxu0
  %3568 = vmatprep.mubr.f32.mxu0 0.0
  %3569 = vmatmul.mubr.f32.gmra.mxu0 %v3343
  %v3570 = vpop.f32.mrf.mxu0
  %v3571 = vadd.f32 %v2546, %v3570
  %v3572 = vpop.f32.mrf.mxu0
  %3573 = vmatprep.mubr.f32.mxu0 0.0
  %3574 = vmatmul.mubr.f32.gmra.mxu0 %v3345
  %v3575 = vpop.f32.mrf.mxu0
  %v3576 = vadd.f32 %v2546, %v3575
  %v3577 = vpop.f32.mrf.mxu0
  %3578 = vmatprep.mubr.f32.mxu0 0.0
  %3579 = vmatmul.mubr.f32.gmra.mxu0 %v3347
  %v3580 = vpop.f32.mrf.mxu0
  %v3581 = vadd.f32 %v2546, %v3580
  %v3582 = vpop.f32.mrf.mxu0
  %3583 = vmatprep.mubr.f32.mxu0 0.0
  %3584 = vmatmul.mubr.f32.gmra.mxu0 %v3349
  %v3585 = vpop.f32.mrf.mxu0
  %v3586 = vadd.f32 %v2546, %v3585
  %v3587 = vpop.f32.mrf.mxu0
  %3588 = vmatprep.mubr.f32.mxu0 0.0
  %3589 = vmatmul.mubr.f32.gmra.mxu0 %v3351
  %v3590 = vpop.f32.mrf.mxu0
  %v3591 = vadd.f32 %v2546, %v3590
  %v3592 = vpop.f32.mrf.mxu0
  %3593 = vmatprep.mubr.f32.mxu0 0.0
  %3594 = vmatmul.mubr.f32.gmra.mxu0 %v3353
  %v3595 = vpop.f32.mrf.mxu0
  %v3596 = vadd.f32 %v2546, %v3595
  %v3597 = vpop.f32.mrf.mxu0
  %3598 = vmatprep.mubr.f32.mxu0 0.0
  %3599 = vmatmul.mubr.f32.gmra.mxu0 %v3355
  %v3600 = vpop.f32.mrf.mxu0
  %v3601 = vadd.f32 %v2546, %v3600
  %v3602 = vpop.f32.mrf.mxu0
  %3603 = vmatprep.mubr.f32.mxu0 0.0
  %3604 = vmatmul.mubr.f32.gmra.mxu0 %v3357
  %v3605 = vpop.f32.mrf.mxu0
  %v3606 = vadd.f32 %v2546, %v3605
  %v3607 = vpop.f32.mrf.mxu0
  %3608 = vmatprep.mubr.f32.mxu0 0.0
  %3609 = vmatmul.mubr.f32.gmra.mxu0 %v3359
  %v3610 = vpop.f32.mrf.mxu0
  %v3611 = vadd.f32 %v2546, %v3610
  %v3612 = vpop.f32.mrf.mxu0
  %3613 = vmatprep.mubr.f32.mxu0 0.0
  %3614 = vmatmul.mubr.f32.gmra.mxu0 %v3361
  %v3615 = vpop.f32.mrf.mxu0
  %v3616 = vadd.f32 %v2546, %v3615
  %v3617 = vpop.f32.mrf.mxu0
  %3618 = vmatprep.mubr.f32.mxu0 0.0
  %3619 = vmatmul.mubr.f32.gmra.mxu0 %v3363
  %v3620 = vpop.f32.mrf.mxu0
  %v3621 = vadd.f32 %v2546, %v3620
  %v3622 = vpop.f32.mrf.mxu0
  %3623 = vmatprep.mubr.f32.mxu0 0.0
  %3624 = vmatmul.mubr.f32.gmra.mxu0 %v3365
  %v3625 = vpop.f32.mrf.mxu0
  %v3626 = vadd.f32 %v2546, %v3625
  %v3627 = vpop.f32.mrf.mxu0
  %3628 = vmatprep.mubr.f32.mxu0 0.0
  %3629 = vmatmul.mubr.f32.gmra.mxu0 %v3367
  %v3630 = vpop.f32.mrf.mxu0
  %v3631 = vadd.f32 %v2546, %v3630
  %v3632 = vpop.f32.mrf.mxu0
  %3633 = vmatprep.mubr.f32.mxu0 0.0
  %3634 = vmatmul.mubr.f32.gmra.mxu0 %v3369
  %v3635 = vpop.f32.mrf.mxu0
  %v3636 = vadd.f32 %v2546, %v3635
  %v3637 = vpop.f32.mrf.mxu0
  %3638 = vmatprep.mubr.f32.mxu0 0.0
  %3639 = vmatmul.mubr.f32.gmra.mxu0 %v3371
  %v3640 = vpop.f32.mrf.mxu0
  %v3641 = vadd.f32 %v2546, %v3640
  %v3642 = vpop.f32.mrf.mxu0
  %3643 = vmatprep.mubr.f32.mxu0 0.0
  %3644 = vmatmul.mubr.f32.gmra.mxu0 %v3373
  %v3645 = vpop.f32.mrf.mxu0
  %v3646 = vadd.f32 %v2546, %v3645
  %v3647 = vpop.f32.mrf.mxu0
  %3648 = vmatprep.mubr.f32.mxu0 0.0
  %3649 = vmatmul.mubr.f32.gmra.mxu0 %v3375
  %v3650 = vpop.f32.mrf.mxu0
  %v3651 = vadd.f32 %v2546, %v3650
  %v3652 = vpop.f32.mrf.mxu0
  %3653 = vmatprep.mubr.f32.mxu0 0.0
  %3654 = vmatmul.mubr.f32.gmra.mxu0 %v3377
  %v3655 = vpop.f32.mrf.mxu0
  %v3656 = vadd.f32 %v2546, %v3655
  %v3657 = vpop.f32.mrf.mxu0
  %3658 = vmatprep.mubr.f32.mxu0 0.0
  %3659 = vmatmul.mubr.f32.gmra.mxu0 %v3379
  %v3660 = vpop.f32.mrf.mxu0
  %v3661 = vadd.f32 %v2546, %v3660
  %v3662 = vpop.f32.mrf.mxu0
  %3663 = vmatprep.mubr.f32.mxu0 0.0
  %3664 = vmatmul.mubr.f32.gmra.mxu0 %v3381
  %v3665 = vpop.f32.mrf.mxu0
  %v3666 = vadd.f32 %v2546, %v3665
  %v3667 = vpop.f32.mrf.mxu0
  %3668 = vmatprep.mubr.f32.mxu0 0.0
  %3669 = vmatmul.mubr.f32.gmra.mxu0 %v3383
  %v3670 = vpop.f32.mrf.mxu0
  %v3671 = vadd.f32 %v2546, %v3670
  %v3672 = vpop.f32.mrf.mxu0
  %3673 = vmatprep.mubr.f32.mxu0 0.0
  %3674 = vmatmul.mubr.f32.gmra.mxu0 %v3385
  %v3675 = vpop.f32.mrf.mxu0
  %v3676 = vadd.f32 %v2546, %v3675
  %v3677 = vpop.f32.mrf.mxu0
  %3678 = vmatprep.mubr.f32.mxu0 0.0
  %3679 = vmatmul.mubr.f32.gmra.mxu0 %v3387
  %v3680 = vpop.f32.mrf.mxu0
  %v3681 = vadd.f32 %v2546, %v3680
  %v3682 = vpop.f32.mrf.mxu0
  %3683 = vmatprep.mubr.f32.mxu0 0.0
  %3684 = vmatmul.mubr.f32.gmra.mxu0 %v3389
  %v3685 = vpop.f32.mrf.mxu0
  %v3686 = vadd.f32 %v2546, %v3685
  %v3687 = vpop.f32.mrf.mxu0
  %3688 = vmatprep.mubr.f32.mxu0 0.0
  %3689 = vmatmul.mubr.f32.gmra.mxu0 %v3391
  %v3690 = vpop.f32.mrf.mxu0
  %v3691 = vadd.f32 %v2546, %v3690
  %v3692 = vpop.f32.mrf.mxu0
  %3693 = vmatprep.mubr.f32.mxu0 0.0
  %3694 = vmatmul.mubr.f32.gmra.mxu0 %v3393
  %v3695 = vpop.f32.mrf.mxu0
  %v3696 = vadd.f32 %v2546, %v3695
  %v3697 = vpop.f32.mrf.mxu0
  %3698 = vmatprep.mubr.f32.mxu0 0.0
  %3699 = vmatmul.mubr.f32.gmra.mxu0 %v3395
  %v3700 = vpop.f32.mrf.mxu0
  %v3701 = vadd.f32 %v2546, %v3700
  %v3702 = vpop.f32.mrf.mxu0
  %3703 = vmatprep.mubr.f32.mxu0 0.0
  %3704 = vmatmul.mubr.f32.gmra.mxu0 %v3397
  %v3705 = vpop.f32.mrf.mxu0
  %v3706 = vadd.f32 %v2546, %v3705
  %v3707 = vpop.f32.mrf.mxu0
  %3708 = vmatprep.mubr.f32.mxu0 0.0
  %3709 = vmatmul.mubr.f32.gmra.mxu0 %v3399
  %v3710 = vpop.f32.mrf.mxu0
  %v3711 = vadd.f32 %v2546, %v3710
  %v3712 = vpop.f32.mrf.mxu0
  %3713 = vmatprep.mubr.f32.mxu0 0.0
  %3714 = vmatmul.mubr.f32.gmra.mxu0 %v3401
  %v3715 = vpop.f32.mrf.mxu0
  %v3716 = vadd.f32 %v2546, %v3715
  %v3717 = vpop.f32.mrf.mxu0
  %3718 = vmatprep.mubr.f32.mxu0 0.0
  %3719 = vmatmul.mubr.f32.gmra.mxu0 %v3403
  %v3720 = vpop.f32.mrf.mxu0
  %v3721 = vadd.f32 %v2546, %v3720
  %v3722 = vpop.f32.mrf.mxu0
  %3723 = vmatprep.mubr.f32.mxu0 0.0
  %3724 = vmatmul.mubr.f32.gmra.mxu0 %v3405
  %v3725 = vpop.f32.mrf.mxu0
  %v3726 = vadd.f32 %v2546, %v3725
  %v3727 = vpop.f32.mrf.mxu0
  %3728 = vmatprep.mubr.f32.mxu0 0.0
  %3729 = vmatmul.mubr.f32.gmra.mxu0 %v3407
  %v3730 = vpop.f32.mrf.mxu0
  %v3731 = vadd.f32 %v2546, %v3730
  %v3732 = vpop.f32.mrf.mxu0
  %3733 = vmatprep.mubr.f32.mxu0 0.0
  %3734 = vmatmul.mubr.f32.gmra.mxu0 %v3409
  %v3735 = vpop.f32.mrf.mxu0
  %v3736 = vadd.f32 %v2546, %v3735
  %v3737 = vpop.f32.mrf.mxu0
  %3738 = vmatprep.mubr.f32.mxu0 0.0
  %3739 = vmatmul.mubr.f32.gmra.mxu0 %v3411
  %v3740 = vpop.f32.mrf.mxu0
  %v3741 = vadd.f32 %v2546, %v3740
  %v3742 = vpop.f32.mrf.mxu0
  %3743 = vmatprep.mubr.f32.mxu0 0.0
  %3744 = vmatmul.mubr.f32.gmra.mxu0 %v3413
  %v3745 = vpop.f32.mrf.mxu0
  %v3746 = vadd.f32 %v2546, %v3745
  %v3747 = vpop.f32.mrf.mxu0
  %3748 = vmatprep.mubr.f32.mxu0 0.0
  %3749 = vmatmul.mubr.f32.gmra.mxu0 %v3415
  %v3750 = vpop.f32.mrf.mxu0
  %v3751 = vadd.f32 %v2546, %v3750
  %v3752 = vpop.f32.mrf.mxu0
  %3753 = vmatprep.mubr.f32.mxu0 0.0
  %3754 = vmatmul.mubr.f32.gmra.mxu0 %v3417
  %v3755 = vpop.f32.mrf.mxu0
  %v3756 = vadd.f32 %v2546, %v3755
  %v3757 = vpop.f32.mrf.mxu0
  %3758 = vmatprep.mubr.f32.mxu0 0.0
  %3759 = vmatmul.mubr.f32.gmra.mxu0 %v3419
  %v3760 = vpop.f32.mrf.mxu0
  %v3761 = vadd.f32 %v2546, %v3760
  %v3762 = vpop.f32.mrf.mxu0
  %3763 = vmatprep.mubr.f32.mxu0 0.0
  %3764 = vmatmul.mubr.f32.gmra.mxu0 %v3421
  %v3765 = vpop.f32.mrf.mxu0
  %v3766 = vadd.f32 %v2546, %v3765
  %v3767 = vpop.f32.mrf.mxu0
  %3768 = vmatprep.mubr.f32.mxu0 0.0
  %3769 = vmatmul.mubr.f32.gmra.mxu0 %v3423
  %v3770 = vpop.f32.mrf.mxu0
  %v3771 = vadd.f32 %v2546, %v3770
  %v3772 = vpop.f32.mrf.mxu0
  %3773 = vmatprep.mubr.f32.mxu0 0.0
  %3774 = vmatmul.mubr.f32.gmra.mxu0 %v3425
  %v3775 = vpop.f32.mrf.mxu0
  %v3776 = vadd.f32 %v2546, %v3775
  %v3777 = vpop.f32.mrf.mxu0
  %3778 = vmatprep.mubr.f32.mxu0 0.0
  %3779 = vmatmul.mubr.f32.gmra.mxu0 %v3427
  %v3780 = vpop.f32.mrf.mxu0
  %v3781 = vadd.f32 %v2546, %v3780
  %v3782 = vpop.f32.mrf.mxu0
  %3783 = vmatprep.mubr.f32.mxu0 0.0
  %3784 = vmatmul.mubr.f32.gmra.mxu0 %v3429
  %v3785 = vpop.f32.mrf.mxu0
  %v3786 = vadd.f32 %v2546, %v3785
  %v3787 = vpop.f32.mrf.mxu0
  %3788 = vmatprep.mubr.f32.mxu0 0.0
  %3789 = vmatmul.mubr.f32.gmra.mxu0 %v3431
  %v3790 = vpop.f32.mrf.mxu0
  %v3791 = vadd.f32 %v2546, %v3790
  %v3792 = vpop.f32.mrf.mxu0
  %3793 = vmatprep.mubr.f32.mxu0 0.0
  %3794 = vmatmul.mubr.f32.gmra.mxu0 %v3433
  %v3795 = vpop.f32.mrf.mxu0
  %v3796 = vadd.f32 %v2546, %v3795
  %v3797 = vpop.f32.mrf.mxu0
  %3798 = vmatprep.mubr.f32.mxu0 0.0
  %3799 = vmatmul.mubr.f32.gmra.mxu0 %v3435
  %v3800 = vpop.f32.mrf.mxu0
  %v3801 = vadd.f32 %v2546, %v3800
  %v3802 = vpop.f32.mrf.mxu0
  %3803 = vmatprep.mubr.f32.mxu0 0.0
  %3804 = vmatmul.mubr.f32.gmra.mxu0 %v3437
  %v3805 = vpop.f32.mrf.mxu0
  %v3806 = vadd.f32 %v2546, %v3805
  %v3807 = vpop.f32.mrf.mxu0
  %3808 = vmatprep.mubr.f32.mxu0 0.0
  %3809 = vmatmul.mubr.f32.gmra.mxu0 %v3439
  %v3810 = vpop.f32.mrf.mxu0
  %v3811 = vadd.f32 %v2546, %v3810
  %v3812 = vpop.f32.mrf.mxu0
  %3813 = vmatprep.mubr.f32.mxu0 0.0
  %3814 = vmatmul.mubr.f32.gmra.mxu0 %v3441
  %v3815 = vpop.f32.mrf.mxu0
  %v3816 = vadd.f32 %v2546, %v3815
  %v3817 = vpop.f32.mrf.mxu0
  %3818 = vmatprep.mubr.f32.mxu0 0.0
  %3819 = vmatmul.mubr.f32.gmra.mxu0 %v3443
  %v3820 = vpop.f32.mrf.mxu0
  %v3821 = vadd.f32 %v2546, %v3820
  %v3822 = vpop.f32.mrf.mxu0
  %3823 = vmatprep.mubr.f32.mxu0 0.0
  %3824 = vmatmul.mubr.f32.gmra.mxu0 %v3445
  %v3825 = vpop.f32.mrf.mxu0
  %v3826 = vadd.f32 %v2546, %v3825
  %v3827 = vpop.f32.mrf.mxu0
  %3828 = vmatprep.mubr.f32.mxu0 0.0
  %3829 = vmatmul.mubr.f32.gmra.mxu0 %v3447
  %v3830 = vpop.f32.mrf.mxu0
  %v3831 = vadd.f32 %v2546, %v3830
  %v3832 = vpop.f32.mrf.mxu0
  %3833 = vdwg.mxu0
  %3898 = vrot.lane.b32.xlu0 %v3516, 16
  %v3899 = vpop.permute.xlu0 %3898
  %3900 = vrot.lane.b32.xlu0 %v3521, 16
  %v3901 = vpop.permute.xlu0 %3900
  %3902 = vrot.lane.b32.xlu0 %v3526, 16
  %v3903 = vpop.permute.xlu0 %3902
  %3904 = vrot.lane.b32.xlu0 %v3531, 16
  %v3905 = vpop.permute.xlu0 %3904
  %3906 = vrot.lane.b32.xlu0 %v3536, 16
  %v3907 = vpop.permute.xlu0 %3906
  %3908 = vrot.lane.b32.xlu0 %v3541, 16
  %v3909 = vpop.permute.xlu0 %3908
  %3910 = vrot.lane.b32.xlu0 %v3546, 16
  %v3911 = vpop.permute.xlu0 %3910
  %3912 = vrot.lane.b32.xlu0 %v3551, 16
  %v3913 = vpop.permute.xlu0 %3912
  %3914 = vrot.lane.b32.xlu0 %v3556, 16
  %v3915 = vpop.permute.xlu0 %3914
  %3916 = vrot.lane.b32.xlu0 %v3561, 16
  %v3917 = vpop.permute.xlu0 %3916
  %3918 = vrot.lane.b32.xlu0 %v3566, 16
  %v3919 = vpop.permute.xlu0 %3918
  %3920 = vrot.lane.b32.xlu0 %v3571, 16
  %v3921 = vpop.permute.xlu0 %3920
  %3922 = vrot.lane.b32.xlu0 %v3576, 16
  %v3923 = vpop.permute.xlu0 %3922
  %3924 = vrot.lane.b32.xlu0 %v3581, 16
  %v3925 = vpop.permute.xlu0 %3924
  %3926 = vrot.lane.b32.xlu0 %v3586, 16
  %v3927 = vpop.permute.xlu0 %3926
  %3928 = vrot.lane.b32.xlu0 %v3591, 16
  %v3929 = vpop.permute.xlu0 %3928
  %3930 = vrot.lane.b32.xlu0 %v3596, 16
  %v3931 = vpop.permute.xlu0 %3930
  %3932 = vrot.lane.b32.xlu0 %v3601, 16
  %v3933 = vpop.permute.xlu0 %3932
  %3934 = vrot.lane.b32.xlu0 %v3606, 16
  %v3935 = vpop.permute.xlu0 %3934
  %3936 = vrot.lane.b32.xlu0 %v3611, 16
  %v3937 = vpop.permute.xlu0 %3936
  %3938 = vrot.lane.b32.xlu0 %v3616, 16
  %v3939 = vpop.permute.xlu0 %3938
  %3940 = vrot.lane.b32.xlu0 %v3621, 16
  %v3941 = vpop.permute.xlu0 %3940
  %3942 = vrot.lane.b32.xlu0 %v3626, 16
  %v3943 = vpop.permute.xlu0 %3942
  %3944 = vrot.lane.b32.xlu0 %v3631, 16
  %v3945 = vpop.permute.xlu0 %3944
  %3946 = vrot.lane.b32.xlu0 %v3636, 16
  %v3947 = vpop.permute.xlu0 %3946
  %3948 = vrot.lane.b32.xlu0 %v3641, 16
  %v3949 = vpop.permute.xlu0 %3948
  %3950 = vrot.lane.b32.xlu0 %v3646, 16
  %v3951 = vpop.permute.xlu0 %3950
  %3952 = vrot.lane.b32.xlu0 %v3651, 16
  %v3953 = vpop.permute.xlu0 %3952
  %3954 = vrot.lane.b32.xlu0 %v3656, 16
  %v3955 = vpop.permute.xlu0 %3954
  %3956 = vrot.lane.b32.xlu0 %v3661, 16
  %v3957 = vpop.permute.xlu0 %3956
  %3958 = vrot.lane.b32.xlu0 %v3666, 16
  %v3959 = vpop.permute.xlu0 %3958
  %3960 = vrot.lane.b32.xlu0 %v3671, 16
  %v3961 = vpop.permute.xlu0 %3960
  %3962 = vrot.lane.b32.xlu0 %v3676, 16
  %v3963 = vpop.permute.xlu0 %3962
  %3964 = vrot.lane.b32.xlu0 %v3681, 16
  %v3965 = vpop.permute.xlu0 %3964
  %3966 = vrot.lane.b32.xlu0 %v3686, 16
  %v3967 = vpop.permute.xlu0 %3966
  %3968 = vrot.lane.b32.xlu0 %v3691, 16
  %v3969 = vpop.permute.xlu0 %3968
  %3970 = vrot.lane.b32.xlu0 %v3696, 16
  %v3971 = vpop.permute.xlu0 %3970
  %3972 = vrot.lane.b32.xlu0 %v3701, 16
  %v3973 = vpop.permute.xlu0 %3972
  %3974 = vrot.lane.b32.xlu0 %v3706, 16
  %v3975 = vpop.permute.xlu0 %3974
  %3976 = vrot.lane.b32.xlu0 %v3711, 16
  %v3977 = vpop.permute.xlu0 %3976
  %3978 = vrot.lane.b32.xlu0 %v3716, 16
  %v3979 = vpop.permute.xlu0 %3978
  %3980 = vrot.lane.b32.xlu0 %v3721, 16
  %v3981 = vpop.permute.xlu0 %3980
  %3982 = vrot.lane.b32.xlu0 %v3726, 16
  %v3983 = vpop.permute.xlu0 %3982
  %3984 = vrot.lane.b32.xlu0 %v3731, 16
  %v3985 = vpop.permute.xlu0 %3984
  %3986 = vrot.lane.b32.xlu0 %v3736, 16
  %v3987 = vpop.permute.xlu0 %3986
  %3988 = vrot.lane.b32.xlu0 %v3741, 16
  %v3989 = vpop.permute.xlu0 %3988
  %3990 = vrot.lane.b32.xlu0 %v3746, 16
  %v3991 = vpop.permute.xlu0 %3990
  %3992 = vrot.lane.b32.xlu0 %v3751, 16
  %v3993 = vpop.permute.xlu0 %3992
  %3994 = vrot.lane.b32.xlu0 %v3756, 16
  %v3995 = vpop.permute.xlu0 %3994
  %3996 = vrot.lane.b32.xlu0 %v3761, 16
  %v3997 = vpop.permute.xlu0 %3996
  %3998 = vrot.lane.b32.xlu0 %v3766, 16
  %v3999 = vpop.permute.xlu0 %3998
  %4000 = vrot.lane.b32.xlu0 %v3771, 16
  %v4001 = vpop.permute.xlu0 %4000
  %4002 = vrot.lane.b32.xlu0 %v3776, 16
  %v4003 = vpop.permute.xlu0 %4002
  %4004 = vrot.lane.b32.xlu0 %v3781, 16
  %v4005 = vpop.permute.xlu0 %4004
  %4006 = vrot.lane.b32.xlu0 %v3786, 16
  %v4007 = vpop.permute.xlu0 %4006
  %4008 = vrot.lane.b32.xlu0 %v3791, 16
  %v4009 = vpop.permute.xlu0 %4008
  %4010 = vrot.lane.b32.xlu0 %v3796, 16
  %v4011 = vpop.permute.xlu0 %4010
  %4012 = vrot.lane.b32.xlu0 %v3801, 16
  %v4013 = vpop.permute.xlu0 %4012
  %4014 = vrot.lane.b32.xlu0 %v3806, 16
  %v4015 = vpop.permute.xlu0 %4014
  %4016 = vrot.lane.b32.xlu0 %v3811, 16
  %v4017 = vpop.permute.xlu0 %4016
  %4018 = vrot.lane.b32.xlu0 %v3816, 16
  %v4019 = vpop.permute.xlu0 %4018
  %4020 = vrot.lane.b32.xlu0 %v3821, 16
  %v4021 = vpop.permute.xlu0 %4020
  %4022 = vrot.lane.b32.xlu0 %v3826, 16
  %v4023 = vpop.permute.xlu0 %4022
  %4024 = vrot.lane.b32.xlu0 %v3831, 16
  %v4025 = vpop.permute.xlu0 %4024
  %vm4090 = vcmask 261248
  %4091 = vst.msk [vmem:[%s6] sm:$0xff] %vm4090, %v3899
  %4092 = vst.msk [vmem:[%s6 + $0x8] sm:$0xff] %vm4090, %v3901
  %4093 = vst.msk [vmem:[%s6 + $0x10] sm:$0xff] %vm4090, %v3903
  %4094 = vst.msk [vmem:[%s6 + $0x18] sm:$0xff] %vm4090, %v3905
  %4095 = vst.msk [vmem:[%s6 + $0x20] sm:$0xff] %vm4090, %v3907
  %4096 = vst.msk [vmem:[%s6 + $0x28] sm:$0xff] %vm4090, %v3909
  %4097 = vst.msk [vmem:[%s6 + $0x30] sm:$0xff] %vm4090, %v3911
  %4098 = vst.msk [vmem:[%s6 + $0x38] sm:$0xff] %vm4090, %v3913
  %4099 = vst.msk [vmem:[%s6 + $0x40] sm:$0xff] %vm4090, %v3915
  %4100 = vst.msk [vmem:[%s6 + $0x48] sm:$0xff] %vm4090, %v3917
  %4101 = vst.msk [vmem:[%s6 + $0x50] sm:$0xff] %vm4090, %v3919
  %4102 = vst.msk [vmem:[%s6 + $0x58] sm:$0xff] %vm4090, %v3921
  %4103 = vst.msk [vmem:[%s6 + $0x60] sm:$0xff] %vm4090, %v3923
  %4104 = vst.msk [vmem:[%s6 + $0x68] sm:$0xff] %vm4090, %v3925
  %4105 = vst.msk [vmem:[%s6 + $0x70] sm:$0xff] %vm4090, %v3927
  %4106 = vst.msk [vmem:[%s6 + $0x78] sm:$0xff] %vm4090, %v3929
  %4107 = vst.msk [vmem:[%s6 + $0x80] sm:$0xff] %vm4090, %v3931
  %4108 = vst.msk [vmem:[%s6 + $0x88] sm:$0xff] %vm4090, %v3933
  %4109 = vst.msk [vmem:[%s6 + $0x90] sm:$0xff] %vm4090, %v3935
  %4110 = vst.msk [vmem:[%s6 + $0x98] sm:$0xff] %vm4090, %v3937
  %4111 = vst.msk [vmem:[%s6 + $0xa0] sm:$0xff] %vm4090, %v3939
  %4112 = vst.msk [vmem:[%s6 + $0xa8] sm:$0xff] %vm4090, %v3941
  %4113 = vst.msk [vmem:[%s6 + $0xb0] sm:$0xff] %vm4090, %v3943
  %4114 = vst.msk [vmem:[%s6 + $0xb8] sm:$0xff] %vm4090, %v3945
  %4115 = vst.msk [vmem:[%s6 + $0xc0] sm:$0xff] %vm4090, %v3947
  %4116 = vst.msk [vmem:[%s6 + $0xc8] sm:$0xff] %vm4090, %v3949
  %4117 = vst.msk [vmem:[%s6 + $0xd0] sm:$0xff] %vm4090, %v3951
  %4118 = vst.msk [vmem:[%s6 + $0xd8] sm:$0xff] %vm4090, %v3953
  %4119 = vst.msk [vmem:[%s6 + $0xe0] sm:$0xff] %vm4090, %v3955
  %4120 = vst.msk [vmem:[%s6 + $0xe8] sm:$0xff] %vm4090, %v3957
  %4121 = vst.msk [vmem:[%s6 + $0xf0] sm:$0xff] %vm4090, %v3959
  %4122 = vst.msk [vmem:[%s6 + $0xf8] sm:$0xff] %vm4090, %v3961
  %4123 = vst.msk [vmem:[%s6 + $0x100] sm:$0xff] %vm4090, %v3963
  %4124 = vst.msk [vmem:[%s6 + $0x108] sm:$0xff] %vm4090, %v3965
  %4125 = vst.msk [vmem:[%s6 + $0x110] sm:$0xff] %vm4090, %v3967
  %4126 = vst.msk [vmem:[%s6 + $0x118] sm:$0xff] %vm4090, %v3969
  %4127 = vst.msk [vmem:[%s6 + $0x120] sm:$0xff] %vm4090, %v3971
  %4128 = vst.msk [vmem:[%s6 + $0x128] sm:$0xff] %vm4090, %v3973
  %4129 = vst.msk [vmem:[%s6 + $0x130] sm:$0xff] %vm4090, %v3975
  %4130 = vst.msk [vmem:[%s6 + $0x138] sm:$0xff] %vm4090, %v3977
  %4131 = vst.msk [vmem:[%s6 + $0x140] sm:$0xff] %vm4090, %v3979
  %4132 = vst.msk [vmem:[%s6 + $0x148] sm:$0xff] %vm4090, %v3981
  %4133 = vst.msk [vmem:[%s6 + $0x150] sm:$0xff] %vm4090, %v3983
  %4134 = vst.msk [vmem:[%s6 + $0x158] sm:$0xff] %vm4090, %v3985
  %4135 = vst.msk [vmem:[%s6 + $0x160] sm:$0xff] %vm4090, %v3987
  %4136 = vst.msk [vmem:[%s6 + $0x168] sm:$0xff] %vm4090, %v3989
  %4137 = vst.msk [vmem:[%s6 + $0x170] sm:$0xff] %vm4090, %v3991
  %4138 = vst.msk [vmem:[%s6 + $0x178] sm:$0xff] %vm4090, %v3993
  %4139 = vst.msk [vmem:[%s6 + $0x180] sm:$0xff] %vm4090, %v3995
  %4140 = vst.msk [vmem:[%s6 + $0x188] sm:$0xff] %vm4090, %v3997
  %4141 = vst.msk [vmem:[%s6 + $0x190] sm:$0xff] %vm4090, %v3999
  %4142 = vst.msk [vmem:[%s6 + $0x198] sm:$0xff] %vm4090, %v4001
  %4143 = vst.msk [vmem:[%s6 + $0x1a0] sm:$0xff] %vm4090, %v4003
  %4144 = vst.msk [vmem:[%s6 + $0x1a8] sm:$0xff] %vm4090, %v4005
  %4145 = vst.msk [vmem:[%s6 + $0x1b0] sm:$0xff] %vm4090, %v4007
  %4146 = vst.msk [vmem:[%s6 + $0x1b8] sm:$0xff] %vm4090, %v4009
  %4147 = vst.msk [vmem:[%s6 + $0x1c0] sm:$0xff] %vm4090, %v4011
  %4148 = vst.msk [vmem:[%s6 + $0x1c8] sm:$0xff] %vm4090, %v4013
  %4149 = vst.msk [vmem:[%s6 + $0x1d0] sm:$0xff] %vm4090, %v4015
  %4150 = vst.msk [vmem:[%s6 + $0x1d8] sm:$0xff] %vm4090, %v4017
  %4151 = vst.msk [vmem:[%s6 + $0x1e0] sm:$0xff] %vm4090, %v4019
  %4152 = vst.msk [vmem:[%s6 + $0x1e8] sm:$0xff] %vm4090, %v4021
  %4153 = vst.msk [vmem:[%s6 + $0x1f0] sm:$0xff] %vm4090, %v4023
  %4154 = vst.msk [vmem:[%s6 + $0x1f8] sm:$0xff] %vm4090, %v4025
  %4155 = vrot.lane.b32.xlu0 %v2476, 120
  %v4156 = vpop.permute.xlu0 %4155
  %4157 = vrot.lane.b32.xlu0 %v2477, 120
  %v4158 = vpop.permute.xlu0 %4157
  %4159 = vrot.lane.b32.xlu0 %v2478, 120
  %v4160 = vpop.permute.xlu0 %4159
  %4161 = vrot.lane.b32.xlu0 %v2479, 120
  %v4162 = vpop.permute.xlu0 %4161
  %4163 = vrot.lane.b32.xlu0 %v2480, 120
  %v4164 = vpop.permute.xlu0 %4163
  %4165 = vrot.lane.b32.xlu0 %v2481, 120
  %v4166 = vpop.permute.xlu0 %4165
  %4167 = vrot.lane.b32.xlu0 %v2482, 120
  %v4168 = vpop.permute.xlu0 %4167
  %4169 = vrot.lane.b32.xlu0 %v2483, 120
  %v4170 = vpop.permute.xlu0 %4169
  %4171 = vrot.lane.b32.xlu0 %v2484, 120
  %v4172 = vpop.permute.xlu0 %4171
  %4173 = vrot.lane.b32.xlu0 %v2485, 120
  %v4174 = vpop.permute.xlu0 %4173
  %4175 = vrot.lane.b32.xlu0 %v2486, 120
  %v4176 = vpop.permute.xlu0 %4175
  %4177 = vrot.lane.b32.xlu0 %v2487, 120
  %v4178 = vpop.permute.xlu0 %4177
  %4179 = vrot.lane.b32.xlu0 %v2488, 120
  %v4180 = vpop.permute.xlu0 %4179
  %4181 = vrot.lane.b32.xlu0 %v2489, 120
  %v4182 = vpop.permute.xlu0 %4181
  %4183 = vrot.lane.b32.xlu0 %v2490, 120
  %v4184 = vpop.permute.xlu0 %4183
  %4185 = vrot.lane.b32.xlu0 %v2491, 120
  %v4186 = vpop.permute.xlu0 %4185
  %4187 = vrot.lane.b32.xlu0 %v2492, 120
  %v4188 = vpop.permute.xlu0 %4187
  %4189 = vrot.lane.b32.xlu0 %v2493, 120
  %v4190 = vpop.permute.xlu0 %4189
  %4191 = vrot.lane.b32.xlu0 %v2494, 120
  %v4192 = vpop.permute.xlu0 %4191
  %4193 = vrot.lane.b32.xlu0 %v2495, 120
  %v4194 = vpop.permute.xlu0 %4193
  %4195 = vrot.lane.b32.xlu0 %v2496, 120
  %v4196 = vpop.permute.xlu0 %4195
  %4197 = vrot.lane.b32.xlu0 %v2497, 120
  %v4198 = vpop.permute.xlu0 %4197
  %4199 = vrot.lane.b32.xlu0 %v2498, 120
  %v4200 = vpop.permute.xlu0 %4199
  %4201 = vrot.lane.b32.xlu0 %v2499, 120
  %v4202 = vpop.permute.xlu0 %4201
  %4203 = vrot.lane.b32.xlu0 %v2500, 120
  %v4204 = vpop.permute.xlu0 %4203
  %4205 = vrot.lane.b32.xlu0 %v2501, 120
  %v4206 = vpop.permute.xlu0 %4205
  %4207 = vrot.lane.b32.xlu0 %v2502, 120
  %v4208 = vpop.permute.xlu0 %4207
  %4209 = vrot.lane.b32.xlu0 %v2503, 120
  %v4210 = vpop.permute.xlu0 %4209
  %4211 = vrot.lane.b32.xlu0 %v2504, 120
  %v4212 = vpop.permute.xlu0 %4211
  %4213 = vrot.lane.b32.xlu0 %v2505, 120
  %v4214 = vpop.permute.xlu0 %4213
  %4215 = vrot.lane.b32.xlu0 %v2506, 120
  %v4216 = vpop.permute.xlu0 %4215
  %4217 = vrot.lane.b32.xlu0 %v2507, 120
  %v4218 = vpop.permute.xlu0 %4217
  %4219 = vrot.lane.b32.xlu0 %v2508, 120
  %v4220 = vpop.permute.xlu0 %4219
  %4221 = vrot.lane.b32.xlu0 %v2509, 120
  %v4222 = vpop.permute.xlu0 %4221
  %4223 = vrot.lane.b32.xlu0 %v2510, 120
  %v4224 = vpop.permute.xlu0 %4223
  %4225 = vrot.lane.b32.xlu0 %v2511, 120
  %v4226 = vpop.permute.xlu0 %4225
  %4227 = vrot.lane.b32.xlu0 %v2512, 120
  %v4228 = vpop.permute.xlu0 %4227
  %4229 = vrot.lane.b32.xlu0 %v2513, 120
  %v4230 = vpop.permute.xlu0 %4229
  %4231 = vrot.lane.b32.xlu0 %v2514, 120
  %v4232 = vpop.permute.xlu0 %4231
  %4233 = vrot.lane.b32.xlu0 %v2515, 120
  %v4234 = vpop.permute.xlu0 %4233
  %4235 = vrot.lane.b32.xlu0 %v2516, 120
  %v4236 = vpop.permute.xlu0 %4235
  %4237 = vrot.lane.b32.xlu0 %v2517, 120
  %v4238 = vpop.permute.xlu0 %4237
  %4239 = vrot.lane.b32.xlu0 %v2518, 120
  %v4240 = vpop.permute.xlu0 %4239
  %4241 = vrot.lane.b32.xlu0 %v2519, 120
  %v4242 = vpop.permute.xlu0 %4241
  %4243 = vrot.lane.b32.xlu0 %v2520, 120
  %v4244 = vpop.permute.xlu0 %4243
  %4245 = vrot.lane.b32.xlu0 %v2521, 120
  %v4246 = vpop.permute.xlu0 %4245
  %4247 = vrot.lane.b32.xlu0 %v2522, 120
  %v4248 = vpop.permute.xlu0 %4247
  %4249 = vrot.lane.b32.xlu0 %v2523, 120
  %v4250 = vpop.permute.xlu0 %4249
  %4251 = vrot.lane.b32.xlu0 %v2524, 120
  %v4252 = vpop.permute.xlu0 %4251
  %4253 = vrot.lane.b32.xlu0 %v2525, 120
  %v4254 = vpop.permute.xlu0 %4253
  %4255 = vrot.lane.b32.xlu0 %v2526, 120
  %v4256 = vpop.permute.xlu0 %4255
  %4257 = vrot.lane.b32.xlu0 %v2527, 120
  %v4258 = vpop.permute.xlu0 %4257
  %4259 = vrot.lane.b32.xlu0 %v2528, 120
  %v4260 = vpop.permute.xlu0 %4259
  %4261 = vrot.lane.b32.xlu0 %v2529, 120
  %v4262 = vpop.permute.xlu0 %4261
  %4263 = vrot.lane.b32.xlu0 %v2530, 120
  %v4264 = vpop.permute.xlu0 %4263
  %4265 = vrot.lane.b32.xlu0 %v2531, 120
  %v4266 = vpop.permute.xlu0 %4265
  %4267 = vrot.lane.b32.xlu0 %v2532, 120
  %v4268 = vpop.permute.xlu0 %4267
  %4269 = vrot.lane.b32.xlu0 %v2533, 120
  %v4270 = vpop.permute.xlu0 %4269
  %4271 = vrot.lane.b32.xlu0 %v2534, 120
  %v4272 = vpop.permute.xlu0 %4271
  %4273 = vrot.lane.b32.xlu0 %v2535, 120
  %v4274 = vpop.permute.xlu0 %4273
  %4275 = vrot.lane.b32.xlu0 %v2536, 120
  %v4276 = vpop.permute.xlu0 %4275
  %4277 = vrot.lane.b32.xlu0 %v2537, 120
  %v4278 = vpop.permute.xlu0 %4277
  %4279 = vrot.lane.b32.xlu0 %v2538, 120
  %v4280 = vpop.permute.xlu0 %4279
  %4281 = vrot.lane.b32.xlu0 %v2539, 120
  %v4282 = vpop.permute.xlu0 %4281
  %v4283 = vsel %vm88, %v4156, 0
  %v4285 = vsel %vm88, %v4158, 0
  %v4287 = vsel %vm88, %v4160, 0
  %v4289 = vsel %vm88, %v4162, 0
  %v4291 = vsel %vm88, %v4164, 0
  %v4293 = vsel %vm88, %v4166, 0
  %v4295 = vsel %vm88, %v4168, 0
  %v4297 = vsel %vm88, %v4170, 0
  %v4299 = vsel %vm88, %v4172, 0
  %v4301 = vsel %vm88, %v4174, 0
  %v4303 = vsel %vm88, %v4176, 0
  %v4305 = vsel %vm88, %v4178, 0
  %v4307 = vsel %vm88, %v4180, 0
  %v4309 = vsel %vm88, %v4182, 0
  %v4311 = vsel %vm88, %v4184, 0
  %v4313 = vsel %vm88, %v4186, 0
  %v4315 = vsel %vm88, %v4188, 0
  %v4317 = vsel %vm88, %v4190, 0
  %v4319 = vsel %vm88, %v4192, 0
  %v4321 = vsel %vm88, %v4194, 0
  %v4323 = vsel %vm88, %v4196, 0
  %v4325 = vsel %vm88, %v4198, 0
  %v4327 = vsel %vm88, %v4200, 0
  %v4329 = vsel %vm88, %v4202, 0
  %v4331 = vsel %vm88, %v4204, 0
  %v4333 = vsel %vm88, %v4206, 0
  %v4335 = vsel %vm88, %v4208, 0
  %v4337 = vsel %vm88, %v4210, 0
  %v4339 = vsel %vm88, %v4212, 0
  %v4341 = vsel %vm88, %v4214, 0
  %v4343 = vsel %vm88, %v4216, 0
  %v4345 = vsel %vm88, %v4218, 0
  %v4347 = vsel %vm88, %v4220, 0
  %v4349 = vsel %vm88, %v4222, 0
  %v4351 = vsel %vm88, %v4224, 0
  %v4353 = vsel %vm88, %v4226, 0
  %v4355 = vsel %vm88, %v4228, 0
  %v4357 = vsel %vm88, %v4230, 0
  %v4359 = vsel %vm88, %v4232, 0
  %v4361 = vsel %vm88, %v4234, 0
  %v4363 = vsel %vm88, %v4236, 0
  %v4365 = vsel %vm88, %v4238, 0
  %v4367 = vsel %vm88, %v4240, 0
  %v4369 = vsel %vm88, %v4242, 0
  %v4371 = vsel %vm88, %v4244, 0
  %v4373 = vsel %vm88, %v4246, 0
  %v4375 = vsel %vm88, %v4248, 0
  %v4377 = vsel %vm88, %v4250, 0
  %v4379 = vsel %vm88, %v4252, 0
  %v4381 = vsel %vm88, %v4254, 0
  %v4383 = vsel %vm88, %v4256, 0
  %v4385 = vsel %vm88, %v4258, 0
  %v4387 = vsel %vm88, %v4260, 0
  %v4389 = vsel %vm88, %v4262, 0
  %v4391 = vsel %vm88, %v4264, 0
  %v4393 = vsel %vm88, %v4266, 0
  %v4395 = vsel %vm88, %v4268, 0
  %v4397 = vsel %vm88, %v4270, 0
  %v4399 = vsel %vm88, %v4272, 0
  %v4401 = vsel %vm88, %v4274, 0
  %v4403 = vsel %vm88, %v4276, 0
  %v4405 = vsel %vm88, %v4278, 0
  %v4407 = vsel %vm88, %v4280, 0
  %v4409 = vsel %vm88, %v4282, 0
  %4411 = vmatprep.subr.mxu0 0.0
  %4412 = vmatpush1.msra.mxu0 0.0
  %4413 = vmatprep.subr.mxu0 0.0
  %4414 = vmatpush1.msra.mxu0 0.0
  %4415 = vmatprep.subr.mxu0 0.0
  %4416 = vmatpush1.msra.mxu0 0.0
  %4417 = vmatprep.subr.mxu0 0.0
  %4418 = vmatpush1.msra.mxu0 0.0
  %4419 = vmatprep.subr.mxu0 0.0
  %4420 = vmatpush1.msra.mxu0 0.0
  %4421 = vmatprep.subr.mxu0 0.0
  %4422 = vmatpush1.msra.mxu0 0.0
  %4423 = vmatprep.subr.mxu0 0.0
  %4424 = vmatpush1.msra.mxu0 0.0
  %4425 = vmatprep.subr.mxu0 0.0
  %4426 = vmatpush1.msra.mxu0 0.0
  %4427 = vmatprep.subr.mxu0 0.0
  %4428 = vmatpush1.msra.mxu0 0.0
  %4429 = vmatprep.subr.mxu0 0.0
  %4430 = vmatpush1.msra.mxu0 0.0
  %4431 = vmatprep.subr.mxu0 0.0
  %4432 = vmatpush1.msra.mxu0 0.0
  %4433 = vmatprep.subr.mxu0 0.0
  %4434 = vmatpush1.msra.mxu0 0.0
  %4435 = vmatprep.subr.mxu0 0.0
  %4436 = vmatpush1.msra.mxu0 0.0
  %4437 = vmatprep.subr.mxu0 0.0
  %4438 = vmatpush1.msra.mxu0 0.0
  %4439 = vmatprep.subr.mxu0 0.0
  %4440 = vmatpush1.msra.mxu0 0.0
  %4441 = vmatprep.subr.mxu0 0.0
  %4442 = vmatpush1.msra.mxu0 %v2741
  %4443 = vmatprep.subr.mxu0 0.0
  %4444 = vmatpush2.msra.mxu0 0.0
  %4445 = vmatprep.subr.mxu0 0.0
  %4446 = vmatpush2.msra.mxu0 0.0
  %4447 = vmatprep.subr.mxu0 0.0
  %4448 = vmatpush2.msra.mxu0 0.0
  %4449 = vmatprep.subr.mxu0 0.0
  %4450 = vmatpush2.msra.mxu0 0.0
  %4451 = vmatprep.subr.mxu0 0.0
  %4452 = vmatpush2.msra.mxu0 0.0
  %4453 = vmatprep.subr.mxu0 0.0
  %4454 = vmatpush2.msra.mxu0 0.0
  %4455 = vmatprep.subr.mxu0 0.0
  %4456 = vmatpush2.msra.mxu0 0.0
  %4457 = vmatprep.subr.mxu0 0.0
  %4458 = vmatpush2.msra.mxu0 0.0
  %4459 = vmatprep.subr.mxu0 0.0
  %4460 = vmatpush2.msra.mxu0 0.0
  %4461 = vmatprep.subr.mxu0 0.0
  %4462 = vmatpush2.msra.mxu0 0.0
  %4463 = vmatprep.subr.mxu0 0.0
  %4464 = vmatpush2.msra.mxu0 0.0
  %4465 = vmatprep.subr.mxu0 0.0
  %4466 = vmatpush2.msra.mxu0 0.0
  %4467 = vmatprep.subr.mxu0 0.0
  %4468 = vmatpush2.msra.mxu0 0.0
  %4469 = vmatprep.subr.mxu0 0.0
  %4470 = vmatpush2.msra.mxu0 0.0
  %4471 = vmatprep.subr.mxu0 0.0
  %4472 = vmatpush2.msra.mxu0 0.0
  %4473 = vmatprep.subr.mxu0 0.0
  %4474 = vmatpush2.msra.mxu0 0.0
  %4475 = vmatprep.mubr.f32.mxu0 0.0
  %4476 = vmatmul.mubr.f32.gmra.mxu0 %v4283
  %v4477 = vpop.f32.mrf.mxu0
  %v4478 = vadd.f32 %v2546, %v4477
  %v4479 = vpop.f32.mrf.mxu0
  %4480 = vmatprep.mubr.f32.mxu0 0.0
  %4481 = vmatmul.mubr.f32.gmra.mxu0 %v4285
  %v4482 = vpop.f32.mrf.mxu0
  %v4483 = vadd.f32 %v2546, %v4482
  %v4484 = vpop.f32.mrf.mxu0
  %4485 = vmatprep.mubr.f32.mxu0 0.0
  %4486 = vmatmul.mubr.f32.gmra.mxu0 %v4287
  %v4487 = vpop.f32.mrf.mxu0
  %v4488 = vadd.f32 %v2546, %v4487
  %v4489 = vpop.f32.mrf.mxu0
  %4490 = vmatprep.mubr.f32.mxu0 0.0
  %4491 = vmatmul.mubr.f32.gmra.mxu0 %v4289
  %v4492 = vpop.f32.mrf.mxu0
  %v4493 = vadd.f32 %v2546, %v4492
  %v4494 = vpop.f32.mrf.mxu0
  %4495 = vmatprep.mubr.f32.mxu0 0.0
  %4496 = vmatmul.mubr.f32.gmra.mxu0 %v4291
  %v4497 = vpop.f32.mrf.mxu0
  %v4498 = vadd.f32 %v2546, %v4497
  %v4499 = vpop.f32.mrf.mxu0
  %4500 = vmatprep.mubr.f32.mxu0 0.0
  %4501 = vmatmul.mubr.f32.gmra.mxu0 %v4293
  %v4502 = vpop.f32.mrf.mxu0
  %v4503 = vadd.f32 %v2546, %v4502
  %v4504 = vpop.f32.mrf.mxu0
  %4505 = vmatprep.mubr.f32.mxu0 0.0
  %4506 = vmatmul.mubr.f32.gmra.mxu0 %v4295
  %v4507 = vpop.f32.mrf.mxu0
  %v4508 = vadd.f32 %v2546, %v4507
  %v4509 = vpop.f32.mrf.mxu0
  %4510 = vmatprep.mubr.f32.mxu0 0.0
  %4511 = vmatmul.mubr.f32.gmra.mxu0 %v4297
  %v4512 = vpop.f32.mrf.mxu0
  %v4513 = vadd.f32 %v2546, %v4512
  %v4514 = vpop.f32.mrf.mxu0
  %4515 = vmatprep.mubr.f32.mxu0 0.0
  %4516 = vmatmul.mubr.f32.gmra.mxu0 %v4299
  %v4517 = vpop.f32.mrf.mxu0
  %v4518 = vadd.f32 %v2546, %v4517
  %v4519 = vpop.f32.mrf.mxu0
  %4520 = vmatprep.mubr.f32.mxu0 0.0
  %4521 = vmatmul.mubr.f32.gmra.mxu0 %v4301
  %v4522 = vpop.f32.mrf.mxu0
  %v4523 = vadd.f32 %v2546, %v4522
  %v4524 = vpop.f32.mrf.mxu0
  %4525 = vmatprep.mubr.f32.mxu0 0.0
  %4526 = vmatmul.mubr.f32.gmra.mxu0 %v4303
  %v4527 = vpop.f32.mrf.mxu0
  %v4528 = vadd.f32 %v2546, %v4527
  %v4529 = vpop.f32.mrf.mxu0
  %4530 = vmatprep.mubr.f32.mxu0 0.0
  %4531 = vmatmul.mubr.f32.gmra.mxu0 %v4305
  %v4532 = vpop.f32.mrf.mxu0
  %v4533 = vadd.f32 %v2546, %v4532
  %v4534 = vpop.f32.mrf.mxu0
  %4535 = vmatprep.mubr.f32.mxu0 0.0
  %4536 = vmatmul.mubr.f32.gmra.mxu0 %v4307
  %v4537 = vpop.f32.mrf.mxu0
  %v4538 = vadd.f32 %v2546, %v4537
  %v4539 = vpop.f32.mrf.mxu0
  %4540 = vmatprep.mubr.f32.mxu0 0.0
  %4541 = vmatmul.mubr.f32.gmra.mxu0 %v4309
  %v4542 = vpop.f32.mrf.mxu0
  %v4543 = vadd.f32 %v2546, %v4542
  %v4544 = vpop.f32.mrf.mxu0
  %4545 = vmatprep.mubr.f32.mxu0 0.0
  %4546 = vmatmul.mubr.f32.gmra.mxu0 %v4311
  %v4547 = vpop.f32.mrf.mxu0
  %v4548 = vadd.f32 %v2546, %v4547
  %v4549 = vpop.f32.mrf.mxu0
  %4550 = vmatprep.mubr.f32.mxu0 0.0
  %4551 = vmatmul.mubr.f32.gmra.mxu0 %v4313
  %v4552 = vpop.f32.mrf.mxu0
  %v4553 = vadd.f32 %v2546, %v4552
  %v4554 = vpop.f32.mrf.mxu0
  %4555 = vmatprep.mubr.f32.mxu0 0.0
  %4556 = vmatmul.mubr.f32.gmra.mxu0 %v4315
  %v4557 = vpop.f32.mrf.mxu0
  %v4558 = vadd.f32 %v2546, %v4557
  %v4559 = vpop.f32.mrf.mxu0
  %4560 = vmatprep.mubr.f32.mxu0 0.0
  %4561 = vmatmul.mubr.f32.gmra.mxu0 %v4317
  %v4562 = vpop.f32.mrf.mxu0
  %v4563 = vadd.f32 %v2546, %v4562
  %v4564 = vpop.f32.mrf.mxu0
  %4565 = vmatprep.mubr.f32.mxu0 0.0
  %4566 = vmatmul.mubr.f32.gmra.mxu0 %v4319
  %v4567 = vpop.f32.mrf.mxu0
  %v4568 = vadd.f32 %v2546, %v4567
  %v4569 = vpop.f32.mrf.mxu0
  %4570 = vmatprep.mubr.f32.mxu0 0.0
  %4571 = vmatmul.mubr.f32.gmra.mxu0 %v4321
  %v4572 = vpop.f32.mrf.mxu0
  %v4573 = vadd.f32 %v2546, %v4572
  %v4574 = vpop.f32.mrf.mxu0
  %4575 = vmatprep.mubr.f32.mxu0 0.0
  %4576 = vmatmul.mubr.f32.gmra.mxu0 %v4323
  %v4577 = vpop.f32.mrf.mxu0
  %v4578 = vadd.f32 %v2546, %v4577
  %v4579 = vpop.f32.mrf.mxu0
  %4580 = vmatprep.mubr.f32.mxu0 0.0
  %4581 = vmatmul.mubr.f32.gmra.mxu0 %v4325
  %v4582 = vpop.f32.mrf.mxu0
  %v4583 = vadd.f32 %v2546, %v4582
  %v4584 = vpop.f32.mrf.mxu0
  %4585 = vmatprep.mubr.f32.mxu0 0.0
  %4586 = vmatmul.mubr.f32.gmra.mxu0 %v4327
  %v4587 = vpop.f32.mrf.mxu0
  %v4588 = vadd.f32 %v2546, %v4587
  %v4589 = vpop.f32.mrf.mxu0
  %4590 = vmatprep.mubr.f32.mxu0 0.0
  %4591 = vmatmul.mubr.f32.gmra.mxu0 %v4329
  %v4592 = vpop.f32.mrf.mxu0
  %v4593 = vadd.f32 %v2546, %v4592
  %v4594 = vpop.f32.mrf.mxu0
  %4595 = vmatprep.mubr.f32.mxu0 0.0
  %4596 = vmatmul.mubr.f32.gmra.mxu0 %v4331
  %v4597 = vpop.f32.mrf.mxu0
  %v4598 = vadd.f32 %v2546, %v4597
  %v4599 = vpop.f32.mrf.mxu0
  %4600 = vmatprep.mubr.f32.mxu0 0.0
  %4601 = vmatmul.mubr.f32.gmra.mxu0 %v4333
  %v4602 = vpop.f32.mrf.mxu0
  %v4603 = vadd.f32 %v2546, %v4602
  %v4604 = vpop.f32.mrf.mxu0
  %4605 = vmatprep.mubr.f32.mxu0 0.0
  %4606 = vmatmul.mubr.f32.gmra.mxu0 %v4335
  %v4607 = vpop.f32.mrf.mxu0
  %v4608 = vadd.f32 %v2546, %v4607
  %v4609 = vpop.f32.mrf.mxu0
  %4610 = vmatprep.mubr.f32.mxu0 0.0
  %4611 = vmatmul.mubr.f32.gmra.mxu0 %v4337
  %v4612 = vpop.f32.mrf.mxu0
  %v4613 = vadd.f32 %v2546, %v4612
  %v4614 = vpop.f32.mrf.mxu0
  %4615 = vmatprep.mubr.f32.mxu0 0.0
  %4616 = vmatmul.mubr.f32.gmra.mxu0 %v4339
  %v4617 = vpop.f32.mrf.mxu0
  %v4618 = vadd.f32 %v2546, %v4617
  %v4619 = vpop.f32.mrf.mxu0
  %4620 = vmatprep.mubr.f32.mxu0 0.0
  %4621 = vmatmul.mubr.f32.gmra.mxu0 %v4341
  %v4622 = vpop.f32.mrf.mxu0
  %v4623 = vadd.f32 %v2546, %v4622
  %v4624 = vpop.f32.mrf.mxu0
  %4625 = vmatprep.mubr.f32.mxu0 0.0
  %4626 = vmatmul.mubr.f32.gmra.mxu0 %v4343
  %v4627 = vpop.f32.mrf.mxu0
  %v4628 = vadd.f32 %v2546, %v4627
  %v4629 = vpop.f32.mrf.mxu0
  %4630 = vmatprep.mubr.f32.mxu0 0.0
  %4631 = vmatmul.mubr.f32.gmra.mxu0 %v4345
  %v4632 = vpop.f32.mrf.mxu0
  %v4633 = vadd.f32 %v2546, %v4632
  %v4634 = vpop.f32.mrf.mxu0
  %4635 = vmatprep.mubr.f32.mxu0 0.0
  %4636 = vmatmul.mubr.f32.gmra.mxu0 %v4347
  %v4637 = vpop.f32.mrf.mxu0
  %v4638 = vadd.f32 %v2546, %v4637
  %v4639 = vpop.f32.mrf.mxu0
  %4640 = vmatprep.mubr.f32.mxu0 0.0
  %4641 = vmatmul.mubr.f32.gmra.mxu0 %v4349
  %v4642 = vpop.f32.mrf.mxu0
  %v4643 = vadd.f32 %v2546, %v4642
  %v4644 = vpop.f32.mrf.mxu0
  %4645 = vmatprep.mubr.f32.mxu0 0.0
  %4646 = vmatmul.mubr.f32.gmra.mxu0 %v4351
  %v4647 = vpop.f32.mrf.mxu0
  %v4648 = vadd.f32 %v2546, %v4647
  %v4649 = vpop.f32.mrf.mxu0
  %4650 = vmatprep.mubr.f32.mxu0 0.0
  %4651 = vmatmul.mubr.f32.gmra.mxu0 %v4353
  %v4652 = vpop.f32.mrf.mxu0
  %v4653 = vadd.f32 %v2546, %v4652
  %v4654 = vpop.f32.mrf.mxu0
  %4655 = vmatprep.mubr.f32.mxu0 0.0
  %4656 = vmatmul.mubr.f32.gmra.mxu0 %v4355
  %v4657 = vpop.f32.mrf.mxu0
  %v4658 = vadd.f32 %v2546, %v4657
  %v4659 = vpop.f32.mrf.mxu0
  %4660 = vmatprep.mubr.f32.mxu0 0.0
  %4661 = vmatmul.mubr.f32.gmra.mxu0 %v4357
  %v4662 = vpop.f32.mrf.mxu0
  %v4663 = vadd.f32 %v2546, %v4662
  %v4664 = vpop.f32.mrf.mxu0
  %4665 = vmatprep.mubr.f32.mxu0 0.0
  %4666 = vmatmul.mubr.f32.gmra.mxu0 %v4359
  %v4667 = vpop.f32.mrf.mxu0
  %v4668 = vadd.f32 %v2546, %v4667
  %v4669 = vpop.f32.mrf.mxu0
  %4670 = vmatprep.mubr.f32.mxu0 0.0
  %4671 = vmatmul.mubr.f32.gmra.mxu0 %v4361
  %v4672 = vpop.f32.mrf.mxu0
  %v4673 = vadd.f32 %v2546, %v4672
  %v4674 = vpop.f32.mrf.mxu0
  %4675 = vmatprep.mubr.f32.mxu0 0.0
  %4676 = vmatmul.mubr.f32.gmra.mxu0 %v4363
  %v4677 = vpop.f32.mrf.mxu0
  %v4678 = vadd.f32 %v2546, %v4677
  %v4679 = vpop.f32.mrf.mxu0
  %4680 = vmatprep.mubr.f32.mxu0 0.0
  %4681 = vmatmul.mubr.f32.gmra.mxu0 %v4365
  %v4682 = vpop.f32.mrf.mxu0
  %v4683 = vadd.f32 %v2546, %v4682
  %v4684 = vpop.f32.mrf.mxu0
  %4685 = vmatprep.mubr.f32.mxu0 0.0
  %4686 = vmatmul.mubr.f32.gmra.mxu0 %v4367
  %v4687 = vpop.f32.mrf.mxu0
  %v4688 = vadd.f32 %v2546, %v4687
  %v4689 = vpop.f32.mrf.mxu0
  %4690 = vmatprep.mubr.f32.mxu0 0.0
  %4691 = vmatmul.mubr.f32.gmra.mxu0 %v4369
  %v4692 = vpop.f32.mrf.mxu0
  %v4693 = vadd.f32 %v2546, %v4692
  %v4694 = vpop.f32.mrf.mxu0
  %4695 = vmatprep.mubr.f32.mxu0 0.0
  %4696 = vmatmul.mubr.f32.gmra.mxu0 %v4371
  %v4697 = vpop.f32.mrf.mxu0
  %v4698 = vadd.f32 %v2546, %v4697
  %v4699 = vpop.f32.mrf.mxu0
  %4700 = vmatprep.mubr.f32.mxu0 0.0
  %4701 = vmatmul.mubr.f32.gmra.mxu0 %v4373
  %v4702 = vpop.f32.mrf.mxu0
  %v4703 = vadd.f32 %v2546, %v4702
  %v4704 = vpop.f32.mrf.mxu0
  %4705 = vmatprep.mubr.f32.mxu0 0.0
  %4706 = vmatmul.mubr.f32.gmra.mxu0 %v4375
  %v4707 = vpop.f32.mrf.mxu0
  %v4708 = vadd.f32 %v2546, %v4707
  %v4709 = vpop.f32.mrf.mxu0
  %4710 = vmatprep.mubr.f32.mxu0 0.0
  %4711 = vmatmul.mubr.f32.gmra.mxu0 %v4377
  %v4712 = vpop.f32.mrf.mxu0
  %v4713 = vadd.f32 %v2546, %v4712
  %v4714 = vpop.f32.mrf.mxu0
  %4715 = vmatprep.mubr.f32.mxu0 0.0
  %4716 = vmatmul.mubr.f32.gmra.mxu0 %v4379
  %v4717 = vpop.f32.mrf.mxu0
  %v4718 = vadd.f32 %v2546, %v4717
  %v4719 = vpop.f32.mrf.mxu0
  %4720 = vmatprep.mubr.f32.mxu0 0.0
  %4721 = vmatmul.mubr.f32.gmra.mxu0 %v4381
  %v4722 = vpop.f32.mrf.mxu0
  %v4723 = vadd.f32 %v2546, %v4722
  %v4724 = vpop.f32.mrf.mxu0
  %4725 = vmatprep.mubr.f32.mxu0 0.0
  %4726 = vmatmul.mubr.f32.gmra.mxu0 %v4383
  %v4727 = vpop.f32.mrf.mxu0
  %v4728 = vadd.f32 %v2546, %v4727
  %v4729 = vpop.f32.mrf.mxu0
  %4730 = vmatprep.mubr.f32.mxu0 0.0
  %4731 = vmatmul.mubr.f32.gmra.mxu0 %v4385
  %v4732 = vpop.f32.mrf.mxu0
  %v4733 = vadd.f32 %v2546, %v4732
  %v4734 = vpop.f32.mrf.mxu0
  %4735 = vmatprep.mubr.f32.mxu0 0.0
  %4736 = vmatmul.mubr.f32.gmra.mxu0 %v4387
  %v4737 = vpop.f32.mrf.mxu0
  %v4738 = vadd.f32 %v2546, %v4737
  %v4739 = vpop.f32.mrf.mxu0
  %4740 = vmatprep.mubr.f32.mxu0 0.0
  %4741 = vmatmul.mubr.f32.gmra.mxu0 %v4389
  %v4742 = vpop.f32.mrf.mxu0
  %v4743 = vadd.f32 %v2546, %v4742
  %v4744 = vpop.f32.mrf.mxu0
  %4745 = vmatprep.mubr.f32.mxu0 0.0
  %4746 = vmatmul.mubr.f32.gmra.mxu0 %v4391
  %v4747 = vpop.f32.mrf.mxu0
  %v4748 = vadd.f32 %v2546, %v4747
  %v4749 = vpop.f32.mrf.mxu0
  %4750 = vmatprep.mubr.f32.mxu0 0.0
  %4751 = vmatmul.mubr.f32.gmra.mxu0 %v4393
  %v4752 = vpop.f32.mrf.mxu0
  %v4753 = vadd.f32 %v2546, %v4752
  %v4754 = vpop.f32.mrf.mxu0
  %4755 = vmatprep.mubr.f32.mxu0 0.0
  %4756 = vmatmul.mubr.f32.gmra.mxu0 %v4395
  %v4757 = vpop.f32.mrf.mxu0
  %v4758 = vadd.f32 %v2546, %v4757
  %v4759 = vpop.f32.mrf.mxu0
  %4760 = vmatprep.mubr.f32.mxu0 0.0
  %4761 = vmatmul.mubr.f32.gmra.mxu0 %v4397
  %v4762 = vpop.f32.mrf.mxu0
  %v4763 = vadd.f32 %v2546, %v4762
  %v4764 = vpop.f32.mrf.mxu0
  %4765 = vmatprep.mubr.f32.mxu0 0.0
  %4766 = vmatmul.mubr.f32.gmra.mxu0 %v4399
  %v4767 = vpop.f32.mrf.mxu0
  %v4768 = vadd.f32 %v2546, %v4767
  %v4769 = vpop.f32.mrf.mxu0
  %4770 = vmatprep.mubr.f32.mxu0 0.0
  %4771 = vmatmul.mubr.f32.gmra.mxu0 %v4401
  %v4772 = vpop.f32.mrf.mxu0
  %v4773 = vadd.f32 %v2546, %v4772
  %v4774 = vpop.f32.mrf.mxu0
  %4775 = vmatprep.mubr.f32.mxu0 0.0
  %4776 = vmatmul.mubr.f32.gmra.mxu0 %v4403
  %v4777 = vpop.f32.mrf.mxu0
  %v4778 = vadd.f32 %v2546, %v4777
  %v4779 = vpop.f32.mrf.mxu0
  %4780 = vmatprep.mubr.f32.mxu0 0.0
  %4781 = vmatmul.mubr.f32.gmra.mxu0 %v4405
  %v4782 = vpop.f32.mrf.mxu0
  %v4783 = vadd.f32 %v2546, %v4782
  %v4784 = vpop.f32.mrf.mxu0
  %4785 = vmatprep.mubr.f32.mxu0 0.0
  %4786 = vmatmul.mubr.f32.gmra.mxu0 %v4407
  %v4787 = vpop.f32.mrf.mxu0
  %v4788 = vadd.f32 %v2546, %v4787
  %v4789 = vpop.f32.mrf.mxu0
  %4790 = vmatprep.mubr.f32.mxu0 0.0
  %4791 = vmatmul.mubr.f32.gmra.mxu0 %v4409
  %v4792 = vpop.f32.mrf.mxu0
  %v4793 = vadd.f32 %v2546, %v4792
  %v4794 = vpop.f32.mrf.mxu0
  %4795 = vdwg.mxu0
  %4860 = vrot.lane.b32.xlu0 %v4478, 32
  %v4861 = vpop.permute.xlu0 %4860
  %4862 = vrot.lane.b32.xlu0 %v4483, 32
  %v4863 = vpop.permute.xlu0 %4862
  %4864 = vrot.lane.b32.xlu0 %v4488, 32
  %v4865 = vpop.permute.xlu0 %4864
  %4866 = vrot.lane.b32.xlu0 %v4493, 32
  %v4867 = vpop.permute.xlu0 %4866
  %4868 = vrot.lane.b32.xlu0 %v4498, 32
  %v4869 = vpop.permute.xlu0 %4868
  %4870 = vrot.lane.b32.xlu0 %v4503, 32
  %v4871 = vpop.permute.xlu0 %4870
  %4872 = vrot.lane.b32.xlu0 %v4508, 32
  %v4873 = vpop.permute.xlu0 %4872
  %4874 = vrot.lane.b32.xlu0 %v4513, 32
  %v4875 = vpop.permute.xlu0 %4874
  %4876 = vrot.lane.b32.xlu0 %v4518, 32
  %v4877 = vpop.permute.xlu0 %4876
  %4878 = vrot.lane.b32.xlu0 %v4523, 32
  %v4879 = vpop.permute.xlu0 %4878
  %4880 = vrot.lane.b32.xlu0 %v4528, 32
  %v4881 = vpop.permute.xlu0 %4880
  %4882 = vrot.lane.b32.xlu0 %v4533, 32
  %v4883 = vpop.permute.xlu0 %4882
  %4884 = vrot.lane.b32.xlu0 %v4538, 32
  %v4885 = vpop.permute.xlu0 %4884
  %4886 = vrot.lane.b32.xlu0 %v4543, 32
  %v4887 = vpop.permute.xlu0 %4886
  %4888 = vrot.lane.b32.xlu0 %v4548, 32
  %v4889 = vpop.permute.xlu0 %4888
  %4890 = vrot.lane.b32.xlu0 %v4553, 32
  %v4891 = vpop.permute.xlu0 %4890
  %4892 = vrot.lane.b32.xlu0 %v4558, 32
  %v4893 = vpop.permute.xlu0 %4892
  %4894 = vrot.lane.b32.xlu0 %v4563, 32
  %v4895 = vpop.permute.xlu0 %4894
  %4896 = vrot.lane.b32.xlu0 %v4568, 32
  %v4897 = vpop.permute.xlu0 %4896
  %4898 = vrot.lane.b32.xlu0 %v4573, 32
  %v4899 = vpop.permute.xlu0 %4898
  %4900 = vrot.lane.b32.xlu0 %v4578, 32
  %v4901 = vpop.permute.xlu0 %4900
  %4902 = vrot.lane.b32.xlu0 %v4583, 32
  %v4903 = vpop.permute.xlu0 %4902
  %4904 = vrot.lane.b32.xlu0 %v4588, 32
  %v4905 = vpop.permute.xlu0 %4904
  %4906 = vrot.lane.b32.xlu0 %v4593, 32
  %v4907 = vpop.permute.xlu0 %4906
  %4908 = vrot.lane.b32.xlu0 %v4598, 32
  %v4909 = vpop.permute.xlu0 %4908
  %4910 = vrot.lane.b32.xlu0 %v4603, 32
  %v4911 = vpop.permute.xlu0 %4910
  %4912 = vrot.lane.b32.xlu0 %v4608, 32
  %v4913 = vpop.permute.xlu0 %4912
  %4914 = vrot.lane.b32.xlu0 %v4613, 32
  %v4915 = vpop.permute.xlu0 %4914
  %4916 = vrot.lane.b32.xlu0 %v4618, 32
  %v4917 = vpop.permute.xlu0 %4916
  %4918 = vrot.lane.b32.xlu0 %v4623, 32
  %v4919 = vpop.permute.xlu0 %4918
  %4920 = vrot.lane.b32.xlu0 %v4628, 32
  %v4921 = vpop.permute.xlu0 %4920
  %4922 = vrot.lane.b32.xlu0 %v4633, 32
  %v4923 = vpop.permute.xlu0 %4922
  %4924 = vrot.lane.b32.xlu0 %v4638, 32
  %v4925 = vpop.permute.xlu0 %4924
  %4926 = vrot.lane.b32.xlu0 %v4643, 32
  %v4927 = vpop.permute.xlu0 %4926
  %4928 = vrot.lane.b32.xlu0 %v4648, 32
  %v4929 = vpop.permute.xlu0 %4928
  %4930 = vrot.lane.b32.xlu0 %v4653, 32
  %v4931 = vpop.permute.xlu0 %4930
  %4932 = vrot.lane.b32.xlu0 %v4658, 32
  %v4933 = vpop.permute.xlu0 %4932
  %4934 = vrot.lane.b32.xlu0 %v4663, 32
  %v4935 = vpop.permute.xlu0 %4934
  %4936 = vrot.lane.b32.xlu0 %v4668, 32
  %v4937 = vpop.permute.xlu0 %4936
  %4938 = vrot.lane.b32.xlu0 %v4673, 32
  %v4939 = vpop.permute.xlu0 %4938
  %4940 = vrot.lane.b32.xlu0 %v4678, 32
  %v4941 = vpop.permute.xlu0 %4940
  %4942 = vrot.lane.b32.xlu0 %v4683, 32
  %v4943 = vpop.permute.xlu0 %4942
  %4944 = vrot.lane.b32.xlu0 %v4688, 32
  %v4945 = vpop.permute.xlu0 %4944
  %4946 = vrot.lane.b32.xlu0 %v4693, 32
  %v4947 = vpop.permute.xlu0 %4946
  %4948 = vrot.lane.b32.xlu0 %v4698, 32
  %v4949 = vpop.permute.xlu0 %4948
  %4950 = vrot.lane.b32.xlu0 %v4703, 32
  %v4951 = vpop.permute.xlu0 %4950
  %4952 = vrot.lane.b32.xlu0 %v4708, 32
  %v4953 = vpop.permute.xlu0 %4952
  %4954 = vrot.lane.b32.xlu0 %v4713, 32
  %v4955 = vpop.permute.xlu0 %4954
  %4956 = vrot.lane.b32.xlu0 %v4718, 32
  %v4957 = vpop.permute.xlu0 %4956
  %4958 = vrot.lane.b32.xlu0 %v4723, 32
  %v4959 = vpop.permute.xlu0 %4958
  %4960 = vrot.lane.b32.xlu0 %v4728, 32
  %v4961 = vpop.permute.xlu0 %4960
  %4962 = vrot.lane.b32.xlu0 %v4733, 32
  %v4963 = vpop.permute.xlu0 %4962
  %4964 = vrot.lane.b32.xlu0 %v4738, 32
  %v4965 = vpop.permute.xlu0 %4964
  %4966 = vrot.lane.b32.xlu0 %v4743, 32
  %v4967 = vpop.permute.xlu0 %4966
  %4968 = vrot.lane.b32.xlu0 %v4748, 32
  %v4969 = vpop.permute.xlu0 %4968
  %4970 = vrot.lane.b32.xlu0 %v4753, 32
  %v4971 = vpop.permute.xlu0 %4970
  %4972 = vrot.lane.b32.xlu0 %v4758, 32
  %v4973 = vpop.permute.xlu0 %4972
  %4974 = vrot.lane.b32.xlu0 %v4763, 32
  %v4975 = vpop.permute.xlu0 %4974
  %4976 = vrot.lane.b32.xlu0 %v4768, 32
  %v4977 = vpop.permute.xlu0 %4976
  %4978 = vrot.lane.b32.xlu0 %v4773, 32
  %v4979 = vpop.permute.xlu0 %4978
  %4980 = vrot.lane.b32.xlu0 %v4778, 32
  %v4981 = vpop.permute.xlu0 %4980
  %4982 = vrot.lane.b32.xlu0 %v4783, 32
  %v4983 = vpop.permute.xlu0 %4982
  %4984 = vrot.lane.b32.xlu0 %v4788, 32
  %v4985 = vpop.permute.xlu0 %4984
  %4986 = vrot.lane.b32.xlu0 %v4793, 32
  %v4987 = vpop.permute.xlu0 %4986
  %vm5052 = vcmask 392448
  %5053 = vst.msk [vmem:[%s6] sm:$0xff] %vm5052, %v4861
  %5054 = vst.msk [vmem:[%s6 + $0x8] sm:$0xff] %vm5052, %v4863
  %5055 = vst.msk [vmem:[%s6 + $0x10] sm:$0xff] %vm5052, %v4865
  %5056 = vst.msk [vmem:[%s6 + $0x18] sm:$0xff] %vm5052, %v4867
  %5057 = vst.msk [vmem:[%s6 + $0x20] sm:$0xff] %vm5052, %v4869
  %5058 = vst.msk [vmem:[%s6 + $0x28] sm:$0xff] %vm5052, %v4871
  %5059 = vst.msk [vmem:[%s6 + $0x30] sm:$0xff] %vm5052, %v4873
  %5060 = vst.msk [vmem:[%s6 + $0x38] sm:$0xff] %vm5052, %v4875
  %5061 = vst.msk [vmem:[%s6 + $0x40] sm:$0xff] %vm5052, %v4877
  %5062 = vst.msk [vmem:[%s6 + $0x48] sm:$0xff] %vm5052, %v4879
  %5063 = vst.msk [vmem:[%s6 + $0x50] sm:$0xff] %vm5052, %v4881
  %5064 = vst.msk [vmem:[%s6 + $0x58] sm:$0xff] %vm5052, %v4883
  %5065 = vst.msk [vmem:[%s6 + $0x60] sm:$0xff] %vm5052, %v4885
  %5066 = vst.msk [vmem:[%s6 + $0x68] sm:$0xff] %vm5052, %v4887
  %5067 = vst.msk [vmem:[%s6 + $0x70] sm:$0xff] %vm5052, %v4889
  %5068 = vst.msk [vmem:[%s6 + $0x78] sm:$0xff] %vm5052, %v4891
  %5069 = vst.msk [vmem:[%s6 + $0x80] sm:$0xff] %vm5052, %v4893
  %5070 = vst.msk [vmem:[%s6 + $0x88] sm:$0xff] %vm5052, %v4895
  %5071 = vst.msk [vmem:[%s6 + $0x90] sm:$0xff] %vm5052, %v4897
  %5072 = vst.msk [vmem:[%s6 + $0x98] sm:$0xff] %vm5052, %v4899
  %5073 = vst.msk [vmem:[%s6 + $0xa0] sm:$0xff] %vm5052, %v4901
  %5074 = vst.msk [vmem:[%s6 + $0xa8] sm:$0xff] %vm5052, %v4903
  %5075 = vst.msk [vmem:[%s6 + $0xb0] sm:$0xff] %vm5052, %v4905
  %5076 = vst.msk [vmem:[%s6 + $0xb8] sm:$0xff] %vm5052, %v4907
  %5077 = vst.msk [vmem:[%s6 + $0xc0] sm:$0xff] %vm5052, %v4909
  %5078 = vst.msk [vmem:[%s6 + $0xc8] sm:$0xff] %vm5052, %v4911
  %5079 = vst.msk [vmem:[%s6 + $0xd0] sm:$0xff] %vm5052, %v4913
  %5080 = vst.msk [vmem:[%s6 + $0xd8] sm:$0xff] %vm5052, %v4915
  %5081 = vst.msk [vmem:[%s6 + $0xe0] sm:$0xff] %vm5052, %v4917
  %5082 = vst.msk [vmem:[%s6 + $0xe8] sm:$0xff] %vm5052, %v4919
  %5083 = vst.msk [vmem:[%s6 + $0xf0] sm:$0xff] %vm5052, %v4921
  %5084 = vst.msk [vmem:[%s6 + $0xf8] sm:$0xff] %vm5052, %v4923
  %5085 = vst.msk [vmem:[%s6 + $0x100] sm:$0xff] %vm5052, %v4925
  %5086 = vst.msk [vmem:[%s6 + $0x108] sm:$0xff] %vm5052, %v4927
  %5087 = vst.msk [vmem:[%s6 + $0x110] sm:$0xff] %vm5052, %v4929
  %5088 = vst.msk [vmem:[%s6 + $0x118] sm:$0xff] %vm5052, %v4931
  %5089 = vst.msk [vmem:[%s6 + $0x120] sm:$0xff] %vm5052, %v4933
  %5090 = vst.msk [vmem:[%s6 + $0x128] sm:$0xff] %vm5052, %v4935
  %5091 = vst.msk [vmem:[%s6 + $0x130] sm:$0xff] %vm5052, %v4937
  %5092 = vst.msk [vmem:[%s6 + $0x138] sm:$0xff] %vm5052, %v4939
  %5093 = vst.msk [vmem:[%s6 + $0x140] sm:$0xff] %vm5052, %v4941
  %5094 = vst.msk [vmem:[%s6 + $0x148] sm:$0xff] %vm5052, %v4943
  %5095 = vst.msk [vmem:[%s6 + $0x150] sm:$0xff] %vm5052, %v4945
  %5096 = vst.msk [vmem:[%s6 + $0x158] sm:$0xff] %vm5052, %v4947
  %5097 = vst.msk [vmem:[%s6 + $0x160] sm:$0xff] %vm5052, %v4949
  %5098 = vst.msk [vmem:[%s6 + $0x168] sm:$0xff] %vm5052, %v4951
  %5099 = vst.msk [vmem:[%s6 + $0x170] sm:$0xff] %vm5052, %v4953
  %5100 = vst.msk [vmem:[%s6 + $0x178] sm:$0xff] %vm5052, %v4955
  %5101 = vst.msk [vmem:[%s6 + $0x180] sm:$0xff] %vm5052, %v4957
  %5102 = vst.msk [vmem:[%s6 + $0x188] sm:$0xff] %vm5052, %v4959
  %5103 = vst.msk [vmem:[%s6 + $0x190] sm:$0xff] %vm5052, %v4961
  %5104 = vst.msk [vmem:[%s6 + $0x198] sm:$0xff] %vm5052, %v4963
  %5105 = vst.msk [vmem:[%s6 + $0x1a0] sm:$0xff] %vm5052, %v4965
  %5106 = vst.msk [vmem:[%s6 + $0x1a8] sm:$0xff] %vm5052, %v4967
  %5107 = vst.msk [vmem:[%s6 + $0x1b0] sm:$0xff] %vm5052, %v4969
  %5108 = vst.msk [vmem:[%s6 + $0x1b8] sm:$0xff] %vm5052, %v4971
  %5109 = vst.msk [vmem:[%s6 + $0x1c0] sm:$0xff] %vm5052, %v4973
  %5110 = vst.msk [vmem:[%s6 + $0x1c8] sm:$0xff] %vm5052, %v4975
  %5111 = vst.msk [vmem:[%s6 + $0x1d0] sm:$0xff] %vm5052, %v4977
  %5112 = vst.msk [vmem:[%s6 + $0x1d8] sm:$0xff] %vm5052, %v4979
  %5113 = vst.msk [vmem:[%s6 + $0x1e0] sm:$0xff] %vm5052, %v4981
  %5114 = vst.msk [vmem:[%s6 + $0x1e8] sm:$0xff] %vm5052, %v4983
  %5115 = vst.msk [vmem:[%s6 + $0x1f0] sm:$0xff] %vm5052, %v4985
  %5116 = vst.msk [vmem:[%s6 + $0x1f8] sm:$0xff] %vm5052, %v4987
  %5117 = vrot.lane.b32.xlu0 %v2476, 116
  %v5118 = vpop.permute.xlu0 %5117
  %5119 = vrot.lane.b32.xlu0 %v2477, 116
  %v5120 = vpop.permute.xlu0 %5119
  %5121 = vrot.lane.b32.xlu0 %v2478, 116
  %v5122 = vpop.permute.xlu0 %5121
  %5123 = vrot.lane.b32.xlu0 %v2479, 116
  %v5124 = vpop.permute.xlu0 %5123
  %5125 = vrot.lane.b32.xlu0 %v2480, 116
  %v5126 = vpop.permute.xlu0 %5125
  %5127 = vrot.lane.b32.xlu0 %v2481, 116
  %v5128 = vpop.permute.xlu0 %5127
  %5129 = vrot.lane.b32.xlu0 %v2482, 116
  %v5130 = vpop.permute.xlu0 %5129
  %5131 = vrot.lane.b32.xlu0 %v2483, 116
  %v5132 = vpop.permute.xlu0 %5131
  %5133 = vrot.lane.b32.xlu0 %v2484, 116
  %v5134 = vpop.permute.xlu0 %5133
  %5135 = vrot.lane.b32.xlu0 %v2485, 116
  %v5136 = vpop.permute.xlu0 %5135
  %5137 = vrot.lane.b32.xlu0 %v2486, 116
  %v5138 = vpop.permute.xlu0 %5137
  %5139 = vrot.lane.b32.xlu0 %v2487, 116
  %v5140 = vpop.permute.xlu0 %5139
  %5141 = vrot.lane.b32.xlu0 %v2488, 116
  %v5142 = vpop.permute.xlu0 %5141
  %5143 = vrot.lane.b32.xlu0 %v2489, 116
  %v5144 = vpop.permute.xlu0 %5143
  %5145 = vrot.lane.b32.xlu0 %v2490, 116
  %v5146 = vpop.permute.xlu0 %5145
  %5147 = vrot.lane.b32.xlu0 %v2491, 116
  %v5148 = vpop.permute.xlu0 %5147
  %5149 = vrot.lane.b32.xlu0 %v2492, 116
  %v5150 = vpop.permute.xlu0 %5149
  %5151 = vrot.lane.b32.xlu0 %v2493, 116
  %v5152 = vpop.permute.xlu0 %5151
  %5153 = vrot.lane.b32.xlu0 %v2494, 116
  %v5154 = vpop.permute.xlu0 %5153
  %5155 = vrot.lane.b32.xlu0 %v2495, 116
  %v5156 = vpop.permute.xlu0 %5155
  %5157 = vrot.lane.b32.xlu0 %v2496, 116
  %v5158 = vpop.permute.xlu0 %5157
  %5159 = vrot.lane.b32.xlu0 %v2497, 116
  %v5160 = vpop.permute.xlu0 %5159
  %5161 = vrot.lane.b32.xlu0 %v2498, 116
  %v5162 = vpop.permute.xlu0 %5161
  %5163 = vrot.lane.b32.xlu0 %v2499, 116
  %v5164 = vpop.permute.xlu0 %5163
  %5165 = vrot.lane.b32.xlu0 %v2500, 116
  %v5166 = vpop.permute.xlu0 %5165
  %5167 = vrot.lane.b32.xlu0 %v2501, 116
  %v5168 = vpop.permute.xlu0 %5167
  %5169 = vrot.lane.b32.xlu0 %v2502, 116
  %v5170 = vpop.permute.xlu0 %5169
  %5171 = vrot.lane.b32.xlu0 %v2503, 116
  %v5172 = vpop.permute.xlu0 %5171
  %5173 = vrot.lane.b32.xlu0 %v2504, 116
  %v5174 = vpop.permute.xlu0 %5173
  %5175 = vrot.lane.b32.xlu0 %v2505, 116
  %v5176 = vpop.permute.xlu0 %5175
  %5177 = vrot.lane.b32.xlu0 %v2506, 116
  %v5178 = vpop.permute.xlu0 %5177
  %5179 = vrot.lane.b32.xlu0 %v2507, 116
  %v5180 = vpop.permute.xlu0 %5179
  %5181 = vrot.lane.b32.xlu0 %v2508, 116
  %v5182 = vpop.permute.xlu0 %5181
  %5183 = vrot.lane.b32.xlu0 %v2509, 116
  %v5184 = vpop.permute.xlu0 %5183
  %5185 = vrot.lane.b32.xlu0 %v2510, 116
  %v5186 = vpop.permute.xlu0 %5185
  %5187 = vrot.lane.b32.xlu0 %v2511, 116
  %v5188 = vpop.permute.xlu0 %5187
  %5189 = vrot.lane.b32.xlu0 %v2512, 116
  %v5190 = vpop.permute.xlu0 %5189
  %5191 = vrot.lane.b32.xlu0 %v2513, 116
  %v5192 = vpop.permute.xlu0 %5191
  %5193 = vrot.lane.b32.xlu0 %v2514, 116
  %v5194 = vpop.permute.xlu0 %5193
  %5195 = vrot.lane.b32.xlu0 %v2515, 116
  %v5196 = vpop.permute.xlu0 %5195
  %5197 = vrot.lane.b32.xlu0 %v2516, 116
  %v5198 = vpop.permute.xlu0 %5197
  %5199 = vrot.lane.b32.xlu0 %v2517, 116
  %v5200 = vpop.permute.xlu0 %5199
  %5201 = vrot.lane.b32.xlu0 %v2518, 116
  %v5202 = vpop.permute.xlu0 %5201
  %5203 = vrot.lane.b32.xlu0 %v2519, 116
  %v5204 = vpop.permute.xlu0 %5203
  %5205 = vrot.lane.b32.xlu0 %v2520, 116
  %v5206 = vpop.permute.xlu0 %5205
  %5207 = vrot.lane.b32.xlu0 %v2521, 116
  %v5208 = vpop.permute.xlu0 %5207
  %5209 = vrot.lane.b32.xlu0 %v2522, 116
  %v5210 = vpop.permute.xlu0 %5209
  %5211 = vrot.lane.b32.xlu0 %v2523, 116
  %v5212 = vpop.permute.xlu0 %5211
  %5213 = vrot.lane.b32.xlu0 %v2524, 116
  %v5214 = vpop.permute.xlu0 %5213
  %5215 = vrot.lane.b32.xlu0 %v2525, 116
  %v5216 = vpop.permute.xlu0 %5215
  %5217 = vrot.lane.b32.xlu0 %v2526, 116
  %v5218 = vpop.permute.xlu0 %5217
  %5219 = vrot.lane.b32.xlu0 %v2527, 116
  %v5220 = vpop.permute.xlu0 %5219
  %5221 = vrot.lane.b32.xlu0 %v2528, 116
  %v5222 = vpop.permute.xlu0 %5221
  %5223 = vrot.lane.b32.xlu0 %v2529, 116
  %v5224 = vpop.permute.xlu0 %5223
  %5225 = vrot.lane.b32.xlu0 %v2530, 116
  %v5226 = vpop.permute.xlu0 %5225
  %5227 = vrot.lane.b32.xlu0 %v2531, 116
  %v5228 = vpop.permute.xlu0 %5227
  %5229 = vrot.lane.b32.xlu0 %v2532, 116
  %v5230 = vpop.permute.xlu0 %5229
  %5231 = vrot.lane.b32.xlu0 %v2533, 116
  %v5232 = vpop.permute.xlu0 %5231
  %5233 = vrot.lane.b32.xlu0 %v2534, 116
  %v5234 = vpop.permute.xlu0 %5233
  %5235 = vrot.lane.b32.xlu0 %v2535, 116
  %v5236 = vpop.permute.xlu0 %5235
  %5237 = vrot.lane.b32.xlu0 %v2536, 116
  %v5238 = vpop.permute.xlu0 %5237
  %5239 = vrot.lane.b32.xlu0 %v2537, 116
  %v5240 = vpop.permute.xlu0 %5239
  %5241 = vrot.lane.b32.xlu0 %v2538, 116
  %v5242 = vpop.permute.xlu0 %5241
  %5243 = vrot.lane.b32.xlu0 %v2539, 116
  %v5244 = vpop.permute.xlu0 %5243
  %v5245 = vsel %vm88, %v5118, 0
  %v5247 = vsel %vm88, %v5120, 0
  %v5249 = vsel %vm88, %v5122, 0
  %v5251 = vsel %vm88, %v5124, 0
  %v5253 = vsel %vm88, %v5126, 0
  %v5255 = vsel %vm88, %v5128, 0
  %v5257 = vsel %vm88, %v5130, 0
  %v5259 = vsel %vm88, %v5132, 0
  %v5261 = vsel %vm88, %v5134, 0
  %v5263 = vsel %vm88, %v5136, 0
  %v5265 = vsel %vm88, %v5138, 0
  %v5267 = vsel %vm88, %v5140, 0
  %v5269 = vsel %vm88, %v5142, 0
  %v5271 = vsel %vm88, %v5144, 0
  %v5273 = vsel %vm88, %v5146, 0
  %v5275 = vsel %vm88, %v5148, 0
  %v5277 = vsel %vm88, %v5150, 0
  %v5279 = vsel %vm88, %v5152, 0
  %v5281 = vsel %vm88, %v5154, 0
  %v5283 = vsel %vm88, %v5156, 0
  %v5285 = vsel %vm88, %v5158, 0
  %v5287 = vsel %vm88, %v5160, 0
  %v5289 = vsel %vm88, %v5162, 0
  %v5291 = vsel %vm88, %v5164, 0
  %v5293 = vsel %vm88, %v5166, 0
  %v5295 = vsel %vm88, %v5168, 0
  %v5297 = vsel %vm88, %v5170, 0
  %v5299 = vsel %vm88, %v5172, 0
  %v5301 = vsel %vm88, %v5174, 0
  %v5303 = vsel %vm88, %v5176, 0
  %v5305 = vsel %vm88, %v5178, 0
  %v5307 = vsel %vm88, %v5180, 0
  %v5309 = vsel %vm88, %v5182, 0
  %v5311 = vsel %vm88, %v5184, 0
  %v5313 = vsel %vm88, %v5186, 0
  %v5315 = vsel %vm88, %v5188, 0
  %v5317 = vsel %vm88, %v5190, 0
  %v5319 = vsel %vm88, %v5192, 0
  %v5321 = vsel %vm88, %v5194, 0
  %v5323 = vsel %vm88, %v5196, 0
  %v5325 = vsel %vm88, %v5198, 0
  %v5327 = vsel %vm88, %v5200, 0
  %v5329 = vsel %vm88, %v5202, 0
  %v5331 = vsel %vm88, %v5204, 0
  %v5333 = vsel %vm88, %v5206, 0
  %v5335 = vsel %vm88, %v5208, 0
  %v5337 = vsel %vm88, %v5210, 0
  %v5339 = vsel %vm88, %v5212, 0
  %v5341 = vsel %vm88, %v5214, 0
  %v5343 = vsel %vm88, %v5216, 0
  %v5345 = vsel %vm88, %v5218, 0
  %v5347 = vsel %vm88, %v5220, 0
  %v5349 = vsel %vm88, %v5222, 0
  %v5351 = vsel %vm88, %v5224, 0
  %v5353 = vsel %vm88, %v5226, 0
  %v5355 = vsel %vm88, %v5228, 0
  %v5357 = vsel %vm88, %v5230, 0
  %v5359 = vsel %vm88, %v5232, 0
  %v5361 = vsel %vm88, %v5234, 0
  %v5363 = vsel %vm88, %v5236, 0
  %v5365 = vsel %vm88, %v5238, 0
  %v5367 = vsel %vm88, %v5240, 0
  %v5369 = vsel %vm88, %v5242, 0
  %v5371 = vsel %vm88, %v5244, 0
  %5373 = vmatprep.subr.mxu0 0.0
  %5374 = vmatpush1.msra.mxu0 0.0
  %5375 = vmatprep.subr.mxu0 0.0
  %5376 = vmatpush1.msra.mxu0 0.0
  %5377 = vmatprep.subr.mxu0 0.0
  %5378 = vmatpush1.msra.mxu0 0.0
  %5379 = vmatprep.subr.mxu0 0.0
  %5380 = vmatpush1.msra.mxu0 0.0
  %5381 = vmatprep.subr.mxu0 0.0
  %5382 = vmatpush1.msra.mxu0 0.0
  %5383 = vmatprep.subr.mxu0 0.0
  %5384 = vmatpush1.msra.mxu0 0.0
  %5385 = vmatprep.subr.mxu0 0.0
  %5386 = vmatpush1.msra.mxu0 0.0
  %5387 = vmatprep.subr.mxu0 0.0
  %5388 = vmatpush1.msra.mxu0 0.0
  %5389 = vmatprep.subr.mxu0 0.0
  %5390 = vmatpush1.msra.mxu0 0.0
  %5391 = vmatprep.subr.mxu0 0.0
  %5392 = vmatpush1.msra.mxu0 0.0
  %5393 = vmatprep.subr.mxu0 0.0
  %5394 = vmatpush1.msra.mxu0 0.0
  %5395 = vmatprep.subr.mxu0 0.0
  %5396 = vmatpush1.msra.mxu0 0.0
  %5397 = vmatprep.subr.mxu0 0.0
  %5398 = vmatpush1.msra.mxu0 0.0
  %5399 = vmatprep.subr.mxu0 0.0
  %5400 = vmatpush1.msra.mxu0 0.0
  %5401 = vmatprep.subr.mxu0 0.0
  %5402 = vmatpush1.msra.mxu0 0.0
  %5403 = vmatprep.subr.mxu0 0.0
  %5404 = vmatpush1.msra.mxu0 %v2741
  %5405 = vmatprep.subr.mxu0 0.0
  %5406 = vmatpush2.msra.mxu0 0.0
  %5407 = vmatprep.subr.mxu0 0.0
  %5408 = vmatpush2.msra.mxu0 0.0
  %5409 = vmatprep.subr.mxu0 0.0
  %5410 = vmatpush2.msra.mxu0 0.0
  %5411 = vmatprep.subr.mxu0 0.0
  %5412 = vmatpush2.msra.mxu0 0.0
  %5413 = vmatprep.subr.mxu0 0.0
  %5414 = vmatpush2.msra.mxu0 0.0
  %5415 = vmatprep.subr.mxu0 0.0
  %5416 = vmatpush2.msra.mxu0 0.0
  %5417 = vmatprep.subr.mxu0 0.0
  %5418 = vmatpush2.msra.mxu0 0.0
  %5419 = vmatprep.subr.mxu0 0.0
  %5420 = vmatpush2.msra.mxu0 0.0
  %5421 = vmatprep.subr.mxu0 0.0
  %5422 = vmatpush2.msra.mxu0 0.0
  %5423 = vmatprep.subr.mxu0 0.0
  %5424 = vmatpush2.msra.mxu0 0.0
  %5425 = vmatprep.subr.mxu0 0.0
  %5426 = vmatpush2.msra.mxu0 0.0
  %5427 = vmatprep.subr.mxu0 0.0
  %5428 = vmatpush2.msra.mxu0 0.0
  %5429 = vmatprep.subr.mxu0 0.0
  %5430 = vmatpush2.msra.mxu0 0.0
  %5431 = vmatprep.subr.mxu0 0.0
  %5432 = vmatpush2.msra.mxu0 0.0
  %5433 = vmatprep.subr.mxu0 0.0
  %5434 = vmatpush2.msra.mxu0 0.0
  %5435 = vmatprep.subr.mxu0 0.0
  %5436 = vmatpush2.msra.mxu0 0.0
  %5437 = vmatprep.mubr.f32.mxu0 0.0
  %5438 = vmatmul.mubr.f32.gmra.mxu0 %v5245
  %v5439 = vpop.f32.mrf.mxu0
  %v5440 = vadd.f32 %v2546, %v5439
  %v5441 = vpop.f32.mrf.mxu0
  %5442 = vmatprep.mubr.f32.mxu0 0.0
  %5443 = vmatmul.mubr.f32.gmra.mxu0 %v5247
  %v5444 = vpop.f32.mrf.mxu0
  %v5445 = vadd.f32 %v2546, %v5444
  %v5446 = vpop.f32.mrf.mxu0
  %5447 = vmatprep.mubr.f32.mxu0 0.0
  %5448 = vmatmul.mubr.f32.gmra.mxu0 %v5249
  %v5449 = vpop.f32.mrf.mxu0
  %v5450 = vadd.f32 %v2546, %v5449
  %v5451 = vpop.f32.mrf.mxu0
  %5452 = vmatprep.mubr.f32.mxu0 0.0
  %5453 = vmatmul.mubr.f32.gmra.mxu0 %v5251
  %v5454 = vpop.f32.mrf.mxu0
  %v5455 = vadd.f32 %v2546, %v5454
  %v5456 = vpop.f32.mrf.mxu0
  %5457 = vmatprep.mubr.f32.mxu0 0.0
  %5458 = vmatmul.mubr.f32.gmra.mxu0 %v5253
  %v5459 = vpop.f32.mrf.mxu0
  %v5460 = vadd.f32 %v2546, %v5459
  %v5461 = vpop.f32.mrf.mxu0
  %5462 = vmatprep.mubr.f32.mxu0 0.0
  %5463 = vmatmul.mubr.f32.gmra.mxu0 %v5255
  %v5464 = vpop.f32.mrf.mxu0
  %v5465 = vadd.f32 %v2546, %v5464
  %v5466 = vpop.f32.mrf.mxu0
  %5467 = vmatprep.mubr.f32.mxu0 0.0
  %5468 = vmatmul.mubr.f32.gmra.mxu0 %v5257
  %v5469 = vpop.f32.mrf.mxu0
  %v5470 = vadd.f32 %v2546, %v5469
  %v5471 = vpop.f32.mrf.mxu0
  %5472 = vmatprep.mubr.f32.mxu0 0.0
  %5473 = vmatmul.mubr.f32.gmra.mxu0 %v5259
  %v5474 = vpop.f32.mrf.mxu0
  %v5475 = vadd.f32 %v2546, %v5474
  %v5476 = vpop.f32.mrf.mxu0
  %5477 = vmatprep.mubr.f32.mxu0 0.0
  %5478 = vmatmul.mubr.f32.gmra.mxu0 %v5261
  %v5479 = vpop.f32.mrf.mxu0
  %v5480 = vadd.f32 %v2546, %v5479
  %v5481 = vpop.f32.mrf.mxu0
  %5482 = vmatprep.mubr.f32.mxu0 0.0
  %5483 = vmatmul.mubr.f32.gmra.mxu0 %v5263
  %v5484 = vpop.f32.mrf.mxu0
  %v5485 = vadd.f32 %v2546, %v5484
  %v5486 = vpop.f32.mrf.mxu0
  %5487 = vmatprep.mubr.f32.mxu0 0.0
  %5488 = vmatmul.mubr.f32.gmra.mxu0 %v5265
  %v5489 = vpop.f32.mrf.mxu0
  %v5490 = vadd.f32 %v2546, %v5489
  %v5491 = vpop.f32.mrf.mxu0
  %5492 = vmatprep.mubr.f32.mxu0 0.0
  %5493 = vmatmul.mubr.f32.gmra.mxu0 %v5267
  %v5494 = vpop.f32.mrf.mxu0
  %v5495 = vadd.f32 %v2546, %v5494
  %v5496 = vpop.f32.mrf.mxu0
  %5497 = vmatprep.mubr.f32.mxu0 0.0
  %5498 = vmatmul.mubr.f32.gmra.mxu0 %v5269
  %v5499 = vpop.f32.mrf.mxu0
  %v5500 = vadd.f32 %v2546, %v5499
  %v5501 = vpop.f32.mrf.mxu0
  %5502 = vmatprep.mubr.f32.mxu0 0.0
  %5503 = vmatmul.mubr.f32.gmra.mxu0 %v5271
  %v5504 = vpop.f32.mrf.mxu0
  %v5505 = vadd.f32 %v2546, %v5504
  %v5506 = vpop.f32.mrf.mxu0
  %5507 = vmatprep.mubr.f32.mxu0 0.0
  %5508 = vmatmul.mubr.f32.gmra.mxu0 %v5273
  %v5509 = vpop.f32.mrf.mxu0
  %v5510 = vadd.f32 %v2546, %v5509
  %v5511 = vpop.f32.mrf.mxu0
  %5512 = vmatprep.mubr.f32.mxu0 0.0
  %5513 = vmatmul.mubr.f32.gmra.mxu0 %v5275
  %v5514 = vpop.f32.mrf.mxu0
  %v5515 = vadd.f32 %v2546, %v5514
  %v5516 = vpop.f32.mrf.mxu0
  %5517 = vmatprep.mubr.f32.mxu0 0.0
  %5518 = vmatmul.mubr.f32.gmra.mxu0 %v5277
  %v5519 = vpop.f32.mrf.mxu0
  %v5520 = vadd.f32 %v2546, %v5519
  %v5521 = vpop.f32.mrf.mxu0
  %5522 = vmatprep.mubr.f32.mxu0 0.0
  %5523 = vmatmul.mubr.f32.gmra.mxu0 %v5279
  %v5524 = vpop.f32.mrf.mxu0
  %v5525 = vadd.f32 %v2546, %v5524
  %v5526 = vpop.f32.mrf.mxu0
  %5527 = vmatprep.mubr.f32.mxu0 0.0
  %5528 = vmatmul.mubr.f32.gmra.mxu0 %v5281
  %v5529 = vpop.f32.mrf.mxu0
  %v5530 = vadd.f32 %v2546, %v5529
  %v5531 = vpop.f32.mrf.mxu0
  %5532 = vmatprep.mubr.f32.mxu0 0.0
  %5533 = vmatmul.mubr.f32.gmra.mxu0 %v5283
  %v5534 = vpop.f32.mrf.mxu0
  %v5535 = vadd.f32 %v2546, %v5534
  %v5536 = vpop.f32.mrf.mxu0
  %5537 = vmatprep.mubr.f32.mxu0 0.0
  %5538 = vmatmul.mubr.f32.gmra.mxu0 %v5285
  %v5539 = vpop.f32.mrf.mxu0
  %v5540 = vadd.f32 %v2546, %v5539
  %v5541 = vpop.f32.mrf.mxu0
  %5542 = vmatprep.mubr.f32.mxu0 0.0
  %5543 = vmatmul.mubr.f32.gmra.mxu0 %v5287
  %v5544 = vpop.f32.mrf.mxu0
  %v5545 = vadd.f32 %v2546, %v5544
  %v5546 = vpop.f32.mrf.mxu0
  %5547 = vmatprep.mubr.f32.mxu0 0.0
  %5548 = vmatmul.mubr.f32.gmra.mxu0 %v5289
  %v5549 = vpop.f32.mrf.mxu0
  %v5550 = vadd.f32 %v2546, %v5549
  %v5551 = vpop.f32.mrf.mxu0
  %5552 = vmatprep.mubr.f32.mxu0 0.0
  %5553 = vmatmul.mubr.f32.gmra.mxu0 %v5291
  %v5554 = vpop.f32.mrf.mxu0
  %v5555 = vadd.f32 %v2546, %v5554
  %v5556 = vpop.f32.mrf.mxu0
  %5557 = vmatprep.mubr.f32.mxu0 0.0
  %5558 = vmatmul.mubr.f32.gmra.mxu0 %v5293
  %v5559 = vpop.f32.mrf.mxu0
  %v5560 = vadd.f32 %v2546, %v5559
  %v5561 = vpop.f32.mrf.mxu0
  %5562 = vmatprep.mubr.f32.mxu0 0.0
  %5563 = vmatmul.mubr.f32.gmra.mxu0 %v5295
  %v5564 = vpop.f32.mrf.mxu0
  %v5565 = vadd.f32 %v2546, %v5564
  %v5566 = vpop.f32.mrf.mxu0
  %5567 = vmatprep.mubr.f32.mxu0 0.0
  %5568 = vmatmul.mubr.f32.gmra.mxu0 %v5297
  %v5569 = vpop.f32.mrf.mxu0
  %v5570 = vadd.f32 %v2546, %v5569
  %v5571 = vpop.f32.mrf.mxu0
  %5572 = vmatprep.mubr.f32.mxu0 0.0
  %5573 = vmatmul.mubr.f32.gmra.mxu0 %v5299
  %v5574 = vpop.f32.mrf.mxu0
  %v5575 = vadd.f32 %v2546, %v5574
  %v5576 = vpop.f32.mrf.mxu0
  %5577 = vmatprep.mubr.f32.mxu0 0.0
  %5578 = vmatmul.mubr.f32.gmra.mxu0 %v5301
  %v5579 = vpop.f32.mrf.mxu0
  %v5580 = vadd.f32 %v2546, %v5579
  %v5581 = vpop.f32.mrf.mxu0
  %5582 = vmatprep.mubr.f32.mxu0 0.0
  %5583 = vmatmul.mubr.f32.gmra.mxu0 %v5303
  %v5584 = vpop.f32.mrf.mxu0
  %v5585 = vadd.f32 %v2546, %v5584
  %v5586 = vpop.f32.mrf.mxu0
  %5587 = vmatprep.mubr.f32.mxu0 0.0
  %5588 = vmatmul.mubr.f32.gmra.mxu0 %v5305
  %v5589 = vpop.f32.mrf.mxu0
  %v5590 = vadd.f32 %v2546, %v5589
  %v5591 = vpop.f32.mrf.mxu0
  %5592 = vmatprep.mubr.f32.mxu0 0.0
  %5593 = vmatmul.mubr.f32.gmra.mxu0 %v5307
  %v5594 = vpop.f32.mrf.mxu0
  %v5595 = vadd.f32 %v2546, %v5594
  %v5596 = vpop.f32.mrf.mxu0
  %5597 = vmatprep.mubr.f32.mxu0 0.0
  %5598 = vmatmul.mubr.f32.gmra.mxu0 %v5309
  %v5599 = vpop.f32.mrf.mxu0
  %v5600 = vadd.f32 %v2546, %v5599
  %v5601 = vpop.f32.mrf.mxu0
  %5602 = vmatprep.mubr.f32.mxu0 0.0
  %5603 = vmatmul.mubr.f32.gmra.mxu0 %v5311
  %v5604 = vpop.f32.mrf.mxu0
  %v5605 = vadd.f32 %v2546, %v5604
  %v5606 = vpop.f32.mrf.mxu0
  %5607 = vmatprep.mubr.f32.mxu0 0.0
  %5608 = vmatmul.mubr.f32.gmra.mxu0 %v5313
  %v5609 = vpop.f32.mrf.mxu0
  %v5610 = vadd.f32 %v2546, %v5609
  %v5611 = vpop.f32.mrf.mxu0
  %5612 = vmatprep.mubr.f32.mxu0 0.0
  %5613 = vmatmul.mubr.f32.gmra.mxu0 %v5315
  %v5614 = vpop.f32.mrf.mxu0
  %v5615 = vadd.f32 %v2546, %v5614
  %v5616 = vpop.f32.mrf.mxu0
  %5617 = vmatprep.mubr.f32.mxu0 0.0
  %5618 = vmatmul.mubr.f32.gmra.mxu0 %v5317
  %v5619 = vpop.f32.mrf.mxu0
  %v5620 = vadd.f32 %v2546, %v5619
  %v5621 = vpop.f32.mrf.mxu0
  %5622 = vmatprep.mubr.f32.mxu0 0.0
  %5623 = vmatmul.mubr.f32.gmra.mxu0 %v5319
  %v5624 = vpop.f32.mrf.mxu0
  %v5625 = vadd.f32 %v2546, %v5624
  %v5626 = vpop.f32.mrf.mxu0
  %5627 = vmatprep.mubr.f32.mxu0 0.0
  %5628 = vmatmul.mubr.f32.gmra.mxu0 %v5321
  %v5629 = vpop.f32.mrf.mxu0
  %v5630 = vadd.f32 %v2546, %v5629
  %v5631 = vpop.f32.mrf.mxu0
  %5632 = vmatprep.mubr.f32.mxu0 0.0
  %5633 = vmatmul.mubr.f32.gmra.mxu0 %v5323
  %v5634 = vpop.f32.mrf.mxu0
  %v5635 = vadd.f32 %v2546, %v5634
  %v5636 = vpop.f32.mrf.mxu0
  %5637 = vmatprep.mubr.f32.mxu0 0.0
  %5638 = vmatmul.mubr.f32.gmra.mxu0 %v5325
  %v5639 = vpop.f32.mrf.mxu0
  %v5640 = vadd.f32 %v2546, %v5639
  %v5641 = vpop.f32.mrf.mxu0
  %5642 = vmatprep.mubr.f32.mxu0 0.0
  %5643 = vmatmul.mubr.f32.gmra.mxu0 %v5327
  %v5644 = vpop.f32.mrf.mxu0
  %v5645 = vadd.f32 %v2546, %v5644
  %v5646 = vpop.f32.mrf.mxu0
  %5647 = vmatprep.mubr.f32.mxu0 0.0
  %5648 = vmatmul.mubr.f32.gmra.mxu0 %v5329
  %v5649 = vpop.f32.mrf.mxu0
  %v5650 = vadd.f32 %v2546, %v5649
  %v5651 = vpop.f32.mrf.mxu0
  %5652 = vmatprep.mubr.f32.mxu0 0.0
  %5653 = vmatmul.mubr.f32.gmra.mxu0 %v5331
  %v5654 = vpop.f32.mrf.mxu0
  %v5655 = vadd.f32 %v2546, %v5654
  %v5656 = vpop.f32.mrf.mxu0
  %5657 = vmatprep.mubr.f32.mxu0 0.0
  %5658 = vmatmul.mubr.f32.gmra.mxu0 %v5333
  %v5659 = vpop.f32.mrf.mxu0
  %v5660 = vadd.f32 %v2546, %v5659
  %v5661 = vpop.f32.mrf.mxu0
  %5662 = vmatprep.mubr.f32.mxu0 0.0
  %5663 = vmatmul.mubr.f32.gmra.mxu0 %v5335
  %v5664 = vpop.f32.mrf.mxu0
  %v5665 = vadd.f32 %v2546, %v5664
  %v5666 = vpop.f32.mrf.mxu0
  %5667 = vmatprep.mubr.f32.mxu0 0.0
  %5668 = vmatmul.mubr.f32.gmra.mxu0 %v5337
  %v5669 = vpop.f32.mrf.mxu0
  %v5670 = vadd.f32 %v2546, %v5669
  %v5671 = vpop.f32.mrf.mxu0
  %5672 = vmatprep.mubr.f32.mxu0 0.0
  %5673 = vmatmul.mubr.f32.gmra.mxu0 %v5339
  %v5674 = vpop.f32.mrf.mxu0
  %v5675 = vadd.f32 %v2546, %v5674
  %v5676 = vpop.f32.mrf.mxu0
  %5677 = vmatprep.mubr.f32.mxu0 0.0
  %5678 = vmatmul.mubr.f32.gmra.mxu0 %v5341
  %v5679 = vpop.f32.mrf.mxu0
  %v5680 = vadd.f32 %v2546, %v5679
  %v5681 = vpop.f32.mrf.mxu0
  %5682 = vmatprep.mubr.f32.mxu0 0.0
  %5683 = vmatmul.mubr.f32.gmra.mxu0 %v5343
  %v5684 = vpop.f32.mrf.mxu0
  %v5685 = vadd.f32 %v2546, %v5684
  %v5686 = vpop.f32.mrf.mxu0
  %5687 = vmatprep.mubr.f32.mxu0 0.0
  %5688 = vmatmul.mubr.f32.gmra.mxu0 %v5345
  %v5689 = vpop.f32.mrf.mxu0
  %v5690 = vadd.f32 %v2546, %v5689
  %v5691 = vpop.f32.mrf.mxu0
  %5692 = vmatprep.mubr.f32.mxu0 0.0
  %5693 = vmatmul.mubr.f32.gmra.mxu0 %v5347
  %v5694 = vpop.f32.mrf.mxu0
  %v5695 = vadd.f32 %v2546, %v5694
  %v5696 = vpop.f32.mrf.mxu0
  %5697 = vmatprep.mubr.f32.mxu0 0.0
  %5698 = vmatmul.mubr.f32.gmra.mxu0 %v5349
  %v5699 = vpop.f32.mrf.mxu0
  %v5700 = vadd.f32 %v2546, %v5699
  %v5701 = vpop.f32.mrf.mxu0
  %5702 = vmatprep.mubr.f32.mxu0 0.0
  %5703 = vmatmul.mubr.f32.gmra.mxu0 %v5351
  %v5704 = vpop.f32.mrf.mxu0
  %v5705 = vadd.f32 %v2546, %v5704
  %v5706 = vpop.f32.mrf.mxu0
  %5707 = vmatprep.mubr.f32.mxu0 0.0
  %5708 = vmatmul.mubr.f32.gmra.mxu0 %v5353
  %v5709 = vpop.f32.mrf.mxu0
  %v5710 = vadd.f32 %v2546, %v5709
  %v5711 = vpop.f32.mrf.mxu0
  %5712 = vmatprep.mubr.f32.mxu0 0.0
  %5713 = vmatmul.mubr.f32.gmra.mxu0 %v5355
  %v5714 = vpop.f32.mrf.mxu0
  %v5715 = vadd.f32 %v2546, %v5714
  %v5716 = vpop.f32.mrf.mxu0
  %5717 = vmatprep.mubr.f32.mxu0 0.0
  %5718 = vmatmul.mubr.f32.gmra.mxu0 %v5357
  %v5719 = vpop.f32.mrf.mxu0
  %v5720 = vadd.f32 %v2546, %v5719
  %v5721 = vpop.f32.mrf.mxu0
  %5722 = vmatprep.mubr.f32.mxu0 0.0
  %5723 = vmatmul.mubr.f32.gmra.mxu0 %v5359
  %v5724 = vpop.f32.mrf.mxu0
  %v5725 = vadd.f32 %v2546, %v5724
  %v5726 = vpop.f32.mrf.mxu0
  %5727 = vmatprep.mubr.f32.mxu0 0.0
  %5728 = vmatmul.mubr.f32.gmra.mxu0 %v5361
  %v5729 = vpop.f32.mrf.mxu0
  %v5730 = vadd.f32 %v2546, %v5729
  %v5731 = vpop.f32.mrf.mxu0
  %5732 = vmatprep.mubr.f32.mxu0 0.0
  %5733 = vmatmul.mubr.f32.gmra.mxu0 %v5363
  %v5734 = vpop.f32.mrf.mxu0
  %v5735 = vadd.f32 %v2546, %v5734
  %v5736 = vpop.f32.mrf.mxu0
  %5737 = vmatprep.mubr.f32.mxu0 0.0
  %5738 = vmatmul.mubr.f32.gmra.mxu0 %v5365
  %v5739 = vpop.f32.mrf.mxu0
  %v5740 = vadd.f32 %v2546, %v5739
  %v5741 = vpop.f32.mrf.mxu0
  %5742 = vmatprep.mubr.f32.mxu0 0.0
  %5743 = vmatmul.mubr.f32.gmra.mxu0 %v5367
  %v5744 = vpop.f32.mrf.mxu0
  %v5745 = vadd.f32 %v2546, %v5744
  %v5746 = vpop.f32.mrf.mxu0
  %5747 = vmatprep.mubr.f32.mxu0 0.0
  %5748 = vmatmul.mubr.f32.gmra.mxu0 %v5369
  %v5749 = vpop.f32.mrf.mxu0
  %v5750 = vadd.f32 %v2546, %v5749
  %v5751 = vpop.f32.mrf.mxu0
  %5752 = vmatprep.mubr.f32.mxu0 0.0
  %5753 = vmatmul.mubr.f32.gmra.mxu0 %v5371
  %v5754 = vpop.f32.mrf.mxu0
  %v5755 = vadd.f32 %v2546, %v5754
  %v5756 = vpop.f32.mrf.mxu0
  %5757 = vdwg.mxu0
  %5822 = vrot.lane.b32.xlu0 %v5440, 48
  %v5823 = vpop.permute.xlu0 %5822
  %5824 = vrot.lane.b32.xlu0 %v5445, 48
  %v5825 = vpop.permute.xlu0 %5824
  %5826 = vrot.lane.b32.xlu0 %v5450, 48
  %v5827 = vpop.permute.xlu0 %5826
  %5828 = vrot.lane.b32.xlu0 %v5455, 48
  %v5829 = vpop.permute.xlu0 %5828
  %5830 = vrot.lane.b32.xlu0 %v5460, 48
  %v5831 = vpop.permute.xlu0 %5830
  %5832 = vrot.lane.b32.xlu0 %v5465, 48
  %v5833 = vpop.permute.xlu0 %5832
  %5834 = vrot.lane.b32.xlu0 %v5470, 48
  %v5835 = vpop.permute.xlu0 %5834
  %5836 = vrot.lane.b32.xlu0 %v5475, 48
  %v5837 = vpop.permute.xlu0 %5836
  %5838 = vrot.lane.b32.xlu0 %v5480, 48
  %v5839 = vpop.permute.xlu0 %5838
  %5840 = vrot.lane.b32.xlu0 %v5485, 48
  %v5841 = vpop.permute.xlu0 %5840
  %5842 = vrot.lane.b32.xlu0 %v5490, 48
  %v5843 = vpop.permute.xlu0 %5842
  %5844 = vrot.lane.b32.xlu0 %v5495, 48
  %v5845 = vpop.permute.xlu0 %5844
  %5846 = vrot.lane.b32.xlu0 %v5500, 48
  %v5847 = vpop.permute.xlu0 %5846
  %5848 = vrot.lane.b32.xlu0 %v5505, 48
  %v5849 = vpop.permute.xlu0 %5848
  %5850 = vrot.lane.b32.xlu0 %v5510, 48
  %v5851 = vpop.permute.xlu0 %5850
  %5852 = vrot.lane.b32.xlu0 %v5515, 48
  %v5853 = vpop.permute.xlu0 %5852
  %5854 = vrot.lane.b32.xlu0 %v5520, 48
  %v5855 = vpop.permute.xlu0 %5854
  %5856 = vrot.lane.b32.xlu0 %v5525, 48
  %v5857 = vpop.permute.xlu0 %5856
  %5858 = vrot.lane.b32.xlu0 %v5530, 48
  %v5859 = vpop.permute.xlu0 %5858
  %5860 = vrot.lane.b32.xlu0 %v5535, 48
  %v5861 = vpop.permute.xlu0 %5860
  %5862 = vrot.lane.b32.xlu0 %v5540, 48
  %v5863 = vpop.permute.xlu0 %5862
  %5864 = vrot.lane.b32.xlu0 %v5545, 48
  %v5865 = vpop.permute.xlu0 %5864
  %5866 = vrot.lane.b32.xlu0 %v5550, 48
  %v5867 = vpop.permute.xlu0 %5866
  %5868 = vrot.lane.b32.xlu0 %v5555, 48
  %v5869 = vpop.permute.xlu0 %5868
  %5870 = vrot.lane.b32.xlu0 %v5560, 48
  %v5871 = vpop.permute.xlu0 %5870
  %5872 = vrot.lane.b32.xlu0 %v5565, 48
  %v5873 = vpop.permute.xlu0 %5872
  %5874 = vrot.lane.b32.xlu0 %v5570, 48
  %v5875 = vpop.permute.xlu0 %5874
  %5876 = vrot.lane.b32.xlu0 %v5575, 48
  %v5877 = vpop.permute.xlu0 %5876
  %5878 = vrot.lane.b32.xlu0 %v5580, 48
  %v5879 = vpop.permute.xlu0 %5878
  %5880 = vrot.lane.b32.xlu0 %v5585, 48
  %v5881 = vpop.permute.xlu0 %5880
  %5882 = vrot.lane.b32.xlu0 %v5590, 48
  %v5883 = vpop.permute.xlu0 %5882
  %5884 = vrot.lane.b32.xlu0 %v5595, 48
  %v5885 = vpop.permute.xlu0 %5884
  %5886 = vrot.lane.b32.xlu0 %v5600, 48
  %v5887 = vpop.permute.xlu0 %5886
  %5888 = vrot.lane.b32.xlu0 %v5605, 48
  %v5889 = vpop.permute.xlu0 %5888
  %5890 = vrot.lane.b32.xlu0 %v5610, 48
  %v5891 = vpop.permute.xlu0 %5890
  %5892 = vrot.lane.b32.xlu0 %v5615, 48
  %v5893 = vpop.permute.xlu0 %5892
  %5894 = vrot.lane.b32.xlu0 %v5620, 48
  %v5895 = vpop.permute.xlu0 %5894
  %5896 = vrot.lane.b32.xlu0 %v5625, 48
  %v5897 = vpop.permute.xlu0 %5896
  %5898 = vrot.lane.b32.xlu0 %v5630, 48
  %v5899 = vpop.permute.xlu0 %5898
  %5900 = vrot.lane.b32.xlu0 %v5635, 48
  %v5901 = vpop.permute.xlu0 %5900
  %5902 = vrot.lane.b32.xlu0 %v5640, 48
  %v5903 = vpop.permute.xlu0 %5902
  %5904 = vrot.lane.b32.xlu0 %v5645, 48
  %v5905 = vpop.permute.xlu0 %5904
  %5906 = vrot.lane.b32.xlu0 %v5650, 48
  %v5907 = vpop.permute.xlu0 %5906
  %5908 = vrot.lane.b32.xlu0 %v5655, 48
  %v5909 = vpop.permute.xlu0 %5908
  %5910 = vrot.lane.b32.xlu0 %v5660, 48
  %v5911 = vpop.permute.xlu0 %5910
  %5912 = vrot.lane.b32.xlu0 %v5665, 48
  %v5913 = vpop.permute.xlu0 %5912
  %5914 = vrot.lane.b32.xlu0 %v5670, 48
  %v5915 = vpop.permute.xlu0 %5914
  %5916 = vrot.lane.b32.xlu0 %v5675, 48
  %v5917 = vpop.permute.xlu0 %5916
  %5918 = vrot.lane.b32.xlu0 %v5680, 48
  %v5919 = vpop.permute.xlu0 %5918
  %5920 = vrot.lane.b32.xlu0 %v5685, 48
  %v5921 = vpop.permute.xlu0 %5920
  %5922 = vrot.lane.b32.xlu0 %v5690, 48
  %v5923 = vpop.permute.xlu0 %5922
  %5924 = vrot.lane.b32.xlu0 %v5695, 48
  %v5925 = vpop.permute.xlu0 %5924
  %5926 = vrot.lane.b32.xlu0 %v5700, 48
  %v5927 = vpop.permute.xlu0 %5926
  %5928 = vrot.lane.b32.xlu0 %v5705, 48
  %v5929 = vpop.permute.xlu0 %5928
  %5930 = vrot.lane.b32.xlu0 %v5710, 48
  %v5931 = vpop.permute.xlu0 %5930
  %5932 = vrot.lane.b32.xlu0 %v5715, 48
  %v5933 = vpop.permute.xlu0 %5932
  %5934 = vrot.lane.b32.xlu0 %v5720, 48
  %v5935 = vpop.permute.xlu0 %5934
  %5936 = vrot.lane.b32.xlu0 %v5725, 48
  %v5937 = vpop.permute.xlu0 %5936
  %5938 = vrot.lane.b32.xlu0 %v5730, 48
  %v5939 = vpop.permute.xlu0 %5938
  %5940 = vrot.lane.b32.xlu0 %v5735, 48
  %v5941 = vpop.permute.xlu0 %5940
  %5942 = vrot.lane.b32.xlu0 %v5740, 48
  %v5943 = vpop.permute.xlu0 %5942
  %5944 = vrot.lane.b32.xlu0 %v5745, 48
  %v5945 = vpop.permute.xlu0 %5944
  %5946 = vrot.lane.b32.xlu0 %v5750, 48
  %v5947 = vpop.permute.xlu0 %5946
  %5948 = vrot.lane.b32.xlu0 %v5755, 48
  %v5949 = vpop.permute.xlu0 %5948
  %vm6014 = vcmask 523648
  %6015 = vst.msk [vmem:[%s6] sm:$0xff] %vm6014, %v5823
  %6016 = vst.msk [vmem:[%s6 + $0x8] sm:$0xff] %vm6014, %v5825
  %6017 = vst.msk [vmem:[%s6 + $0x10] sm:$0xff] %vm6014, %v5827
  %6018 = vst.msk [vmem:[%s6 + $0x18] sm:$0xff] %vm6014, %v5829
  %6019 = vst.msk [vmem:[%s6 + $0x20] sm:$0xff] %vm6014, %v5831
  %6020 = vst.msk [vmem:[%s6 + $0x28] sm:$0xff] %vm6014, %v5833
  %6021 = vst.msk [vmem:[%s6 + $0x30] sm:$0xff] %vm6014, %v5835
  %6022 = vst.msk [vmem:[%s6 + $0x38] sm:$0xff] %vm6014, %v5837
  %6023 = vst.msk [vmem:[%s6 + $0x40] sm:$0xff] %vm6014, %v5839
  %6024 = vst.msk [vmem:[%s6 + $0x48] sm:$0xff] %vm6014, %v5841
  %6025 = vst.msk [vmem:[%s6 + $0x50] sm:$0xff] %vm6014, %v5843
  %6026 = vst.msk [vmem:[%s6 + $0x58] sm:$0xff] %vm6014, %v5845
  %6027 = vst.msk [vmem:[%s6 + $0x60] sm:$0xff] %vm6014, %v5847
  %6028 = vst.msk [vmem:[%s6 + $0x68] sm:$0xff] %vm6014, %v5849
  %6029 = vst.msk [vmem:[%s6 + $0x70] sm:$0xff] %vm6014, %v5851
  %6030 = vst.msk [vmem:[%s6 + $0x78] sm:$0xff] %vm6014, %v5853
  %6031 = vst.msk [vmem:[%s6 + $0x80] sm:$0xff] %vm6014, %v5855
  %6032 = vst.msk [vmem:[%s6 + $0x88] sm:$0xff] %vm6014, %v5857
  %6033 = vst.msk [vmem:[%s6 + $0x90] sm:$0xff] %vm6014, %v5859
  %6034 = vst.msk [vmem:[%s6 + $0x98] sm:$0xff] %vm6014, %v5861
  %6035 = vst.msk [vmem:[%s6 + $0xa0] sm:$0xff] %vm6014, %v5863
  %6036 = vst.msk [vmem:[%s6 + $0xa8] sm:$0xff] %vm6014, %v5865
  %6037 = vst.msk [vmem:[%s6 + $0xb0] sm:$0xff] %vm6014, %v5867
  %6038 = vst.msk [vmem:[%s6 + $0xb8] sm:$0xff] %vm6014, %v5869
  %6039 = vst.msk [vmem:[%s6 + $0xc0] sm:$0xff] %vm6014, %v5871
  %6040 = vst.msk [vmem:[%s6 + $0xc8] sm:$0xff] %vm6014, %v5873
  %6041 = vst.msk [vmem:[%s6 + $0xd0] sm:$0xff] %vm6014, %v5875
  %6042 = vst.msk [vmem:[%s6 + $0xd8] sm:$0xff] %vm6014, %v5877
  %6043 = vst.msk [vmem:[%s6 + $0xe0] sm:$0xff] %vm6014, %v5879
  %6044 = vst.msk [vmem:[%s6 + $0xe8] sm:$0xff] %vm6014, %v5881
  %6045 = vst.msk [vmem:[%s6 + $0xf0] sm:$0xff] %vm6014, %v5883
  %6046 = vst.msk [vmem:[%s6 + $0xf8] sm:$0xff] %vm6014, %v5885
  %6047 = vst.msk [vmem:[%s6 + $0x100] sm:$0xff] %vm6014, %v5887
  %6048 = vst.msk [vmem:[%s6 + $0x108] sm:$0xff] %vm6014, %v5889
  %6049 = vst.msk [vmem:[%s6 + $0x110] sm:$0xff] %vm6014, %v5891
  %6050 = vst.msk [vmem:[%s6 + $0x118] sm:$0xff] %vm6014, %v5893
  %6051 = vst.msk [vmem:[%s6 + $0x120] sm:$0xff] %vm6014, %v5895
  %6052 = vst.msk [vmem:[%s6 + $0x128] sm:$0xff] %vm6014, %v5897
  %6053 = vst.msk [vmem:[%s6 + $0x130] sm:$0xff] %vm6014, %v5899
  %6054 = vst.msk [vmem:[%s6 + $0x138] sm:$0xff] %vm6014, %v5901
  %6055 = vst.msk [vmem:[%s6 + $0x140] sm:$0xff] %vm6014, %v5903
  %6056 = vst.msk [vmem:[%s6 + $0x148] sm:$0xff] %vm6014, %v5905
  %6057 = vst.msk [vmem:[%s6 + $0x150] sm:$0xff] %vm6014, %v5907
  %6058 = vst.msk [vmem:[%s6 + $0x158] sm:$0xff] %vm6014, %v5909
  %6059 = vst.msk [vmem:[%s6 + $0x160] sm:$0xff] %vm6014, %v5911
  %6060 = vst.msk [vmem:[%s6 + $0x168] sm:$0xff] %vm6014, %v5913
  %6061 = vst.msk [vmem:[%s6 + $0x170] sm:$0xff] %vm6014, %v5915
  %6062 = vst.msk [vmem:[%s6 + $0x178] sm:$0xff] %vm6014, %v5917
  %6063 = vst.msk [vmem:[%s6 + $0x180] sm:$0xff] %vm6014, %v5919
  %6064 = vst.msk [vmem:[%s6 + $0x188] sm:$0xff] %vm6014, %v5921
  %6065 = vst.msk [vmem:[%s6 + $0x190] sm:$0xff] %vm6014, %v5923
  %6066 = vst.msk [vmem:[%s6 + $0x198] sm:$0xff] %vm6014, %v5925
  %6067 = vst.msk [vmem:[%s6 + $0x1a0] sm:$0xff] %vm6014, %v5927
  %6068 = vst.msk [vmem:[%s6 + $0x1a8] sm:$0xff] %vm6014, %v5929
  %6069 = vst.msk [vmem:[%s6 + $0x1b0] sm:$0xff] %vm6014, %v5931
  %6070 = vst.msk [vmem:[%s6 + $0x1b8] sm:$0xff] %vm6014, %v5933
  %6071 = vst.msk [vmem:[%s6 + $0x1c0] sm:$0xff] %vm6014, %v5935
  %6072 = vst.msk [vmem:[%s6 + $0x1c8] sm:$0xff] %vm6014, %v5937
  %6073 = vst.msk [vmem:[%s6 + $0x1d0] sm:$0xff] %vm6014, %v5939
  %6074 = vst.msk [vmem:[%s6 + $0x1d8] sm:$0xff] %vm6014, %v5941
  %6075 = vst.msk [vmem:[%s6 + $0x1e0] sm:$0xff] %vm6014, %v5943
  %6076 = vst.msk [vmem:[%s6 + $0x1e8] sm:$0xff] %vm6014, %v5945
  %6077 = vst.msk [vmem:[%s6 + $0x1f0] sm:$0xff] %vm6014, %v5947
  %6078 = vst.msk [vmem:[%s6 + $0x1f8] sm:$0xff] %vm6014, %v5949
  // Predicated region
  $region26: #{tpu_custom_call.1} parent=0 // pred_check
    _
  $region27: #{tpu_custom_call.1} parent=0 // pred_check_branch
    %6080 = sbr.rel (0) target = $region29
  $region28: #{tpu_custom_call.1} parent=0 // pred_region
    _
  $region29: #{tpu_custom_call.1} parent=0 // pred_fallthru
    _
  // Predicated region
  $region30: #{tpu_custom_call.1} parent=0 // pred_check
    _
  $region31: #{tpu_custom_call.1} parent=0 // pred_check_branch
    %6082 = sbr.rel (0) target = $region33
  $region32: #{tpu_custom_call.1} parent=0 // pred_region
    _
  $region33: #{tpu_custom_call.1} parent=0 // pred_fallthru
    _

</llo_original>
